<compile_context>
chip_gen: v6e
topology: v6e:2x2x1
jax: 0.10.0
libtpu: 0.0.40
codegen_flags: <defaults>
</compile_context>

<pallas_src>
import math
import numpy as np
import jax
import jax.numpy as jnp
from jax import lax
from jax.experimental import pallas as pl
from jax.experimental.pallas import tpu as pltpu


# ----------------------------- fused trunk Pallas kernel -----------------------------

def _trunk_kernel(u0_ref, ks_ref, qr_ref, qi_ref, rr_ref, ri_ref, dcr_ref, dci_ref,
                  dsk_ref, w1_ref, w2_ref, b1_ref, b2_ref, g_ref, beta_ref,
                  pooled_ref, act_ref, ybuf_ref):
    """One batch element: n_layers x (S4D chunked-SSM + residual + post-LN) -> mean-pool.

    Shapes (time-major: time on sublanes, channels on lanes):
      u0_ref:  (1, L, H)      encoder output (computed in the wrapper)
      ks_ref:  (G, T, H)      short (T-tap) conv kernel per layer
      qr/qi:   (G, N, T, H)   Q[n,t,h] = 2*C2*lam^(t+1)   (history -> output)
      rr/ri:   (G, T, N, H)   R[j,n,h] = lam^(T-1-j)       (input -> state)
      dcr/dci: (G, N, H)      lam^T                        (state decay per chunk)
      dsk:     (G, 1, H)      S4D skip parameter D
      w1/w2:   (G, H, H)      GLU projection halves (bf16); b1/b2: (G, 1, H)
      g/beta:  (G, 1, H)      LayerNorm weight / bias
      pooled_ref: (1, 1, H)
      act_ref:  VMEM scratch (L, H)  current activation (carried across layers in VMEM)
      ybuf_ref: VMEM scratch (L, H)  per-layer S4D conv output staging
    """
    n_layers, T, H = ks_ref.shape
    N = qr_ref.shape[1]
    L = act_ref.shape[0]
    n_chunks = L // T

    act_ref[...] = u0_ref[0]                                  # (L, H) layer-0 input

    for layer in range(n_layers):
        ks = ks_ref[layer]                                    # (T, H) layer-constant
        dsk = dsk_ref[layer]                                  # (1, H)
        dcr = dcr_ref[layer]                                  # (N, H)
        dci = dci_ref[layer]

        # ---- S4D causal conv via chunked diagonal SSM (state carried in registers) ----
        def chunk_body(c, carry):
            sr, si = carry                                    # (N, H) complex state (re/im)
            t0 = pl.multiple_of(c * T, T)                     # 8-aligned chunk start
            u = act_ref[pl.ds(t0, T), :]                      # (T, H) chunk input

            # (1) history contribution: y_cross[t] = Re(sum_n Q[n,t] * s_prev[n])
            ycross = jnp.zeros((T, H), jnp.float32)
            for n in range(N):                                # N small & static -> unrolled
                ycross = (ycross
                          + qr_ref[layer, n] * sr[n:n + 1, :]
                          - qi_ref[layer, n] * si[n:n + 1, :])

            # (2) intra-chunk causal conv with the T-tap short kernel (zero history) + D skip
            buf = jnp.concatenate([jnp.zeros((T, H), jnp.float32), u], axis=0)   # (2T, H)
            y = ycross + u * dsk
            for m in range(T):                                # T=8, static unroll
                y = y + ks[m:m + 1, :] * buf[T - m:2 * T - m, :]
            ybuf_ref[pl.ds(t0, T), :] = y

            # (3) state update: s_new = lam^T * s + sum_j lam^(T-1-j) * u[j]
            ar = jnp.zeros((N, H), jnp.float32)
            ai = jnp.zeros((N, H), jnp.float32)
            for j in range(T):
                uj = u[j:j + 1, :]
                ar = ar + rr_ref[layer, j] * uj
                ai = ai + ri_ref[layer, j] * uj
            sr_new = dcr * sr - dci * si + ar
            si_new = dci * sr + dcr * si + ai
            return (sr_new, si_new)

        s0 = (jnp.zeros((N, H), jnp.float32), jnp.zeros((N, H), jnp.float32))
        _ = lax.fori_loop(0, n_chunks, chunk_body, s0)

        # ---- full-length block tail: GELU -> GLU projection -> residual -> post-LN ----
        u_full = act_ref[...]                                 # (L, H) layer input (residual)
        # TODO(synk): torch nn.GELU defaults to the exact erf form; tanh approximation used here
        # because lax.erf is not reliably lowered by Mosaic.
        yg = jax.nn.gelu(ybuf_ref[...], approximate=True).astype(jnp.bfloat16)
        g1 = jnp.dot(yg, w1_ref[layer], preferred_element_type=jnp.float32) + b1_ref[layer]
        g2 = jnp.dot(yg, w2_ref[layer], preferred_element_type=jnp.float32) + b2_ref[layer]
        xr = g1 * jax.nn.sigmoid(g2) + u_full                 # dropout = identity (eval); residual

        mu = jnp.mean(xr, axis=1, keepdims=True)              # one-pass LN: E[x], E[x^2]
        m2 = jnp.mean(xr * xr, axis=1, keepdims=True)
        xn = (xr - mu) * lax.rsqrt(m2 - mu * mu + 1e-5) * g_ref[layer] + beta_ref[layer]
        act_ref[...] = xn                                     # carry to next layer (stays in VMEM)

    # ---- mean-pool over time -> (1, H), lane-dense output ----
    pooled_ref[0] = jnp.mean(act_ref[...], axis=0, keepdims=True)


def s4_trunk(u0, ks, qr, qi, rr, ri, dcr, dci, dsk, w1, w2, b1, b2, ln_g, ln_b):
    """u0: (B, L, H) encoder output -> pooled (B, H). Single fused pallas_call for the whole trunk."""
    B, L, H = u0.shape
    G, T, _ = ks.shape
    N = qr.shape[1]
    c3 = lambda b: (0, 0, 0)
    c4 = lambda b: (0, 0, 0, 0)

    weights = (ks, qr, qi, rr, ri, dcr, dci, dsk, w1, w2, b1, b2, ln_g, ln_b)
    weight_bytes = sum(a.size * a.dtype.itemsize for a in weights)
    block_bytes = L * H * 4 + H * 4                           # streamed input block + pooled output
    scratch_bytes = 2 * L * H * 4
    need = 2 * (weight_bytes + block_bytes) + scratch_bytes + (4 << 20)   # x2: default double buffer
    vmem_limit = int(min(max(need, 32 << 20), 56 << 20))      # computed; stays under v7x's 64 MiB

    pooled = pl.pallas_call(
        _trunk_kernel,
        out_shape=jax.ShapeDtypeStruct((B, 1, H), jnp.float32),
        grid=(B,),
        in_specs=[
            pl.BlockSpec((1, L, H), lambda b: (b, 0, 0)),     # u0: one batch element per program
            pl.BlockSpec((G, T, H), c3),                      # short conv kernels (VMEM-resident)
            pl.BlockSpec((G, N, T, H), c4),                   # Q real
            pl.BlockSpec((G, N, T, H), c4),                   # Q imag
            pl.BlockSpec((G, T, N, H), c4),                   # R real
            pl.BlockSpec((G, T, N, H), c4),                   # R imag
            pl.BlockSpec((G, N, H), c3),                      # lam^T real
            pl.BlockSpec((G, N, H), c3),                      # lam^T imag
            pl.BlockSpec((G, 1, H), c3),                      # D skip
            pl.BlockSpec((G, H, H), c3),                      # GLU proj w1 (bf16)
            pl.BlockSpec((G, H, H), c3),                      # GLU proj w2 (bf16)
            pl.BlockSpec((G, 1, H), c3),                      # b1
            pl.BlockSpec((G, 1, H), c3),                      # b2
            pl.BlockSpec((G, 1, H), c3),                      # LN gamma
            pl.BlockSpec((G, 1, H), c3),                      # LN beta
        ],
        out_specs=pl.BlockSpec((1, 1, H), lambda b: (b, 0, 0)),
        scratch_shapes=[pltpu.VMEM((L, H), jnp.float32),      # activation
                        pltpu.VMEM((L, H), jnp.float32)],     # conv-output staging
        compiler_params=pltpu.CompilerParams(
            dimension_semantics=("parallel",),                # batch shards across TCs
            vmem_limit_bytes=vmem_limit,
        ),
    )(u0, ks, qr, qi, rr, ri, dcr, dci, dsk, w1, w2, b1, b2, ln_g, ln_b)
    return pooled[:, 0, :]                                    # (B, d_model)


# ----------------------------- plain-JAX glue -----------------------------

def s4d_chunked_slabs(layers, T):
    """Precompute (once, outside the kernel) the chunked-SSM slabs for all layers.

    k[m,h]      = 2*Re(sum_n C2[h,n] * lam[h,n]^m)          (identical to the full conv kernel)
    Q[n,t,h]    = 2*C2[h,n]*lam^(t+1)   R[j,n,h] = lam^(T-1-j)   Dc[n,h] = lam^T
    """
    log_dt = jnp.stack([lp["log_dt"] for lp in layers])                    # (G, H)
    A = -jnp.exp(jnp.stack([lp["log_A_real"] for lp in layers])) \
        + 1j * jnp.stack([lp["A_imag"] for lp in layers])                  # (G, H, N)
    C = jnp.stack([lp["C_re"] for lp in layers]) \
        + 1j * jnp.stack([lp["C_im"] for lp in layers])                    # (G, H, N)
    dt = jnp.exp(log_dt)
    dtA = A * dt[..., None]                                                # (G, H, N)
    lam = jnp.exp(dtA)
    C2 = C * (lam - 1.0) / A                                               # (G, H, N)

    m = jnp.arange(T, dtype=jnp.float32)
    pow_m = jnp.exp(dtA[..., None] * m)                                    # (G, H, N, T) = lam^m
    ks = jnp.transpose(2.0 * jnp.einsum("ghn,ghnt->ght", C2, pow_m).real, (0, 2, 1))   # (G, T, H)

    q = 2.0 * C2[..., None] * jnp.exp(dtA[..., None] * (m + 1.0))          # (G, H, N, T)
    qr = jnp.transpose(q.real, (0, 2, 3, 1))                               # (G, N, T, H)
    qi = jnp.transpose(q.imag, (0, 2, 3, 1))

    r = jnp.exp(dtA[..., None] * (float(T) - 1.0 - m))                     # (G, H, N, T), j -> lam^(T-1-j)
    rr = jnp.transpose(r.real, (0, 3, 2, 1))                               # (G, T, N, H)
    ri = jnp.transpose(r.imag, (0, 3, 2, 1))

    dchunk = jnp.exp(dtA * float(T))                                       # (G, H, N) = lam^T
    dcr = jnp.transpose(dchunk.real, (0, 2, 1))                            # (G, N, H)
    dci = jnp.transpose(dchunk.imag, (0, 2, 1))
    return (ks.astype(jnp.float32), qr.astype(jnp.float32), qi.astype(jnp.float32),
            rr.astype(jnp.float32), ri.astype(jnp.float32),
            dcr.astype(jnp.float32), dci.astype(jnp.float32))


def build_autoncp_wiring(input_dim, units, output_dim, seed=22222, sparsity_level=0.5):
    """Mirrors ncps.wirings.AutoNCP sizing; connectivity drawn deterministically (seeded RNG)."""
    density = 1.0 - sparsity_level
    inter_and_command = units - output_dim
    n_command = max(int(0.4 * inter_and_command), 1)
    n_inter = inter_and_command - n_command
    sensory_fanout = max(int(n_inter * density), 1)
    inter_fanout = max(int(n_command * density), 1)
    recurrent_command = max(int(n_command * density * 2), 1)
    motor_fanin = max(int(n_command * density), 1)

    motor_ids = list(range(output_dim))
    command_ids = list(range(output_dim, output_dim + n_command))
    inter_ids = list(range(output_dim + n_command, units))

    rng = np.random.RandomState(seed)
    adj = np.zeros((units, units), np.float32)
    sadj = np.zeros((input_dim, units), np.float32)
    for s in range(input_dim):                                   # sensory -> inter
        for d in rng.choice(inter_ids, size=sensory_fanout, replace=False):
            sadj[s, d] = rng.choice([-1.0, 1.0])
    for s in inter_ids:                                          # inter -> command
        for d in rng.choice(command_ids, size=inter_fanout, replace=False):
            adj[s, d] = rng.choice([-1.0, 1.0])
    for _ in range(recurrent_command):                           # command recurrence
        adj[rng.choice(command_ids), rng.choice(command_ids)] = rng.choice([-1.0, 1.0])
    for d in motor_ids:                                          # command -> motor (fan-in)
        for s in rng.choice(command_ids, size=motor_fanin, replace=False):
            adj[s, d] = rng.choice([-1.0, 1.0])

    def layer_mask(prev_block, hidden_n):
        m = np.concatenate([np.abs(prev_block),
                            np.ones((hidden_n, hidden_n), np.float32)], axis=0)
        return jnp.asarray(m.T, jnp.float32)                     # (hidden, prev + hidden)

    masks = [layer_mask(sadj[:, inter_ids], n_inter),
             layer_mask(adj[np.ix_(inter_ids, command_ids)], n_command),
             layer_mask(adj[np.ix_(command_ids, motor_ids)], output_dim)]
    layer_sizes = [n_inter, n_command, output_dim]
    in_sizes = [input_dim, n_inter, n_command]
    return masks, layer_sizes, in_sizes


def init_cfc_params(key, in_sizes, layer_sizes):
    params = []
    for i, (fi, fo) in enumerate(zip(in_sizes, layer_sizes)):
        cat = fi + fo
        keys = jax.random.split(jax.random.fold_in(key, i), 8)
        scale = 1.0 / math.sqrt(cat)
        layer = {}
        for j, name in enumerate(["ff1", "ff2", "time_a", "time_b"]):
            layer[name + "_w"] = jax.random.normal(keys[2 * j], (fo, cat), jnp.float32) * scale
            layer[name + "_b"] = jax.random.normal(keys[2 * j + 1], (fo,), jnp.float32) * 0.01
        params.append(layer)
    return params


def cfc_decoder(pooled, dec_params, masks, layer_sizes):
    # TODO(synk): the 20-neuron wired CfC recurrence is tiny and strictly sequential; kept in plain
    # JAX (lax.scan) rather than a Pallas kernel.  Note: ncps treats the 2-D (B, d_model) input as an
    # UNBATCHED sequence of length B with batch size 1 (hidden state carried across batch elements);
    # reproduced exactly here.
    ff1_ws = [lp["ff1_w"] * m for lp, m in zip(dec_params, masks)]
    ff2_ws = [lp["ff2_w"] * m for lp, m in zip(dec_params, masks)]

    def step(h_states, x_t):
        xin = x_t[None, :]                                  # (1, d_model)
        new_states = []
        for i, (lp, h) in enumerate(zip(dec_params, h_states)):
            xx = jnp.concatenate([xin, h], axis=1)
            ff1 = jnp.tanh(xx @ ff1_ws[i].T + lp["ff1_b"])
            ff2 = jnp.tanh(xx @ ff2_ws[i].T + lp["ff2_b"])
            t_a = xx @ lp["time_a_w"].T + lp["time_a_b"]
            t_b = xx @ lp["time_b_w"].T + lp["time_b_b"]
            t_interp = jax.nn.sigmoid(t_a * 1.0 + t_b)      # ts = 1.0 (no timespans)
            h_new = ff1 * (1.0 - t_interp) + t_interp * ff2
            new_states.append(h_new)
            xin = h_new
        return tuple(new_states), xin[0]                    # motor-layer output (d_output,)

    init = tuple(jnp.zeros((1, n), jnp.float32) for n in layer_sizes)
    _, outs = lax.scan(step, init, pooled)
    return outs                                             # (B, d_output)


def init_s4model_params(key, d_input, d_model, n_layers, d_state):
    p = {}
    k_enc, key = jax.random.split(key)
    p["enc_w"] = jax.random.normal(k_enc, (d_input, d_model), jnp.float32)   # Linear weight (transposed)
    p["enc_b"] = jnp.zeros((1, d_model), jnp.float32)
    n2 = d_state // 2
    layers = []
    for l in range(n_layers):
        kk = jax.random.fold_in(key, l)
        k1, k2, k3, k4, k5 = jax.random.split(kk, 5)
        layers.append({
            "log_dt": jax.random.uniform(k1, (d_model,), jnp.float32)
                      * (math.log(0.1) - math.log(0.001)) + math.log(0.001),
            "log_A_real": jnp.log(0.5 * jnp.ones((d_model, n2), jnp.float32)),
            "A_imag": jnp.broadcast_to(math.pi * jnp.arange(n2, dtype=jnp.float32), (d_model, n2)),
            "C_re": jax.random.normal(k2, (d_model, n2), jnp.float32) * (0.5 ** 0.5),
            "C_im": jax.random.normal(k3, (d_model, n2), jnp.float32) * (0.5 ** 0.5),
            "D": jax.random.normal(k4, (d_model, 1), jnp.float32),
            "out_w": jax.random.normal(k5, (2 * d_model, d_model), jnp.float32) / math.sqrt(d_model),
            "out_b": jnp.zeros((2 * d_model, 1), jnp.float32),
            "ln_g": jnp.ones((d_model, 1), jnp.float32),
            "ln_b": jnp.zeros((d_model, 1), jnp.float32),
        })
    p["layers"] = layers
    return p


def s4model_forward(x, params, dec_params, masks, layer_sizes, chunk=8):
    """x: (B, L, d_input) -> (B, d_output). prenorm=False (post-norm), eval mode."""
    B, L, _ = x.shape
    assert L % chunk == 0, "sequence length must be a multiple of the time-chunk size"
    layers = params["layers"]
    H = params["enc_w"].shape[1]

    # Encoder applied in the wrapper (review: lane-dense (B, L, H) kernel input; d_input is tiny).
    u0 = jnp.einsum("bli,ih->blh", x, params["enc_w"]) + params["enc_b"].reshape(1, 1, H)

    # Hoist all per-layer weight prep out of the kernel: one stacked slab per weight kind.
    ks, qr, qi, rr, ri, dcr, dci = s4d_chunked_slabs(layers, chunk)
    dsk = jnp.stack([lp["D"].reshape(1, H) for lp in layers])                       # (G, 1, H)
    w1 = jnp.stack([lp["out_w"][:H, :].T for lp in layers]).astype(jnp.bfloat16)    # (G, H, H)
    w2 = jnp.stack([lp["out_w"][H:, :].T for lp in layers]).astype(jnp.bfloat16)    # (G, H, H)
    b1 = jnp.stack([lp["out_b"][:H].reshape(1, H) for lp in layers])                # (G, 1, H)
    b2 = jnp.stack([lp["out_b"][H:].reshape(1, H) for lp in layers])                # (G, 1, H)
    ln_g = jnp.stack([lp["ln_g"].reshape(1, H) for lp in layers])                   # (G, 1, H)
    ln_b = jnp.stack([lp["ln_b"].reshape(1, H) for lp in layers])                   # (G, 1, H)

    pooled = s4_trunk(u0, ks, qr, qi, rr, ri, dcr, dci, dsk,
                      w1, w2, b1, b2, ln_g, ln_b)                                   # (B, d_model)
    return cfc_decoder(pooled, dec_params, masks, layer_sizes)                      # (B, d_output)


if __name__ == "__main__":
    # small, module-consistent shapes
    B, L = 2, 16
    d_input, d_model, d_output = 1, 32, 6
    n_layers = 2          # args.n_layers in the original script; any value works
    d_state = 16          # S4D internal state size (N)
    ncp_units = 20        # AutoNCP(20, d_output)

    key = jax.random.PRNGKey(0)
    kx, kp, kd = jax.random.split(key, 3)
    x = jax.random.normal(kx, (B, L, d_input), jnp.float32)

    params = init_s4model_params(kp, d_input, d_model, n_layers, d_state)
    masks, layer_sizes, in_sizes = build_autoncp_wiring(d_model, ncp_units, d_output)
    dec_params = init_cfc_params(kd, in_sizes, layer_sizes)

    fwd = jax.jit(lambda xx: s4model_forward(xx, params, dec_params, masks, layer_sizes))
    out = jax.block_until_ready(fwd(x))
    assert out.shape == (B, d_output)
    assert bool(jnp.all(jnp.isfinite(out)))
    print("KERNEL_OK")
</pallas_src>

<mosaic_0001>
module attributes {stable_mosaic.version = 11 : i64} {
  func.func @_trunk_kernel(%arg0: i32, %arg1: memref<1x16x32xf32, #tpu.memory_space<vmem>>, %arg2: memref<2x8x32xf32, #tpu.memory_space<vmem>>, %arg3: memref<2x8x8x32xf32, #tpu.memory_space<vmem>>, %arg4: memref<2x8x8x32xf32, #tpu.memory_space<vmem>>, %arg5: memref<2x8x8x32xf32, #tpu.memory_space<vmem>>, %arg6: memref<2x8x8x32xf32, #tpu.memory_space<vmem>>, %arg7: memref<2x8x32xf32, #tpu.memory_space<vmem>>, %arg8: memref<2x8x32xf32, #tpu.memory_space<vmem>>, %arg9: memref<2x1x32xf32, #tpu.memory_space<vmem>>, %arg10: memref<2x32x32xbf16, #tpu.memory_space<vmem>>, %arg11: memref<2x32x32xbf16, #tpu.memory_space<vmem>>, %arg12: memref<2x1x32xf32, #tpu.memory_space<vmem>>, %arg13: memref<2x1x32xf32, #tpu.memory_space<vmem>>, %arg14: memref<2x1x32xf32, #tpu.memory_space<vmem>>, %arg15: memref<2x1x32xf32, #tpu.memory_space<vmem>>, %arg16: memref<1x1x32xf32, #tpu.memory_space<vmem>>, %arg17: memref<16x32xf32, #tpu.memory_space<vmem>>, %arg18: memref<16x32xf32, #tpu.memory_space<vmem>>) attributes {dimension_semantics = [#tpu.dimension_semantics<parallel>], iteration_bounds = array<i64: 2>, scalar_prefetch = 0 : i64, scratch_operands = 2 : i64, tpu.core_type = #tpu.core_type<tc>, window_params = [{transform_indices = @transform_0, window_bounds = array<i64: 1, 16, 32>}, {pipeline_mode = #tpu.pipeline_mode<synchronous>, transform_indices = @transform_1, window_bounds = array<i64: 2, 8, 32>}, {pipeline_mode = #tpu.pipeline_mode<synchronous>, transform_indices = @transform_2, window_bounds = array<i64: 2, 8, 8, 32>}, {pipeline_mode = #tpu.pipeline_mode<synchronous>, transform_indices = @transform_3, window_bounds = array<i64: 2, 8, 8, 32>}, {pipeline_mode = #tpu.pipeline_mode<synchronous>, transform_indices = @transform_4, window_bounds = array<i64: 2, 8, 8, 32>}, {pipeline_mode = #tpu.pipeline_mode<synchronous>, transform_indices = @transform_5, window_bounds = array<i64: 2, 8, 8, 32>}, {pipeline_mode = #tpu.pipeline_mode<synchronous>, transform_indices = @transform_6, window_bounds = array<i64: 2, 8, 32>}, {pipeline_mode = #tpu.pipeline_mode<synchronous>, transform_indices = @transform_7, window_bounds = array<i64: 2, 8, 32>}, {pipeline_mode = #tpu.pipeline_mode<synchronous>, transform_indices = @transform_8, window_bounds = array<i64: 2, 1, 32>}, {pipeline_mode = #tpu.pipeline_mode<synchronous>, transform_indices = @transform_9, window_bounds = array<i64: 2, 32, 32>}, {pipeline_mode = #tpu.pipeline_mode<synchronous>, transform_indices = @transform_10, window_bounds = array<i64: 2, 32, 32>}, {pipeline_mode = #tpu.pipeline_mode<synchronous>, transform_indices = @transform_11, window_bounds = array<i64: 2, 1, 32>}, {pipeline_mode = #tpu.pipeline_mode<synchronous>, transform_indices = @transform_12, window_bounds = array<i64: 2, 1, 32>}, {pipeline_mode = #tpu.pipeline_mode<synchronous>, transform_indices = @transform_13, window_bounds = array<i64: 2, 1, 32>}, {pipeline_mode = #tpu.pipeline_mode<synchronous>, transform_indices = @transform_14, window_bounds = array<i64: 2, 1, 32>}, {transform_indices = @transform_15, window_bounds = array<i64: 1, 1, 32>}]} {
    %c0 = arith.constant 0 : index
    %c0_0 = arith.constant 0 : index
    %c0_1 = arith.constant 0 : index
    %0 = vector.load %arg1[%c0, %c0_0, %c0_1] : memref<1x16x32xf32, #tpu.memory_space<vmem>>, vector<1x16x32xf32>
    %1 = vector.shape_cast %0 : vector<1x16x32xf32> to vector<16x32xf32>
    %c0_2 = arith.constant 0 : index
    %c0_3 = arith.constant 0 : index
    %2 = vector.load %arg17[%c0_2, %c0_3] : memref<16x32xf32, #tpu.memory_space<vmem>>, vector<16x32xf32>
    tpu.vector_store %arg17[%c0_2, %c0_3], %1 {strides = array<i32>} : memref<16x32xf32, #tpu.memory_space<vmem>>, vector<16x32xf32>,
    %c0_4 = arith.constant 0 : index
    %c0_5 = arith.constant 0 : index
    %c0_6 = arith.constant 0 : index
    %3 = vector.load %arg2[%c0_4, %c0_5, %c0_6] : memref<2x8x32xf32, #tpu.memory_space<vmem>>, vector<1x8x32xf32>
    %4 = vector.shape_cast %3 : vector<1x8x32xf32> to vector<8x32xf32>
    %c0_7 = arith.constant 0 : index
    %c0_8 = arith.constant 0 : index
    %c0_9 = arith.constant 0 : index
    %5 = vector.load %arg9[%c0_7, %c0_8, %c0_9] : memref<2x1x32xf32, #tpu.memory_space<vmem>>, vector<1x1x32xf32>
    %6 = vector.shape_cast %5 : vector<1x1x32xf32> to vector<1x32xf32>
    %c0_10 = arith.constant 0 : index
    %c0_11 = arith.constant 0 : index
    %c0_12 = arith.constant 0 : index
    %7 = vector.load %arg7[%c0_10, %c0_11, %c0_12] : memref<2x8x32xf32, #tpu.memory_space<vmem>>, vector<1x8x32xf32>
    %8 = vector.shape_cast %7 : vector<1x8x32xf32> to vector<8x32xf32>
    %c0_13 = arith.constant 0 : index
    %c0_14 = arith.constant 0 : index
    %c0_15 = arith.constant 0 : index
    %9 = vector.load %arg8[%c0_13, %c0_14, %c0_15] : memref<2x8x32xf32, #tpu.memory_space<vmem>>, vector<1x8x32xf32>
    %10 = vector.shape_cast %9 : vector<1x8x32xf32> to vector<8x32xf32>
    %cst = arith.constant 0.000000e+00 : f32
    %11 = vector.broadcast %cst : f32 to vector<8x32xf32>
    %cst_16 = arith.constant 0.000000e+00 : f32
    %12 = vector.broadcast %cst_16 : f32 to vector<8x32xf32>
    %c0_i32 = arith.constant 0 : i32
    %c2_i32 = arith.constant 2 : i32
    %13 = arith.addi %c0_i32, %c2_i32 : i32
    %c1_i32 = arith.constant 1 : i32
    %14:2 = scf.for %arg19 = %c0_i32 to %13 step %c1_i32 iter_args(%arg20 = %11, %arg21 = %12) -> (vector<8x32xf32>, vector<8x32xf32>)  : i32 {
      %c8_i32 = arith.constant 8 : i32
      %163 = arith.muli %arg19, %c8_i32 : i32
      %164 = tpu.assume_multiple %163, 8 : i32
      %165 = arith.index_cast %164 : i32 to index
      %c0_114 = arith.constant 0 : index
      %166 = vector.load %arg17[%165, %c0_114] : memref<16x32xf32, #tpu.memory_space<vmem>>, vector<8x32xf32>
      %cst_115 = arith.constant 0.000000e+00 : f32
      %167 = vector.broadcast %cst_115 : f32 to vector<8x32xf32>
      %c0_116 = arith.constant 0 : index
      %c0_117 = arith.constant 0 : index
      %c0_118 = arith.constant 0 : index
      %c0_119 = arith.constant 0 : index
      %168 = vector.load %arg3[%c0_116, %c0_117, %c0_118, %c0_119] : memref<2x8x8x32xf32, #tpu.memory_space<vmem>>, vector<1x1x8x32xf32>
      %169 = vector.shape_cast %168 : vector<1x1x8x32xf32> to vector<8x32xf32>
      %170 = vector.extract_strided_slice %arg20 {offsets = [0, 0], sizes = [1, 32], strides = [1, 1]} : vector<8x32xf32> to vector<1x32xf32>
      %171 = vector.broadcast %170 : vector<1x32xf32> to vector<8x32xf32>
      %172 = arith.mulf %169, %171 : vector<8x32xf32>
      %173 = arith.addf %167, %172 : vector<8x32xf32>
      %c0_120 = arith.constant 0 : index
      %c0_121 = arith.constant 0 : index
      %c0_122 = arith.constant 0 : index
      %c0_123 = arith.constant 0 : index
      %174 = vector.load %arg4[%c0_120, %c0_121, %c0_122, %c0_123] : memref<2x8x8x32xf32, #tpu.memory_space<vmem>>, vector<1x1x8x32xf32>
      %175 = vector.shape_cast %174 : vector<1x1x8x32xf32> to vector<8x32xf32>
      %176 = vector.extract_strided_slice %arg21 {offsets = [0, 0], sizes = [1, 32], strides = [1, 1]} : vector<8x32xf32> to vector<1x32xf32>
      %177 = vector.broadcast %176 : vector<1x32xf32> to vector<8x32xf32>
      %178 = arith.mulf %175, %177 : vector<8x32xf32>
      %179 = arith.subf %173, %178 : vector<8x32xf32>
      %c0_124 = arith.constant 0 : index
      %c1_125 = arith.constant 1 : index
      %c0_126 = arith.constant 0 : index
      %c0_127 = arith.constant 0 : index
      %180 = vector.load %arg3[%c0_124, %c1_125, %c0_126, %c0_127] : memref<2x8x8x32xf32, #tpu.memory_space<vmem>>, vector<1x1x8x32xf32>
      %181 = vector.shape_cast %180 : vector<1x1x8x32xf32> to vector<8x32xf32>
      %182 = vector.extract_strided_slice %arg20 {offsets = [1, 0], sizes = [1, 32], strides = [1, 1]} : vector<8x32xf32> to vector<1x32xf32>
      %183 = vector.broadcast %182 : vector<1x32xf32> to vector<8x32xf32>
      %184 = arith.mulf %181, %183 : vector<8x32xf32>
      %185 = arith.addf %179, %184 : vector<8x32xf32>
      %c0_128 = arith.constant 0 : index
      %c1_129 = arith.constant 1 : index
      %c0_130 = arith.constant 0 : index
      %c0_131 = arith.constant 0 : index
      %186 = vector.load %arg4[%c0_128, %c1_129, %c0_130, %c0_131] : memref<2x8x8x32xf32, #tpu.memory_space<vmem>>, vector<1x1x8x32xf32>
      %187 = vector.shape_cast %186 : vector<1x1x8x32xf32> to vector<8x32xf32>
      %188 = vector.extract_strided_slice %arg21 {offsets = [1, 0], sizes = [1, 32], strides = [1, 1]} : vector<8x32xf32> to vector<1x32xf32>
      %189 = vector.broadcast %188 : vector<1x32xf32> to vector<8x32xf32>
      %190 = arith.mulf %187, %189 : vector<8x32xf32>
      %191 = arith.subf %185, %190 : vector<8x32xf32>
      %c0_132 = arith.constant 0 : index
      %c2 = arith.constant 2 : index
      %c0_133 = arith.constant 0 : index
      %c0_134 = arith.constant 0 : index
      %192 = vector.load %arg3[%c0_132, %c2, %c0_133, %c0_134] : memref<2x8x8x32xf32, #tpu.memory_space<vmem>>, vector<1x1x8x32xf32>
      %193 = vector.shape_cast %192 : vector<1x1x8x32xf32> to vector<8x32xf32>
      %194 = vector.extract_strided_slice %arg20 {offsets = [2, 0], sizes = [1, 32], strides = [1, 1]} : vector<8x32xf32> to vector<1x32xf32>
      %195 = vector.broadcast %194 : vector<1x32xf32> to vector<8x32xf32>
      %196 = arith.mulf %193, %195 : vector<8x32xf32>
      %197 = arith.addf %191, %196 : vector<8x32xf32>
      %c0_135 = arith.constant 0 : index
      %c2_136 = arith.constant 2 : index
      %c0_137 = arith.constant 0 : index
      %c0_138 = arith.constant 0 : index
      %198 = vector.load %arg4[%c0_135, %c2_136, %c0_137, %c0_138] : memref<2x8x8x32xf32, #tpu.memory_space<vmem>>, vector<1x1x8x32xf32>
      %199 = vector.shape_cast %198 : vector<1x1x8x32xf32> to vector<8x32xf32>
      %200 = vector.extract_strided_slice %arg21 {offsets = [2, 0], sizes = [1, 32], strides = [1, 1]} : vector<8x32xf32> to vector<1x32xf32>
      %201 = vector.broadcast %200 : vector<1x32xf32> to vector<8x32xf32>
      %202 = arith.mulf %199, %201 : vector<8x32xf32>
      %203 = arith.subf %197, %202 : vector<8x32xf32>
      %c0_139 = arith.constant 0 : index
      %c3 = arith.constant 3 : index
      %c0_140 = arith.constant 0 : index
      %c0_141 = arith.constant 0 : index
      %204 = vector.load %arg3[%c0_139, %c3, %c0_140, %c0_141] : memref<2x8x8x32xf32, #tpu.memory_space<vmem>>, vector<1x1x8x32xf32>
      %205 = vector.shape_cast %204 : vector<1x1x8x32xf32> to vector<8x32xf32>
      %206 = vector.extract_strided_slice %arg20 {offsets = [3, 0], sizes = [1, 32], strides = [1, 1]} : vector<8x32xf32> to vector<1x32xf32>
      %207 = vector.broadcast %206 : vector<1x32xf32> to vector<8x32xf32>
      %208 = arith.mulf %205, %207 : vector<8x32xf32>
      %209 = arith.addf %203, %208 : vector<8x32xf32>
      %c0_142 = arith.constant 0 : index
      %c3_143 = arith.constant 3 : index
      %c0_144 = arith.constant 0 : index
      %c0_145 = arith.constant 0 : index
      %210 = vector.load %arg4[%c0_142, %c3_143, %c0_144, %c0_145] : memref<2x8x8x32xf32, #tpu.memory_space<vmem>>, vector<1x1x8x32xf32>
      %211 = vector.shape_cast %210 : vector<1x1x8x32xf32> to vector<8x32xf32>
      %212 = vector.extract_strided_slice %arg21 {offsets = [3, 0], sizes = [1, 32], strides = [1, 1]} : vector<8x32xf32> to vector<1x32xf32>
      %213 = vector.broadcast %212 : vector<1x32xf32> to vector<8x32xf32>
      %214 = arith.mulf %211, %213 : vector<8x32xf32>
      %215 = arith.subf %209, %214 : vector<8x32xf32>
      %c0_146 = arith.constant 0 : index
      %c4 = arith.constant 4 : index
      %c0_147 = arith.constant 0 : index
      %c0_148 = arith.constant 0 : index
      %216 = vector.load %arg3[%c0_146, %c4, %c0_147, %c0_148] : memref<2x8x8x32xf32, #tpu.memory_space<vmem>>, vector<1x1x8x32xf32>
      %217 = vector.shape_cast %216 : vector<1x1x8x32xf32> to vector<8x32xf32>
      %218 = vector.extract_strided_slice %arg20 {offsets = [4, 0], sizes = [1, 32], strides = [1, 1]} : vector<8x32xf32> to vector<1x32xf32>
      %219 = vector.broadcast %218 : vector<1x32xf32> to vector<8x32xf32>
      %220 = arith.mulf %217, %219 : vector<8x32xf32>
      %221 = arith.addf %215, %220 : vector<8x32xf32>
      %c0_149 = arith.constant 0 : index
      %c4_150 = arith.constant 4 : index
      %c0_151 = arith.constant 0 : index
      %c0_152 = arith.constant 0 : index
      %222 = vector.load %arg4[%c0_149, %c4_150, %c0_151, %c0_152] : memref<2x8x8x32xf32, #tpu.memory_space<vmem>>, vector<1x1x8x32xf32>
      %223 = vector.shape_cast %222 : vector<1x1x8x32xf32> to vector<8x32xf32>
      %224 = vector.extract_strided_slice %arg21 {offsets = [4, 0], sizes = [1, 32], strides = [1, 1]} : vector<8x32xf32> to vector<1x32xf32>
      %225 = vector.broadcast %224 : vector<1x32xf32> to vector<8x32xf32>
      %226 = arith.mulf %223, %225 : vector<8x32xf32>
      %227 = arith.subf %221, %226 : vector<8x32xf32>
      %c0_153 = arith.constant 0 : index
      %c5 = arith.constant 5 : index
      %c0_154 = arith.constant 0 : index
      %c0_155 = arith.constant 0 : index
      %228 = vector.load %arg3[%c0_153, %c5, %c0_154, %c0_155] : memref<2x8x8x32xf32, #tpu.memory_space<vmem>>, vector<1x1x8x32xf32>
      %229 = vector.shape_cast %228 : vector<1x1x8x32xf32> to vector<8x32xf32>
      %230 = vector.extract_strided_slice %arg20 {offsets = [5, 0], sizes = [1, 32], strides = [1, 1]} : vector<8x32xf32> to vector<1x32xf32>
      %231 = vector.broadcast %230 : vector<1x32xf32> to vector<8x32xf32>
      %232 = arith.mulf %229, %231 : vector<8x32xf32>
      %233 = arith.addf %227, %232 : vector<8x32xf32>
      %c0_156 = arith.constant 0 : index
      %c5_157 = arith.constant 5 : index
      %c0_158 = arith.constant 0 : index
      %c0_159 = arith.constant 0 : index
      %234 = vector.load %arg4[%c0_156, %c5_157, %c0_158, %c0_159] : memref<2x8x8x32xf32, #tpu.memory_space<vmem>>, vector<1x1x8x32xf32>
      %235 = vector.shape_cast %234 : vector<1x1x8x32xf32> to vector<8x32xf32>
      %236 = vector.extract_strided_slice %arg21 {offsets = [5, 0], sizes = [1, 32], strides = [1, 1]} : vector<8x32xf32> to vector<1x32xf32>
      %237 = vector.broadcast %236 : vector<1x32xf32> to vector<8x32xf32>
      %238 = arith.mulf %235, %237 : vector<8x32xf32>
      %239 = arith.subf %233, %238 : vector<8x32xf32>
      %c0_160 = arith.constant 0 : index
      %c6 = arith.constant 6 : index
      %c0_161 = arith.constant 0 : index
      %c0_162 = arith.constant 0 : index
      %240 = vector.load %arg3[%c0_160, %c6, %c0_161, %c0_162] : memref<2x8x8x32xf32, #tpu.memory_space<vmem>>, vector<1x1x8x32xf32>
      %241 = vector.shape_cast %240 : vector<1x1x8x32xf32> to vector<8x32xf32>
      %242 = vector.extract_strided_slice %arg20 {offsets = [6, 0], sizes = [1, 32], strides = [1, 1]} : vector<8x32xf32> to vector<1x32xf32>
      %243 = vector.broadcast %242 : vector<1x32xf32> to vector<8x32xf32>
      %244 = arith.mulf %241, %243 : vector<8x32xf32>
      %245 = arith.addf %239, %244 : vector<8x32xf32>
      %c0_163 = arith.constant 0 : index
      %c6_164 = arith.constant 6 : index
      %c0_165 = arith.constant 0 : index
      %c0_166 = arith.constant 0 : index
      %246 = vector.load %arg4[%c0_163, %c6_164, %c0_165, %c0_166] : memref<2x8x8x32xf32, #tpu.memory_space<vmem>>, vector<1x1x8x32xf32>
      %247 = vector.shape_cast %246 : vector<1x1x8x32xf32> to vector<8x32xf32>
      %248 = vector.extract_strided_slice %arg21 {offsets = [6, 0], sizes = [1, 32], strides = [1, 1]} : vector<8x32xf32> to vector<1x32xf32>
      %249 = vector.broadcast %248 : vector<1x32xf32> to vector<8x32xf32>
      %250 = arith.mulf %247, %249 : vector<8x32xf32>
      %251 = arith.subf %245, %250 : vector<8x32xf32>
      %c0_167 = arith.constant 0 : index
      %c7 = arith.constant 7 : index
      %c0_168 = arith.constant 0 : index
      %c0_169 = arith.constant 0 : index
      %252 = vector.load %arg3[%c0_167, %c7, %c0_168, %c0_169] : memref<2x8x8x32xf32, #tpu.memory_space<vmem>>, vector<1x1x8x32xf32>
      %253 = vector.shape_cast %252 : vector<1x1x8x32xf32> to vector<8x32xf32>
      %254 = vector.extract_strided_slice %arg20 {offsets = [7, 0], sizes = [1, 32], strides = [1, 1]} : vector<8x32xf32> to vector<1x32xf32>
      %255 = vector.broadcast %254 : vector<1x32xf32> to vector<8x32xf32>
      %256 = arith.mulf %253, %255 : vector<8x32xf32>
      %257 = arith.addf %251, %256 : vector<8x32xf32>
      %c0_170 = arith.constant 0 : index
      %c7_171 = arith.constant 7 : index
      %c0_172 = arith.constant 0 : index
      %c0_173 = arith.constant 0 : index
      %258 = vector.load %arg4[%c0_170, %c7_171, %c0_172, %c0_173] : memref<2x8x8x32xf32, #tpu.memory_space<vmem>>, vector<1x1x8x32xf32>
      %259 = vector.shape_cast %258 : vector<1x1x8x32xf32> to vector<8x32xf32>
      %260 = vector.extract_strided_slice %arg21 {offsets = [7, 0], sizes = [1, 32], strides = [1, 1]} : vector<8x32xf32> to vector<1x32xf32>
      %261 = vector.broadcast %260 : vector<1x32xf32> to vector<8x32xf32>
      %262 = arith.mulf %259, %261 : vector<8x32xf32>
      %263 = arith.subf %257, %262 : vector<8x32xf32>
      %cst_174 = arith.constant 0.000000e+00 : f32
      %264 = vector.broadcast %cst_174 : f32 to vector<8x32xf32>
      %265 = tpu.concatenate %264, %166 in 0 : vector<8x32xf32>, vector<8x32xf32> -> vector<16x32xf32>
      %266 = vector.broadcast %6 : vector<1x32xf32> to vector<8x32xf32>
      %267 = arith.mulf %166, %266 : vector<8x32xf32>
      %268 = arith.addf %263, %267 : vector<8x32xf32>
      %269 = vector.extract_strided_slice %4 {offsets = [0, 0], sizes = [1, 32], strides = [1, 1]} : vector<8x32xf32> to vector<1x32xf32>
      %270 = vector.extract_strided_slice %265 {offsets = [8, 0], sizes = [8, 32], strides = [1, 1]} : vector<16x32xf32> to vector<8x32xf32>
      %271 = vector.broadcast %269 : vector<1x32xf32> to vector<8x32xf32>
      %272 = arith.mulf %271, %270 : vector<8x32xf32>
      %273 = arith.addf %268, %272 : vector<8x32xf32>
      %274 = vector.extract_strided_slice %4 {offsets = [1, 0], sizes = [1, 32], strides = [1, 1]} : vector<8x32xf32> to vector<1x32xf32>
      %275 = vector.extract_strided_slice %265 {offsets = [7, 0], sizes = [8, 32], strides = [1, 1]} : vector<16x32xf32> to vector<8x32xf32>
      %276 = vector.broadcast %274 : vector<1x32xf32> to vector<8x32xf32>
      %277 = arith.mulf %276, %275 : vector<8x32xf32>
      %278 = arith.addf %273, %277 : vector<8x32xf32>
      %279 = vector.extract_strided_slice %4 {offsets = [2, 0], sizes = [1, 32], strides = [1, 1]} : vector<8x32xf32> to vector<1x32xf32>
      %280 = vector.extract_strided_slice %265 {offsets = [6, 0], sizes = [8, 32], strides = [1, 1]} : vector<16x32xf32> to vector<8x32xf32>
      %281 = vector.broadcast %279 : vector<1x32xf32> to vector<8x32xf32>
      %282 = arith.mulf %281, %280 : vector<8x32xf32>
      %283 = arith.addf %278, %282 : vector<8x32xf32>
      %284 = vector.extract_strided_slice %4 {offsets = [3, 0], sizes = [1, 32], strides = [1, 1]} : vector<8x32xf32> to vector<1x32xf32>
      %285 = vector.extract_strided_slice %265 {offsets = [5, 0], sizes = [8, 32], strides = [1, 1]} : vector<16x32xf32> to vector<8x32xf32>
      %286 = vector.broadcast %284 : vector<1x32xf32> to vector<8x32xf32>
      %287 = arith.mulf %286, %285 : vector<8x32xf32>
      %288 = arith.addf %283, %287 : vector<8x32xf32>
      %289 = vector.extract_strided_slice %4 {offsets = [4, 0], sizes = [1, 32], strides = [1, 1]} : vector<8x32xf32> to vector<1x32xf32>
      %290 = vector.extract_strided_slice %265 {offsets = [4, 0], sizes = [8, 32], strides = [1, 1]} : vector<16x32xf32> to vector<8x32xf32>
      %291 = vector.broadcast %289 : vector<1x32xf32> to vector<8x32xf32>
      %292 = arith.mulf %291, %290 : vector<8x32xf32>
      %293 = arith.addf %288, %292 : vector<8x32xf32>
      %294 = vector.extract_strided_slice %4 {offsets = [5, 0], sizes = [1, 32], strides = [1, 1]} : vector<8x32xf32> to vector<1x32xf32>
      %295 = vector.extract_strided_slice %265 {offsets = [3, 0], sizes = [8, 32], strides = [1, 1]} : vector<16x32xf32> to vector<8x32xf32>
      %296 = vector.broadcast %294 : vector<1x32xf32> to vector<8x32xf32>
      %297 = arith.mulf %296, %295 : vector<8x32xf32>
      %298 = arith.addf %293, %297 : vector<8x32xf32>
      %299 = vector.extract_strided_slice %4 {offsets = [6, 0], sizes = [1, 32], strides = [1, 1]} : vector<8x32xf32> to vector<1x32xf32>
      %300 = vector.extract_strided_slice %265 {offsets = [2, 0], sizes = [8, 32], strides = [1, 1]} : vector<16x32xf32> to vector<8x32xf32>
      %301 = vector.broadcast %299 : vector<1x32xf32> to vector<8x32xf32>
      %302 = arith.mulf %301, %300 : vector<8x32xf32>
      %303 = arith.addf %298, %302 : vector<8x32xf32>
      %304 = vector.extract_strided_slice %4 {offsets = [7, 0], sizes = [1, 32], strides = [1, 1]} : vector<8x32xf32> to vector<1x32xf32>
      %305 = vector.extract_strided_slice %265 {offsets = [1, 0], sizes = [8, 32], strides = [1, 1]} : vector<16x32xf32> to vector<8x32xf32>
      %306 = vector.broadcast %304 : vector<1x32xf32> to vector<8x32xf32>
      %307 = arith.mulf %306, %305 : vector<8x32xf32>
      %308 = arith.addf %303, %307 : vector<8x32xf32>
      %309 = arith.index_cast %164 : i32 to index
      %c0_175 = arith.constant 0 : index
      %310 = vector.load %arg18[%309, %c0_175] : memref<16x32xf32, #tpu.memory_space<vmem>>, vector<8x32xf32>
      tpu.vector_store %arg18[%309, %c0_175], %308 {strides = array<i32>} : memref<16x32xf32, #tpu.memory_space<vmem>>, vector<8x32xf32>,
      %cst_176 = arith.constant 0.000000e+00 : f32
      %311 = vector.broadcast %cst_176 : f32 to vector<8x32xf32>
      %cst_177 = arith.constant 0.000000e+00 : f32
      %312 = vector.broadcast %cst_177 : f32 to vector<8x32xf32>
      %313 = vector.extract_strided_slice %166 {offsets = [0, 0], sizes = [1, 32], strides = [1, 1]} : vector<8x32xf32> to vector<1x32xf32>
      %c0_178 = arith.constant 0 : index
      %c0_179 = arith.constant 0 : index
      %c0_180 = arith.constant 0 : index
      %c0_181 = arith.constant 0 : index
      %314 = vector.load %arg5[%c0_178, %c0_179, %c0_180, %c0_181] : memref<2x8x8x32xf32, #tpu.memory_space<vmem>>, vector<1x1x8x32xf32>
      %315 = vector.shape_cast %314 : vector<1x1x8x32xf32> to vector<8x32xf32>
      %316 = vector.broadcast %313 : vector<1x32xf32> to vector<8x32xf32>
      %317 = arith.mulf %315, %316 : vector<8x32xf32>
      %318 = arith.addf %311, %317 : vector<8x32xf32>
      %c0_182 = arith.constant 0 : index
      %c0_183 = arith.constant 0 : index
      %c0_184 = arith.constant 0 : index
      %c0_185 = arith.constant 0 : index
      %319 = vector.load %arg6[%c0_182, %c0_183, %c0_184, %c0_185] : memref<2x8x8x32xf32, #tpu.memory_space<vmem>>, vector<1x1x8x32xf32>
      %320 = vector.shape_cast %319 : vector<1x1x8x32xf32> to vector<8x32xf32>
      %321 = vector.broadcast %313 : vector<1x32xf32> to vector<8x32xf32>
      %322 = arith.mulf %320, %321 : vector<8x32xf32>
      %323 = arith.addf %312, %322 : vector<8x32xf32>
      %324 = vector.extract_strided_slice %166 {offsets = [1, 0], sizes = [1, 32], strides = [1, 1]} : vector<8x32xf32> to vector<1x32xf32>
      %c0_186 = arith.constant 0 : index
      %c1_187 = arith.constant 1 : index
      %c0_188 = arith.constant 0 : index
      %c0_189 = arith.constant 0 : index
      %325 = vector.load %arg5[%c0_186, %c1_187, %c0_188, %c0_189] : memref<2x8x8x32xf32, #tpu.memory_space<vmem>>, vector<1x1x8x32xf32>
      %326 = vector.shape_cast %325 : vector<1x1x8x32xf32> to vector<8x32xf32>
      %327 = vector.broadcast %324 : vector<1x32xf32> to vector<8x32xf32>
      %328 = arith.mulf %326, %327 : vector<8x32xf32>
      %329 = arith.addf %318, %328 : vector<8x32xf32>
      %c0_190 = arith.constant 0 : index
      %c1_191 = arith.constant 1 : index
      %c0_192 = arith.constant 0 : index
      %c0_193 = arith.constant 0 : index
      %330 = vector.load %arg6[%c0_190, %c1_191, %c0_192, %c0_193] : memref<2x8x8x32xf32, #tpu.memory_space<vmem>>, vector<1x1x8x32xf32>
      %331 = vector.shape_cast %330 : vector<1x1x8x32xf32> to vector<8x32xf32>
      %332 = vector.broadcast %324 : vector<1x32xf32> to vector<8x32xf32>
      %333 = arith.mulf %331, %332 : vector<8x32xf32>
      %334 = arith.addf %323, %333 : vector<8x32xf32>
      %335 = vector.extract_strided_slice %166 {offsets = [2, 0], sizes = [1, 32], strides = [1, 1]} : vector<8x32xf32> to vector<1x32xf32>
      %c0_194 = arith.constant 0 : index
      %c2_195 = arith.constant 2 : index
      %c0_196 = arith.constant 0 : index
      %c0_197 = arith.constant 0 : index
      %336 = vector.load %arg5[%c0_194, %c2_195, %c0_196, %c0_197] : memref<2x8x8x32xf32, #tpu.memory_space<vmem>>, vector<1x1x8x32xf32>
      %337 = vector.shape_cast %336 : vector<1x1x8x32xf32> to vector<8x32xf32>
      %338 = vector.broadcast %335 : vector<1x32xf32> to vector<8x32xf32>
      %339 = arith.mulf %337, %338 : vector<8x32xf32>
      %340 = arith.addf %329, %339 : vector<8x32xf32>
      %c0_198 = arith.constant 0 : index
      %c2_199 = arith.constant 2 : index
      %c0_200 = arith.constant 0 : index
      %c0_201 = arith.constant 0 : index
      %341 = vector.load %arg6[%c0_198, %c2_199, %c0_200, %c0_201] : memref<2x8x8x32xf32, #tpu.memory_space<vmem>>, vector<1x1x8x32xf32>
      %342 = vector.shape_cast %341 : vector<1x1x8x32xf32> to vector<8x32xf32>
      %343 = vector.broadcast %335 : vector<1x32xf32> to vector<8x32xf32>
      %344 = arith.mulf %342, %343 : vector<8x32xf32>
      %345 = arith.addf %334, %344 : vector<8x32xf32>
      %346 = vector.extract_strided_slice %166 {offsets = [3, 0], sizes = [1, 32], strides = [1, 1]} : vector<8x32xf32> to vector<1x32xf32>
      %c0_202 = arith.constant 0 : index
      %c3_203 = arith.constant 3 : index
      %c0_204 = arith.constant 0 : index
      %c0_205 = arith.constant 0 : index
      %347 = vector.load %arg5[%c0_202, %c3_203, %c0_204, %c0_205] : memref<2x8x8x32xf32, #tpu.memory_space<vmem>>, vector<1x1x8x32xf32>
      %348 = vector.shape_cast %347 : vector<1x1x8x32xf32> to vector<8x32xf32>
      %349 = vector.broadcast %346 : vector<1x32xf32> to vector<8x32xf32>
      %350 = arith.mulf %348, %349 : vector<8x32xf32>
      %351 = arith.addf %340, %350 : vector<8x32xf32>
      %c0_206 = arith.constant 0 : index
      %c3_207 = arith.constant 3 : index
      %c0_208 = arith.constant 0 : index
      %c0_209 = arith.constant 0 : index
      %352 = vector.load %arg6[%c0_206, %c3_207, %c0_208, %c0_209] : memref<2x8x8x32xf32, #tpu.memory_space<vmem>>, vector<1x1x8x32xf32>
      %353 = vector.shape_cast %352 : vector<1x1x8x32xf32> to vector<8x32xf32>
      %354 = vector.broadcast %346 : vector<1x32xf32> to vector<8x32xf32>
      %355 = arith.mulf %353, %354 : vector<8x32xf32>
      %356 = arith.addf %345, %355 : vector<8x32xf32>
      %357 = vector.extract_strided_slice %166 {offsets = [4, 0], sizes = [1, 32], strides = [1, 1]} : vector<8x32xf32> to vector<1x32xf32>
      %c0_210 = arith.constant 0 : index
      %c4_211 = arith.constant 4 : index
      %c0_212 = arith.constant 0 : index
      %c0_213 = arith.constant 0 : index
      %358 = vector.load %arg5[%c0_210, %c4_211, %c0_212, %c0_213] : memref<2x8x8x32xf32, #tpu.memory_space<vmem>>, vector<1x1x8x32xf32>
      %359 = vector.shape_cast %358 : vector<1x1x8x32xf32> to vector<8x32xf32>
      %360 = vector.broadcast %357 : vector<1x32xf32> to vector<8x32xf32>
      %361 = arith.mulf %359, %360 : vector<8x32xf32>
      %362 = arith.addf %351, %361 : vector<8x32xf32>
      %c0_214 = arith.constant 0 : index
      %c4_215 = arith.constant 4 : index
      %c0_216 = arith.constant 0 : index
      %c0_217 = arith.constant 0 : index
      %363 = vector.load %arg6[%c0_214, %c4_215, %c0_216, %c0_217] : memref<2x8x8x32xf32, #tpu.memory_space<vmem>>, vector<1x1x8x32xf32>
      %364 = vector.shape_cast %363 : vector<1x1x8x32xf32> to vector<8x32xf32>
      %365 = vector.broadcast %357 : vector<1x32xf32> to vector<8x32xf32>
      %366 = arith.mulf %364, %365 : vector<8x32xf32>
      %367 = arith.addf %356, %366 : vector<8x32xf32>
      %368 = vector.extract_strided_slice %166 {offsets = [5, 0], sizes = [1, 32], strides = [1, 1]} : vector<8x32xf32> to vector<1x32xf32>
      %c0_218 = arith.constant 0 : index
      %c5_219 = arith.constant 5 : index
      %c0_220 = arith.constant 0 : index
      %c0_221 = arith.constant 0 : index
      %369 = vector.load %arg5[%c0_218, %c5_219, %c0_220, %c0_221] : memref<2x8x8x32xf32, #tpu.memory_space<vmem>>, vector<1x1x8x32xf32>
      %370 = vector.shape_cast %369 : vector<1x1x8x32xf32> to vector<8x32xf32>
      %371 = vector.broadcast %368 : vector<1x32xf32> to vector<8x32xf32>
      %372 = arith.mulf %370, %371 : vector<8x32xf32>
      %373 = arith.addf %362, %372 : vector<8x32xf32>
      %c0_222 = arith.constant 0 : index
      %c5_223 = arith.constant 5 : index
      %c0_224 = arith.constant 0 : index
      %c0_225 = arith.constant 0 : index
      %374 = vector.load %arg6[%c0_222, %c5_223, %c0_224, %c0_225] : memref<2x8x8x32xf32, #tpu.memory_space<vmem>>, vector<1x1x8x32xf32>
      %375 = vector.shape_cast %374 : vector<1x1x8x32xf32> to vector<8x32xf32>
      %376 = vector.broadcast %368 : vector<1x32xf32> to vector<8x32xf32>
      %377 = arith.mulf %375, %376 : vector<8x32xf32>
      %378 = arith.addf %367, %377 : vector<8x32xf32>
      %379 = vector.extract_strided_slice %166 {offsets = [6, 0], sizes = [1, 32], strides = [1, 1]} : vector<8x32xf32> to vector<1x32xf32>
      %c0_226 = arith.constant 0 : index
      %c6_227 = arith.constant 6 : index
      %c0_228 = arith.constant 0 : index
      %c0_229 = arith.constant 0 : index
      %380 = vector.load %arg5[%c0_226, %c6_227, %c0_228, %c0_229] : memref<2x8x8x32xf32, #tpu.memory_space<vmem>>, vector<1x1x8x32xf32>
      %381 = vector.shape_cast %380 : vector<1x1x8x32xf32> to vector<8x32xf32>
      %382 = vector.broadcast %379 : vector<1x32xf32> to vector<8x32xf32>
      %383 = arith.mulf %381, %382 : vector<8x32xf32>
      %384 = arith.addf %373, %383 : vector<8x32xf32>
      %c0_230 = arith.constant 0 : index
      %c6_231 = arith.constant 6 : index
      %c0_232 = arith.constant 0 : index
      %c0_233 = arith.constant 0 : index
      %385 = vector.load %arg6[%c0_230, %c6_231, %c0_232, %c0_233] : memref<2x8x8x32xf32, #tpu.memory_space<vmem>>, vector<1x1x8x32xf32>
      %386 = vector.shape_cast %385 : vector<1x1x8x32xf32> to vector<8x32xf32>
      %387 = vector.broadcast %379 : vector<1x32xf32> to vector<8x32xf32>
      %388 = arith.mulf %386, %387 : vector<8x32xf32>
      %389 = arith.addf %378, %388 : vector<8x32xf32>
      %390 = vector.extract_strided_slice %166 {offsets = [7, 0], sizes = [1, 32], strides = [1, 1]} : vector<8x32xf32> to vector<1x32xf32>
      %c0_234 = arith.constant 0 : index
      %c7_235 = arith.constant 7 : index
      %c0_236 = arith.constant 0 : index
      %c0_237 = arith.constant 0 : index
      %391 = vector.load %arg5[%c0_234, %c7_235, %c0_236, %c0_237] : memref<2x8x8x32xf32, #tpu.memory_space<vmem>>, vector<1x1x8x32xf32>
      %392 = vector.shape_cast %391 : vector<1x1x8x32xf32> to vector<8x32xf32>
      %393 = vector.broadcast %390 : vector<1x32xf32> to vector<8x32xf32>
      %394 = arith.mulf %392, %393 : vector<8x32xf32>
      %395 = arith.addf %384, %394 : vector<8x32xf32>
      %c0_238 = arith.constant 0 : index
      %c7_239 = arith.constant 7 : index
      %c0_240 = arith.constant 0 : index
      %c0_241 = arith.constant 0 : index
      %396 = vector.load %arg6[%c0_238, %c7_239, %c0_240, %c0_241] : memref<2x8x8x32xf32, #tpu.memory_space<vmem>>, vector<1x1x8x32xf32>
      %397 = vector.shape_cast %396 : vector<1x1x8x32xf32> to vector<8x32xf32>
      %398 = vector.broadcast %390 : vector<1x32xf32> to vector<8x32xf32>
      %399 = arith.mulf %397, %398 : vector<8x32xf32>
      %400 = arith.addf %389, %399 : vector<8x32xf32>
      %401 = arith.mulf %8, %arg20 : vector<8x32xf32>
      %402 = arith.mulf %10, %arg21 : vector<8x32xf32>
      %403 = arith.subf %401, %402 : vector<8x32xf32>
      %404 = arith.addf %403, %395 : vector<8x32xf32>
      %405 = arith.mulf %10, %arg20 : vector<8x32xf32>
      %406 = arith.mulf %8, %arg21 : vector<8x32xf32>
      %407 = arith.addf %405, %406 : vector<8x32xf32>
      %408 = arith.addf %407, %400 : vector<8x32xf32>
      scf.yield %404, %408 : vector<8x32xf32>, vector<8x32xf32>
    }
    %c2_i32_17 = arith.constant 2 : i32
    %c0_18 = arith.constant 0 : index
    %c0_19 = arith.constant 0 : index
    %15 = vector.load %arg17[%c0_18, %c0_19] : memref<16x32xf32, #tpu.memory_space<vmem>>, vector<16x32xf32>
    %c0_20 = arith.constant 0 : index
    %c0_21 = arith.constant 0 : index
    %16 = vector.load %arg18[%c0_20, %c0_21] : memref<16x32xf32, #tpu.memory_space<vmem>>, vector<16x32xf32>
    %17 = arith.mulf %16, %16 : vector<16x32xf32>
    %18 = arith.mulf %16, %17 : vector<16x32xf32>
    %cst_22 = arith.constant 4.471500e-02 : f32
    %19 = vector.broadcast %cst_22 : f32 to vector<16x32xf32>
    %20 = arith.mulf %19, %18 : vector<16x32xf32>
    %21 = arith.addf %16, %20 : vector<16x32xf32>
    %cst_23 = arith.constant 0.797884583 : f32
    %22 = vector.broadcast %cst_23 : f32 to vector<16x32xf32>
    %23 = arith.mulf %22, %21 : vector<16x32xf32>
    %24 = math.tanh %23 : vector<16x32xf32>
    %cst_24 = arith.constant 1.000000e+00 : f32
    %25 = vector.broadcast %cst_24 : f32 to vector<16x32xf32>
    %26 = arith.addf %25, %24 : vector<16x32xf32>
    %cst_25 = arith.constant 5.000000e-01 : f32
    %27 = vector.broadcast %cst_25 : f32 to vector<16x32xf32>
    %28 = arith.mulf %27, %26 : vector<16x32xf32>
    %29 = arith.mulf %16, %28 : vector<16x32xf32>
    %30 = arith.truncf %29 : vector<16x32xf32> to vector<16x32xbf16>
    %c0_26 = arith.constant 0 : index
    %c0_27 = arith.constant 0 : index
    %c0_28 = arith.constant 0 : index
    %31 = vector.load %arg10[%c0_26, %c0_27, %c0_28] : memref<2x32x32xbf16, #tpu.memory_space<vmem>>, vector<1x32x32xbf16>
    %32 = vector.shape_cast %31 : vector<1x32x32xbf16> to vector<32x32xbf16>
    %cst_29 = arith.constant dense<0.000000e+00> : vector<16x32xf32>
    %33 = tpu.matmul %30, %32, %cst_29 {dimension_numbers = #tpu.dot_dimension_numbers<[1], [0], [0], [1], [0, 0, 1, 1], [], []>} : vector<16x32xbf16>, vector<32x32xbf16>, vector<16x32xf32> -> vector<16x32xf32>
    %c0_30 = arith.constant 0 : index
    %c0_31 = arith.constant 0 : index
    %c0_32 = arith.constant 0 : index
    %34 = vector.load %arg12[%c0_30, %c0_31, %c0_32] : memref<2x1x32xf32, #tpu.memory_space<vmem>>, vector<1x1x32xf32>
    %35 = vector.shape_cast %34 : vector<1x1x32xf32> to vector<1x32xf32>
    %36 = vector.broadcast %35 : vector<1x32xf32> to vector<16x32xf32>
    %37 = arith.addf %33, %36 : vector<16x32xf32>
    %c0_33 = arith.constant 0 : index
    %c0_34 = arith.constant 0 : index
    %c0_35 = arith.constant 0 : index
    %38 = vector.load %arg11[%c0_33, %c0_34, %c0_35] : memref<2x32x32xbf16, #tpu.memory_space<vmem>>, vector<1x32x32xbf16>
    %39 = vector.shape_cast %38 : vector<1x32x32xbf16> to vector<32x32xbf16>
    %cst_36 = arith.constant dense<0.000000e+00> : vector<16x32xf32>
    %40 = tpu.matmul %30, %39, %cst_36 {dimension_numbers = #tpu.dot_dimension_numbers<[1], [0], [0], [1], [0, 0, 1, 1], [], []>} : vector<16x32xbf16>, vector<32x32xbf16>, vector<16x32xf32> -> vector<16x32xf32>
    %c0_37 = arith.constant 0 : index
    %c0_38 = arith.constant 0 : index
    %c0_39 = arith.constant 0 : index
    %41 = vector.load %arg13[%c0_37, %c0_38, %c0_39] : memref<2x1x32xf32, #tpu.memory_space<vmem>>, vector<1x1x32xf32>
    %42 = vector.shape_cast %41 : vector<1x1x32xf32> to vector<1x32xf32>
    %43 = vector.broadcast %42 : vector<1x32xf32> to vector<16x32xf32>
    %44 = arith.addf %40, %43 : vector<16x32xf32>
    %45 = arith.negf %44 : vector<16x32xf32>
    %46 = math.exp %45 : vector<16x32xf32>
    %cst_40 = arith.constant 1.000000e+00 : f32
    %47 = vector.broadcast %cst_40 : f32 to vector<16x32xf32>
    %48 = arith.addf %47, %46 : vector<16x32xf32>
    %49 = arith.divf %47, %48 : vector<16x32xf32>
    %50 = arith.mulf %37, %49 : vector<16x32xf32>
    %51 = arith.addf %50, %15 : vector<16x32xf32>
    %cst_41 = arith.constant dense<0.000000e+00> : vector<16xf32>
    %52 = vector.multi_reduction <add>, %51, %cst_41 [1] : vector<16x32xf32> to vector<16xf32>
    %53 = vector.shape_cast %52 : vector<16xf32> to vector<16x1xf32>
    %cst_42 = arith.constant 3.200000e+01 : f32
    %54 = vector.broadcast %cst_42 : f32 to vector<16x1xf32>
    %55 = arith.divf %53, %54 : vector<16x1xf32>
    %56 = arith.mulf %51, %51 : vector<16x32xf32>
    %cst_43 = arith.constant dense<0.000000e+00> : vector<16xf32>
    %57 = vector.multi_reduction <add>, %56, %cst_43 [1] : vector<16x32xf32> to vector<16xf32>
    %58 = vector.shape_cast %57 : vector<16xf32> to vector<16x1xf32>
    %cst_44 = arith.constant 3.200000e+01 : f32
    %59 = vector.broadcast %cst_44 : f32 to vector<16x1xf32>
    %60 = arith.divf %58, %59 : vector<16x1xf32>
    %61 = vector.broadcast %55 : vector<16x1xf32> to vector<16x32xf32>
    %62 = arith.subf %51, %61 : vector<16x32xf32>
    %63 = arith.mulf %55, %55 : vector<16x1xf32>
    %64 = arith.subf %60, %63 : vector<16x1xf32>
    %cst_45 = arith.constant 9.99999974E-6 : f32
    %65 = vector.broadcast %cst_45 : f32 to vector<16x1xf32>
    %66 = arith.addf %64, %65 : vector<16x1xf32>
    %67 = math.rsqrt %66 : vector<16x1xf32>
    %68 = vector.broadcast %67 : vector<16x1xf32> to vector<16x32xf32>
    %69 = arith.mulf %62, %68 : vector<16x32xf32>
    %c0_46 = arith.constant 0 : index
    %c0_47 = arith.constant 0 : index
    %c0_48 = arith.constant 0 : index
    %70 = vector.load %arg14[%c0_46, %c0_47, %c0_48] : memref<2x1x32xf32, #tpu.memory_space<vmem>>, vector<1x1x32xf32>
    %71 = vector.shape_cast %70 : vector<1x1x32xf32> to vector<1x32xf32>
    %72 = vector.broadcast %71 : vector<1x32xf32> to vector<16x32xf32>
    %73 = arith.mulf %69, %72 : vector<16x32xf32>
    %c0_49 = arith.constant 0 : index
    %c0_50 = arith.constant 0 : index
    %c0_51 = arith.constant 0 : index
    %74 = vector.load %arg15[%c0_49, %c0_50, %c0_51] : memref<2x1x32xf32, #tpu.memory_space<vmem>>, vector<1x1x32xf32>
    %75 = vector.shape_cast %74 : vector<1x1x32xf32> to vector<1x32xf32>
    %76 = vector.broadcast %75 : vector<1x32xf32> to vector<16x32xf32>
    %77 = arith.addf %73, %76 : vector<16x32xf32>
    %c0_52 = arith.constant 0 : index
    %c0_53 = arith.constant 0 : index
    %78 = vector.load %arg17[%c0_52, %c0_53] : memref<16x32xf32, #tpu.memory_space<vmem>>, vector<16x32xf32>
    tpu.vector_store %arg17[%c0_52, %c0_53], %77 {strides = array<i32>} : memref<16x32xf32, #tpu.memory_space<vmem>>, vector<16x32xf32>,
    %c1 = arith.constant 1 : index
    %c0_54 = arith.constant 0 : index
    %c0_55 = arith.constant 0 : index
    %79 = vector.load %arg2[%c1, %c0_54, %c0_55] : memref<2x8x32xf32, #tpu.memory_space<vmem>>, vector<1x8x32xf32>
    %80 = vector.shape_cast %79 : vector<1x8x32xf32> to vector<8x32xf32>
    %c1_56 = arith.constant 1 : index
    %c0_57 = arith.constant 0 : index
    %c0_58 = arith.constant 0 : index
    %81 = vector.load %arg9[%c1_56, %c0_57, %c0_58] : memref<2x1x32xf32, #tpu.memory_space<vmem>>, vector<1x1x32xf32>
    %82 = vector.shape_cast %81 : vector<1x1x32xf32> to vector<1x32xf32>
    %c1_59 = arith.constant 1 : index
    %c0_60 = arith.constant 0 : index
    %c0_61 = arith.constant 0 : index
    %83 = vector.load %arg7[%c1_59, %c0_60, %c0_61] : memref<2x8x32xf32, #tpu.memory_space<vmem>>, vector<1x8x32xf32>
    %84 = vector.shape_cast %83 : vector<1x8x32xf32> to vector<8x32xf32>
    %c1_62 = arith.constant 1 : index
    %c0_63 = arith.constant 0 : index
    %c0_64 = arith.constant 0 : index
    %85 = vector.load %arg8[%c1_62, %c0_63, %c0_64] : memref<2x8x32xf32, #tpu.memory_space<vmem>>, vector<1x8x32xf32>
    %86 = vector.shape_cast %85 : vector<1x8x32xf32> to vector<8x32xf32>
    %cst_65 = arith.constant 0.000000e+00 : f32
    %87 = vector.broadcast %cst_65 : f32 to vector<8x32xf32>
    %cst_66 = arith.constant 0.000000e+00 : f32
    %88 = vector.broadcast %cst_66 : f32 to vector<8x32xf32>
    %c0_i32_67 = arith.constant 0 : i32
    %c2_i32_68 = arith.constant 2 : i32
    %89 = arith.addi %c0_i32_67, %c2_i32_68 : i32
    %c1_i32_69 = arith.constant 1 : i32
    %90:2 = scf.for %arg19 = %c0_i32_67 to %89 step %c1_i32_69 iter_args(%arg20 = %87, %arg21 = %88) -> (vector<8x32xf32>, vector<8x32xf32>)  : i32 {
      %c8_i32 = arith.constant 8 : i32
      %163 = arith.muli %arg19, %c8_i32 : i32
      %164 = tpu.assume_multiple %163, 8 : i32
      %165 = arith.index_cast %164 : i32 to index
      %c0_114 = arith.constant 0 : index
      %166 = vector.load %arg17[%165, %c0_114] : memref<16x32xf32, #tpu.memory_space<vmem>>, vector<8x32xf32>
      %cst_115 = arith.constant 0.000000e+00 : f32
      %167 = vector.broadcast %cst_115 : f32 to vector<8x32xf32>
      %c1_116 = arith.constant 1 : index
      %c0_117 = arith.constant 0 : index
      %c0_118 = arith.constant 0 : index
      %c0_119 = arith.constant 0 : index
      %168 = vector.load %arg3[%c1_116, %c0_117, %c0_118, %c0_119] : memref<2x8x8x32xf32, #tpu.memory_space<vmem>>, vector<1x1x8x32xf32>
      %169 = vector.shape_cast %168 : vector<1x1x8x32xf32> to vector<8x32xf32>
      %170 = vector.extract_strided_slice %arg20 {offsets = [0, 0], sizes = [1, 32], strides = [1, 1]} : vector<8x32xf32> to vector<1x32xf32>
      %171 = vector.broadcast %170 : vector<1x32xf32> to vector<8x32xf32>
      %172 = arith.mulf %169, %171 : vector<8x32xf32>
      %173 = arith.addf %167, %172 : vector<8x32xf32>
      %c1_120 = arith.constant 1 : index
      %c0_121 = arith.constant 0 : index
      %c0_122 = arith.constant 0 : index
      %c0_123 = arith.constant 0 : index
      %174 = vector.load %arg4[%c1_120, %c0_121, %c0_122, %c0_123] : memref<2x8x8x32xf32, #tpu.memory_space<vmem>>, vector<1x1x8x32xf32>
      %175 = vector.shape_cast %174 : vector<1x1x8x32xf32> to vector<8x32xf32>
      %176 = vector.extract_strided_slice %arg21 {offsets = [0, 0], sizes = [1, 32], strides = [1, 1]} : vector<8x32xf32> to vector<1x32xf32>
      %177 = vector.broadcast %176 : vector<1x32xf32> to vector<8x32xf32>
      %178 = arith.mulf %175, %177 : vector<8x32xf32>
      %179 = arith.subf %173, %178 : vector<8x32xf32>
      %c1_124 = arith.constant 1 : index
      %c1_125 = arith.constant 1 : index
      %c0_126 = arith.constant 0 : index
      %c0_127 = arith.constant 0 : index
      %180 = vector.load %arg3[%c1_124, %c1_125, %c0_126, %c0_127] : memref<2x8x8x32xf32, #tpu.memory_space<vmem>>, vector<1x1x8x32xf32>
      %181 = vector.shape_cast %180 : vector<1x1x8x32xf32> to vector<8x32xf32>
      %182 = vector.extract_strided_slice %arg20 {offsets = [1, 0], sizes = [1, 32], strides = [1, 1]} : vector<8x32xf32> to vector<1x32xf32>
      %183 = vector.broadcast %182 : vector<1x32xf32> to vector<8x32xf32>
      %184 = arith.mulf %181, %183 : vector<8x32xf32>
      %185 = arith.addf %179, %184 : vector<8x32xf32>
      %c1_128 = arith.constant 1 : index
      %c1_129 = arith.constant 1 : index
      %c0_130 = arith.constant 0 : index
      %c0_131 = arith.constant 0 : index
      %186 = vector.load %arg4[%c1_128, %c1_129, %c0_130, %c0_131] : memref<2x8x8x32xf32, #tpu.memory_space<vmem>>, vector<1x1x8x32xf32>
      %187 = vector.shape_cast %186 : vector<1x1x8x32xf32> to vector<8x32xf32>
      %188 = vector.extract_strided_slice %arg21 {offsets = [1, 0], sizes = [1, 32], strides = [1, 1]} : vector<8x32xf32> to vector<1x32xf32>
      %189 = vector.broadcast %188 : vector<1x32xf32> to vector<8x32xf32>
      %190 = arith.mulf %187, %189 : vector<8x32xf32>
      %191 = arith.subf %185, %190 : vector<8x32xf32>
      %c1_132 = arith.constant 1 : index
      %c2 = arith.constant 2 : index
      %c0_133 = arith.constant 0 : index
      %c0_134 = arith.constant 0 : index
      %192 = vector.load %arg3[%c1_132, %c2, %c0_133, %c0_134] : memref<2x8x8x32xf32, #tpu.memory_space<vmem>>, vector<1x1x8x32xf32>
      %193 = vector.shape_cast %192 : vector<1x1x8x32xf32> to vector<8x32xf32>
      %194 = vector.extract_strided_slice %arg20 {offsets = [2, 0], sizes = [1, 32], strides = [1, 1]} : vector<8x32xf32> to vector<1x32xf32>
      %195 = vector.broadcast %194 : vector<1x32xf32> to vector<8x32xf32>
      %196 = arith.mulf %193, %195 : vector<8x32xf32>
      %197 = arith.addf %191, %196 : vector<8x32xf32>
      %c1_135 = arith.constant 1 : index
      %c2_136 = arith.constant 2 : index
      %c0_137 = arith.constant 0 : index
      %c0_138 = arith.constant 0 : index
      %198 = vector.load %arg4[%c1_135, %c2_136, %c0_137, %c0_138] : memref<2x8x8x32xf32, #tpu.memory_space<vmem>>, vector<1x1x8x32xf32>
      %199 = vector.shape_cast %198 : vector<1x1x8x32xf32> to vector<8x32xf32>
      %200 = vector.extract_strided_slice %arg21 {offsets = [2, 0], sizes = [1, 32], strides = [1, 1]} : vector<8x32xf32> to vector<1x32xf32>
      %201 = vector.broadcast %200 : vector<1x32xf32> to vector<8x32xf32>
      %202 = arith.mulf %199, %201 : vector<8x32xf32>
      %203 = arith.subf %197, %202 : vector<8x32xf32>
      %c1_139 = arith.constant 1 : index
      %c3 = arith.constant 3 : index
      %c0_140 = arith.constant 0 : index
      %c0_141 = arith.constant 0 : index
      %204 = vector.load %arg3[%c1_139, %c3, %c0_140, %c0_141] : memref<2x8x8x32xf32, #tpu.memory_space<vmem>>, vector<1x1x8x32xf32>
      %205 = vector.shape_cast %204 : vector<1x1x8x32xf32> to vector<8x32xf32>
      %206 = vector.extract_strided_slice %arg20 {offsets = [3, 0], sizes = [1, 32], strides = [1, 1]} : vector<8x32xf32> to vector<1x32xf32>
      %207 = vector.broadcast %206 : vector<1x32xf32> to vector<8x32xf32>
      %208 = arith.mulf %205, %207 : vector<8x32xf32>
      %209 = arith.addf %203, %208 : vector<8x32xf32>
      %c1_142 = arith.constant 1 : index
      %c3_143 = arith.constant 3 : index
      %c0_144 = arith.constant 0 : index
      %c0_145 = arith.constant 0 : index
      %210 = vector.load %arg4[%c1_142, %c3_143, %c0_144, %c0_145] : memref<2x8x8x32xf32, #tpu.memory_space<vmem>>, vector<1x1x8x32xf32>
      %211 = vector.shape_cast %210 : vector<1x1x8x32xf32> to vector<8x32xf32>
      %212 = vector.extract_strided_slice %arg21 {offsets = [3, 0], sizes = [1, 32], strides = [1, 1]} : vector<8x32xf32> to vector<1x32xf32>
      %213 = vector.broadcast %212 : vector<1x32xf32> to vector<8x32xf32>
      %214 = arith.mulf %211, %213 : vector<8x32xf32>
      %215 = arith.subf %209, %214 : vector<8x32xf32>
      %c1_146 = arith.constant 1 : index
      %c4 = arith.constant 4 : index
      %c0_147 = arith.constant 0 : index
      %c0_148 = arith.constant 0 : index
      %216 = vector.load %arg3[%c1_146, %c4, %c0_147, %c0_148] : memref<2x8x8x32xf32, #tpu.memory_space<vmem>>, vector<1x1x8x32xf32>
      %217 = vector.shape_cast %216 : vector<1x1x8x32xf32> to vector<8x32xf32>
      %218 = vector.extract_strided_slice %arg20 {offsets = [4, 0], sizes = [1, 32], strides = [1, 1]} : vector<8x32xf32> to vector<1x32xf32>
      %219 = vector.broadcast %218 : vector<1x32xf32> to vector<8x32xf32>
      %220 = arith.mulf %217, %219 : vector<8x32xf32>
      %221 = arith.addf %215, %220 : vector<8x32xf32>
      %c1_149 = arith.constant 1 : index
      %c4_150 = arith.constant 4 : index
      %c0_151 = arith.constant 0 : index
      %c0_152 = arith.constant 0 : index
      %222 = vector.load %arg4[%c1_149, %c4_150, %c0_151, %c0_152] : memref<2x8x8x32xf32, #tpu.memory_space<vmem>>, vector<1x1x8x32xf32>
      %223 = vector.shape_cast %222 : vector<1x1x8x32xf32> to vector<8x32xf32>
      %224 = vector.extract_strided_slice %arg21 {offsets = [4, 0], sizes = [1, 32], strides = [1, 1]} : vector<8x32xf32> to vector<1x32xf32>
      %225 = vector.broadcast %224 : vector<1x32xf32> to vector<8x32xf32>
      %226 = arith.mulf %223, %225 : vector<8x32xf32>
      %227 = arith.subf %221, %226 : vector<8x32xf32>
      %c1_153 = arith.constant 1 : index
      %c5 = arith.constant 5 : index
      %c0_154 = arith.constant 0 : index
      %c0_155 = arith.constant 0 : index
      %228 = vector.load %arg3[%c1_153, %c5, %c0_154, %c0_155] : memref<2x8x8x32xf32, #tpu.memory_space<vmem>>, vector<1x1x8x32xf32>
      %229 = vector.shape_cast %228 : vector<1x1x8x32xf32> to vector<8x32xf32>
      %230 = vector.extract_strided_slice %arg20 {offsets = [5, 0], sizes = [1, 32], strides = [1, 1]} : vector<8x32xf32> to vector<1x32xf32>
      %231 = vector.broadcast %230 : vector<1x32xf32> to vector<8x32xf32>
      %232 = arith.mulf %229, %231 : vector<8x32xf32>
      %233 = arith.addf %227, %232 : vector<8x32xf32>
      %c1_156 = arith.constant 1 : index
      %c5_157 = arith.constant 5 : index
      %c0_158 = arith.constant 0 : index
      %c0_159 = arith.constant 0 : index
      %234 = vector.load %arg4[%c1_156, %c5_157, %c0_158, %c0_159] : memref<2x8x8x32xf32, #tpu.memory_space<vmem>>, vector<1x1x8x32xf32>
      %235 = vector.shape_cast %234 : vector<1x1x8x32xf32> to vector<8x32xf32>
      %236 = vector.extract_strided_slice %arg21 {offsets = [5, 0], sizes = [1, 32], strides = [1, 1]} : vector<8x32xf32> to vector<1x32xf32>
      %237 = vector.broadcast %236 : vector<1x32xf32> to vector<8x32xf32>
      %238 = arith.mulf %235, %237 : vector<8x32xf32>
      %239 = arith.subf %233, %238 : vector<8x32xf32>
      %c1_160 = arith.constant 1 : index
      %c6 = arith.constant 6 : index
      %c0_161 = arith.constant 0 : index
      %c0_162 = arith.constant 0 : index
      %240 = vector.load %arg3[%c1_160, %c6, %c0_161, %c0_162] : memref<2x8x8x32xf32, #tpu.memory_space<vmem>>, vector<1x1x8x32xf32>
      %241 = vector.shape_cast %240 : vector<1x1x8x32xf32> to vector<8x32xf32>
      %242 = vector.extract_strided_slice %arg20 {offsets = [6, 0], sizes = [1, 32], strides = [1, 1]} : vector<8x32xf32> to vector<1x32xf32>
      %243 = vector.broadcast %242 : vector<1x32xf32> to vector<8x32xf32>
      %244 = arith.mulf %241, %243 : vector<8x32xf32>
      %245 = arith.addf %239, %244 : vector<8x32xf32>
      %c1_163 = arith.constant 1 : index
      %c6_164 = arith.constant 6 : index
      %c0_165 = arith.constant 0 : index
      %c0_166 = arith.constant 0 : index
      %246 = vector.load %arg4[%c1_163, %c6_164, %c0_165, %c0_166] : memref<2x8x8x32xf32, #tpu.memory_space<vmem>>, vector<1x1x8x32xf32>
      %247 = vector.shape_cast %246 : vector<1x1x8x32xf32> to vector<8x32xf32>
      %248 = vector.extract_strided_slice %arg21 {offsets = [6, 0], sizes = [1, 32], strides = [1, 1]} : vector<8x32xf32> to vector<1x32xf32>
      %249 = vector.broadcast %248 : vector<1x32xf32> to vector<8x32xf32>
      %250 = arith.mulf %247, %249 : vector<8x32xf32>
      %251 = arith.subf %245, %250 : vector<8x32xf32>
      %c1_167 = arith.constant 1 : index
      %c7 = arith.constant 7 : index
      %c0_168 = arith.constant 0 : index
      %c0_169 = arith.constant 0 : index
      %252 = vector.load %arg3[%c1_167, %c7, %c0_168, %c0_169] : memref<2x8x8x32xf32, #tpu.memory_space<vmem>>, vector<1x1x8x32xf32>
      %253 = vector.shape_cast %252 : vector<1x1x8x32xf32> to vector<8x32xf32>
      %254 = vector.extract_strided_slice %arg20 {offsets = [7, 0], sizes = [1, 32], strides = [1, 1]} : vector<8x32xf32> to vector<1x32xf32>
      %255 = vector.broadcast %254 : vector<1x32xf32> to vector<8x32xf32>
      %256 = arith.mulf %253, %255 : vector<8x32xf32>
      %257 = arith.addf %251, %256 : vector<8x32xf32>
      %c1_170 = arith.constant 1 : index
      %c7_171 = arith.constant 7 : index
      %c0_172 = arith.constant 0 : index
      %c0_173 = arith.constant 0 : index
      %258 = vector.load %arg4[%c1_170, %c7_171, %c0_172, %c0_173] : memref<2x8x8x32xf32, #tpu.memory_space<vmem>>, vector<1x1x8x32xf32>
      %259 = vector.shape_cast %258 : vector<1x1x8x32xf32> to vector<8x32xf32>
      %260 = vector.extract_strided_slice %arg21 {offsets = [7, 0], sizes = [1, 32], strides = [1, 1]} : vector<8x32xf32> to vector<1x32xf32>
      %261 = vector.broadcast %260 : vector<1x32xf32> to vector<8x32xf32>
      %262 = arith.mulf %259, %261 : vector<8x32xf32>
      %263 = arith.subf %257, %262 : vector<8x32xf32>
      %cst_174 = arith.constant 0.000000e+00 : f32
      %264 = vector.broadcast %cst_174 : f32 to vector<8x32xf32>
      %265 = tpu.concatenate %264, %166 in 0 : vector<8x32xf32>, vector<8x32xf32> -> vector<16x32xf32>
      %266 = vector.broadcast %82 : vector<1x32xf32> to vector<8x32xf32>
      %267 = arith.mulf %166, %266 : vector<8x32xf32>
      %268 = arith.addf %263, %267 : vector<8x32xf32>
      %269 = vector.extract_strided_slice %80 {offsets = [0, 0], sizes = [1, 32], strides = [1, 1]} : vector<8x32xf32> to vector<1x32xf32>
      %270 = vector.extract_strided_slice %265 {offsets = [8, 0], sizes = [8, 32], strides = [1, 1]} : vector<16x32xf32> to vector<8x32xf32>
      %271 = vector.broadcast %269 : vector<1x32xf32> to vector<8x32xf32>
      %272 = arith.mulf %271, %270 : vector<8x32xf32>
      %273 = arith.addf %268, %272 : vector<8x32xf32>
      %274 = vector.extract_strided_slice %80 {offsets = [1, 0], sizes = [1, 32], strides = [1, 1]} : vector<8x32xf32> to vector<1x32xf32>
      %275 = vector.extract_strided_slice %265 {offsets = [7, 0], sizes = [8, 32], strides = [1, 1]} : vector<16x32xf32> to vector<8x32xf32>
      %276 = vector.broadcast %274 : vector<1x32xf32> to vector<8x32xf32>
      %277 = arith.mulf %276, %275 : vector<8x32xf32>
      %278 = arith.addf %273, %277 : vector<8x32xf32>
      %279 = vector.extract_strided_slice %80 {offsets = [2, 0], sizes = [1, 32], strides = [1, 1]} : vector<8x32xf32> to vector<1x32xf32>
      %280 = vector.extract_strided_slice %265 {offsets = [6, 0], sizes = [8, 32], strides = [1, 1]} : vector<16x32xf32> to vector<8x32xf32>
      %281 = vector.broadcast %279 : vector<1x32xf32> to vector<8x32xf32>
      %282 = arith.mulf %281, %280 : vector<8x32xf32>
      %283 = arith.addf %278, %282 : vector<8x32xf32>
      %284 = vector.extract_strided_slice %80 {offsets = [3, 0], sizes = [1, 32], strides = [1, 1]} : vector<8x32xf32> to vector<1x32xf32>
      %285 = vector.extract_strided_slice %265 {offsets = [5, 0], sizes = [8, 32], strides = [1, 1]} : vector<16x32xf32> to vector<8x32xf32>
      %286 = vector.broadcast %284 : vector<1x32xf32> to vector<8x32xf32>
      %287 = arith.mulf %286, %285 : vector<8x32xf32>
      %288 = arith.addf %283, %287 : vector<8x32xf32>
      %289 = vector.extract_strided_slice %80 {offsets = [4, 0], sizes = [1, 32], strides = [1, 1]} : vector<8x32xf32> to vector<1x32xf32>
      %290 = vector.extract_strided_slice %265 {offsets = [4, 0], sizes = [8, 32], strides = [1, 1]} : vector<16x32xf32> to vector<8x32xf32>
      %291 = vector.broadcast %289 : vector<1x32xf32> to vector<8x32xf32>
      %292 = arith.mulf %291, %290 : vector<8x32xf32>
      %293 = arith.addf %288, %292 : vector<8x32xf32>
      %294 = vector.extract_strided_slice %80 {offsets = [5, 0], sizes = [1, 32], strides = [1, 1]} : vector<8x32xf32> to vector<1x32xf32>
      %295 = vector.extract_strided_slice %265 {offsets = [3, 0], sizes = [8, 32], strides = [1, 1]} : vector<16x32xf32> to vector<8x32xf32>
      %296 = vector.broadcast %294 : vector<1x32xf32> to vector<8x32xf32>
      %297 = arith.mulf %296, %295 : vector<8x32xf32>
      %298 = arith.addf %293, %297 : vector<8x32xf32>
      %299 = vector.extract_strided_slice %80 {offsets = [6, 0], sizes = [1, 32], strides = [1, 1]} : vector<8x32xf32> to vector<1x32xf32>
      %300 = vector.extract_strided_slice %265 {offsets = [2, 0], sizes = [8, 32], strides = [1, 1]} : vector<16x32xf32> to vector<8x32xf32>
      %301 = vector.broadcast %299 : vector<1x32xf32> to vector<8x32xf32>
      %302 = arith.mulf %301, %300 : vector<8x32xf32>
      %303 = arith.addf %298, %302 : vector<8x32xf32>
      %304 = vector.extract_strided_slice %80 {offsets = [7, 0], sizes = [1, 32], strides = [1, 1]} : vector<8x32xf32> to vector<1x32xf32>
      %305 = vector.extract_strided_slice %265 {offsets = [1, 0], sizes = [8, 32], strides = [1, 1]} : vector<16x32xf32> to vector<8x32xf32>
      %306 = vector.broadcast %304 : vector<1x32xf32> to vector<8x32xf32>
      %307 = arith.mulf %306, %305 : vector<8x32xf32>
      %308 = arith.addf %303, %307 : vector<8x32xf32>
      %309 = arith.index_cast %164 : i32 to index
      %c0_175 = arith.constant 0 : index
      %310 = vector.load %arg18[%309, %c0_175] : memref<16x32xf32, #tpu.memory_space<vmem>>, vector<8x32xf32>
      tpu.vector_store %arg18[%309, %c0_175], %308 {strides = array<i32>} : memref<16x32xf32, #tpu.memory_space<vmem>>, vector<8x32xf32>,
      %cst_176 = arith.constant 0.000000e+00 : f32
      %311 = vector.broadcast %cst_176 : f32 to vector<8x32xf32>
      %cst_177 = arith.constant 0.000000e+00 : f32
      %312 = vector.broadcast %cst_177 : f32 to vector<8x32xf32>
      %313 = vector.extract_strided_slice %166 {offsets = [0, 0], sizes = [1, 32], strides = [1, 1]} : vector<8x32xf32> to vector<1x32xf32>
      %c1_178 = arith.constant 1 : index
      %c0_179 = arith.constant 0 : index
      %c0_180 = arith.constant 0 : index
      %c0_181 = arith.constant 0 : index
      %314 = vector.load %arg5[%c1_178, %c0_179, %c0_180, %c0_181] : memref<2x8x8x32xf32, #tpu.memory_space<vmem>>, vector<1x1x8x32xf32>
      %315 = vector.shape_cast %314 : vector<1x1x8x32xf32> to vector<8x32xf32>
      %316 = vector.broadcast %313 : vector<1x32xf32> to vector<8x32xf32>
      %317 = arith.mulf %315, %316 : vector<8x32xf32>
      %318 = arith.addf %311, %317 : vector<8x32xf32>
      %c1_182 = arith.constant 1 : index
      %c0_183 = arith.constant 0 : index
      %c0_184 = arith.constant 0 : index
      %c0_185 = arith.constant 0 : index
      %319 = vector.load %arg6[%c1_182, %c0_183, %c0_184, %c0_185] : memref<2x8x8x32xf32, #tpu.memory_space<vmem>>, vector<1x1x8x32xf32>
      %320 = vector.shape_cast %319 : vector<1x1x8x32xf32> to vector<8x32xf32>
      %321 = vector.broadcast %313 : vector<1x32xf32> to vector<8x32xf32>
      %322 = arith.mulf %320, %321 : vector<8x32xf32>
      %323 = arith.addf %312, %322 : vector<8x32xf32>
      %324 = vector.extract_strided_slice %166 {offsets = [1, 0], sizes = [1, 32], strides = [1, 1]} : vector<8x32xf32> to vector<1x32xf32>
      %c1_186 = arith.constant 1 : index
      %c1_187 = arith.constant 1 : index
      %c0_188 = arith.constant 0 : index
      %c0_189 = arith.constant 0 : index
      %325 = vector.load %arg5[%c1_186, %c1_187, %c0_188, %c0_189] : memref<2x8x8x32xf32, #tpu.memory_space<vmem>>, vector<1x1x8x32xf32>
      %326 = vector.shape_cast %325 : vector<1x1x8x32xf32> to vector<8x32xf32>
      %327 = vector.broadcast %324 : vector<1x32xf32> to vector<8x32xf32>
      %328 = arith.mulf %326, %327 : vector<8x32xf32>
      %329 = arith.addf %318, %328 : vector<8x32xf32>
      %c1_190 = arith.constant 1 : index
      %c1_191 = arith.constant 1 : index
      %c0_192 = arith.constant 0 : index
      %c0_193 = arith.constant 0 : index
      %330 = vector.load %arg6[%c1_190, %c1_191, %c0_192, %c0_193] : memref<2x8x8x32xf32, #tpu.memory_space<vmem>>, vector<1x1x8x32xf32>
      %331 = vector.shape_cast %330 : vector<1x1x8x32xf32> to vector<8x32xf32>
      %332 = vector.broadcast %324 : vector<1x32xf32> to vector<8x32xf32>
      %333 = arith.mulf %331, %332 : vector<8x32xf32>
      %334 = arith.addf %323, %333 : vector<8x32xf32>
      %335 = vector.extract_strided_slice %166 {offsets = [2, 0], sizes = [1, 32], strides = [1, 1]} : vector<8x32xf32> to vector<1x32xf32>
      %c1_194 = arith.constant 1 : index
      %c2_195 = arith.constant 2 : index
      %c0_196 = arith.constant 0 : index
      %c0_197 = arith.constant 0 : index
      %336 = vector.load %arg5[%c1_194, %c2_195, %c0_196, %c0_197] : memref<2x8x8x32xf32, #tpu.memory_space<vmem>>, vector<1x1x8x32xf32>
      %337 = vector.shape_cast %336 : vector<1x1x8x32xf32> to vector<8x32xf32>
      %338 = vector.broadcast %335 : vector<1x32xf32> to vector<8x32xf32>
      %339 = arith.mulf %337, %338 : vector<8x32xf32>
      %340 = arith.addf %329, %339 : vector<8x32xf32>
      %c1_198 = arith.constant 1 : index
      %c2_199 = arith.constant 2 : index
      %c0_200 = arith.constant 0 : index
      %c0_201 = arith.constant 0 : index
      %341 = vector.load %arg6[%c1_198, %c2_199, %c0_200, %c0_201] : memref<2x8x8x32xf32, #tpu.memory_space<vmem>>, vector<1x1x8x32xf32>
      %342 = vector.shape_cast %341 : vector<1x1x8x32xf32> to vector<8x32xf32>
      %343 = vector.broadcast %335 : vector<1x32xf32> to vector<8x32xf32>
      %344 = arith.mulf %342, %343 : vector<8x32xf32>
      %345 = arith.addf %334, %344 : vector<8x32xf32>
      %346 = vector.extract_strided_slice %166 {offsets = [3, 0], sizes = [1, 32], strides = [1, 1]} : vector<8x32xf32> to vector<1x32xf32>
      %c1_202 = arith.constant 1 : index
      %c3_203 = arith.constant 3 : index
      %c0_204 = arith.constant 0 : index
      %c0_205 = arith.constant 0 : index
      %347 = vector.load %arg5[%c1_202, %c3_203, %c0_204, %c0_205] : memref<2x8x8x32xf32, #tpu.memory_space<vmem>>, vector<1x1x8x32xf32>
      %348 = vector.shape_cast %347 : vector<1x1x8x32xf32> to vector<8x32xf32>
      %349 = vector.broadcast %346 : vector<1x32xf32> to vector<8x32xf32>
      %350 = arith.mulf %348, %349 : vector<8x32xf32>
      %351 = arith.addf %340, %350 : vector<8x32xf32>
      %c1_206 = arith.constant 1 : index
      %c3_207 = arith.constant 3 : index
      %c0_208 = arith.constant 0 : index
      %c0_209 = arith.constant 0 : index
      %352 = vector.load %arg6[%c1_206, %c3_207, %c0_208, %c0_209] : memref<2x8x8x32xf32, #tpu.memory_space<vmem>>, vector<1x1x8x32xf32>
      %353 = vector.shape_cast %352 : vector<1x1x8x32xf32> to vector<8x32xf32>
      %354 = vector.broadcast %346 : vector<1x32xf32> to vector<8x32xf32>
      %355 = arith.mulf %353, %354 : vector<8x32xf32>
      %356 = arith.addf %345, %355 : vector<8x32xf32>
      %357 = vector.extract_strided_slice %166 {offsets = [4, 0], sizes = [1, 32], strides = [1, 1]} : vector<8x32xf32> to vector<1x32xf32>
      %c1_210 = arith.constant 1 : index
      %c4_211 = arith.constant 4 : index
      %c0_212 = arith.constant 0 : index
      %c0_213 = arith.constant 0 : index
      %358 = vector.load %arg5[%c1_210, %c4_211, %c0_212, %c0_213] : memref<2x8x8x32xf32, #tpu.memory_space<vmem>>, vector<1x1x8x32xf32>
      %359 = vector.shape_cast %358 : vector<1x1x8x32xf32> to vector<8x32xf32>
      %360 = vector.broadcast %357 : vector<1x32xf32> to vector<8x32xf32>
      %361 = arith.mulf %359, %360 : vector<8x32xf32>
      %362 = arith.addf %351, %361 : vector<8x32xf32>
      %c1_214 = arith.constant 1 : index
      %c4_215 = arith.constant 4 : index
      %c0_216 = arith.constant 0 : index
      %c0_217 = arith.constant 0 : index
      %363 = vector.load %arg6[%c1_214, %c4_215, %c0_216, %c0_217] : memref<2x8x8x32xf32, #tpu.memory_space<vmem>>, vector<1x1x8x32xf32>
      %364 = vector.shape_cast %363 : vector<1x1x8x32xf32> to vector<8x32xf32>
      %365 = vector.broadcast %357 : vector<1x32xf32> to vector<8x32xf32>
      %366 = arith.mulf %364, %365 : vector<8x32xf32>
      %367 = arith.addf %356, %366 : vector<8x32xf32>
      %368 = vector.extract_strided_slice %166 {offsets = [5, 0], sizes = [1, 32], strides = [1, 1]} : vector<8x32xf32> to vector<1x32xf32>
      %c1_218 = arith.constant 1 : index
      %c5_219 = arith.constant 5 : index
      %c0_220 = arith.constant 0 : index
      %c0_221 = arith.constant 0 : index
      %369 = vector.load %arg5[%c1_218, %c5_219, %c0_220, %c0_221] : memref<2x8x8x32xf32, #tpu.memory_space<vmem>>, vector<1x1x8x32xf32>
      %370 = vector.shape_cast %369 : vector<1x1x8x32xf32> to vector<8x32xf32>
      %371 = vector.broadcast %368 : vector<1x32xf32> to vector<8x32xf32>
      %372 = arith.mulf %370, %371 : vector<8x32xf32>
      %373 = arith.addf %362, %372 : vector<8x32xf32>
      %c1_222 = arith.constant 1 : index
      %c5_223 = arith.constant 5 : index
      %c0_224 = arith.constant 0 : index
      %c0_225 = arith.constant 0 : index
      %374 = vector.load %arg6[%c1_222, %c5_223, %c0_224, %c0_225] : memref<2x8x8x32xf32, #tpu.memory_space<vmem>>, vector<1x1x8x32xf32>
      %375 = vector.shape_cast %374 : vector<1x1x8x32xf32> to vector<8x32xf32>
      %376 = vector.broadcast %368 : vector<1x32xf32> to vector<8x32xf32>
      %377 = arith.mulf %375, %376 : vector<8x32xf32>
      %378 = arith.addf %367, %377 : vector<8x32xf32>
      %379 = vector.extract_strided_slice %166 {offsets = [6, 0], sizes = [1, 32], strides = [1, 1]} : vector<8x32xf32> to vector<1x32xf32>
      %c1_226 = arith.constant 1 : index
      %c6_227 = arith.constant 6 : index
      %c0_228 = arith.constant 0 : index
      %c0_229 = arith.constant 0 : index
      %380 = vector.load %arg5[%c1_226, %c6_227, %c0_228, %c0_229] : memref<2x8x8x32xf32, #tpu.memory_space<vmem>>, vector<1x1x8x32xf32>
      %381 = vector.shape_cast %380 : vector<1x1x8x32xf32> to vector<8x32xf32>
      %382 = vector.broadcast %379 : vector<1x32xf32> to vector<8x32xf32>
      %383 = arith.mulf %381, %382 : vector<8x32xf32>
      %384 = arith.addf %373, %383 : vector<8x32xf32>
      %c1_230 = arith.constant 1 : index
      %c6_231 = arith.constant 6 : index
      %c0_232 = arith.constant 0 : index
      %c0_233 = arith.constant 0 : index
      %385 = vector.load %arg6[%c1_230, %c6_231, %c0_232, %c0_233] : memref<2x8x8x32xf32, #tpu.memory_space<vmem>>, vector<1x1x8x32xf32>
      %386 = vector.shape_cast %385 : vector<1x1x8x32xf32> to vector<8x32xf32>
      %387 = vector.broadcast %379 : vector<1x32xf32> to vector<8x32xf32>
      %388 = arith.mulf %386, %387 : vector<8x32xf32>
      %389 = arith.addf %378, %388 : vector<8x32xf32>
      %390 = vector.extract_strided_slice %166 {offsets = [7, 0], sizes = [1, 32], strides = [1, 1]} : vector<8x32xf32> to vector<1x32xf32>
      %c1_234 = arith.constant 1 : index
      %c7_235 = arith.constant 7 : index
      %c0_236 = arith.constant 0 : index
      %c0_237 = arith.constant 0 : index
      %391 = vector.load %arg5[%c1_234, %c7_235, %c0_236, %c0_237] : memref<2x8x8x32xf32, #tpu.memory_space<vmem>>, vector<1x1x8x32xf32>
      %392 = vector.shape_cast %391 : vector<1x1x8x32xf32> to vector<8x32xf32>
      %393 = vector.broadcast %390 : vector<1x32xf32> to vector<8x32xf32>
      %394 = arith.mulf %392, %393 : vector<8x32xf32>
      %395 = arith.addf %384, %394 : vector<8x32xf32>
      %c1_238 = arith.constant 1 : index
      %c7_239 = arith.constant 7 : index
      %c0_240 = arith.constant 0 : index
      %c0_241 = arith.constant 0 : index
      %396 = vector.load %arg6[%c1_238, %c7_239, %c0_240, %c0_241] : memref<2x8x8x32xf32, #tpu.memory_space<vmem>>, vector<1x1x8x32xf32>
      %397 = vector.shape_cast %396 : vector<1x1x8x32xf32> to vector<8x32xf32>
      %398 = vector.broadcast %390 : vector<1x32xf32> to vector<8x32xf32>
      %399 = arith.mulf %397, %398 : vector<8x32xf32>
      %400 = arith.addf %389, %399 : vector<8x32xf32>
      %401 = arith.mulf %84, %arg20 : vector<8x32xf32>
      %402 = arith.mulf %86, %arg21 : vector<8x32xf32>
      %403 = arith.subf %401, %402 : vector<8x32xf32>
      %404 = arith.addf %403, %395 : vector<8x32xf32>
      %405 = arith.mulf %86, %arg20 : vector<8x32xf32>
      %406 = arith.mulf %84, %arg21 : vector<8x32xf32>
      %407 = arith.addf %405, %406 : vector<8x32xf32>
      %408 = arith.addf %407, %400 : vector<8x32xf32>
      scf.yield %404, %408 : vector<8x32xf32>, vector<8x32xf32>
    }
    %c2_i32_70 = arith.constant 2 : i32
    %c0_71 = arith.constant 0 : index
    %c0_72 = arith.constant 0 : index
    %91 = vector.load %arg17[%c0_71, %c0_72] : memref<16x32xf32, #tpu.memory_space<vmem>>, vector<16x32xf32>
    %c0_73 = arith.constant 0 : index
    %c0_74 = arith.constant 0 : index
    %92 = vector.load %arg18[%c0_73, %c0_74] : memref<16x32xf32, #tpu.memory_space<vmem>>, vector<16x32xf32>
    %93 = arith.mulf %92, %92 : vector<16x32xf32>
    %94 = arith.mulf %92, %93 : vector<16x32xf32>
    %cst_75 = arith.constant 4.471500e-02 : f32
    %95 = vector.broadcast %cst_75 : f32 to vector<16x32xf32>
    %96 = arith.mulf %95, %94 : vector<16x32xf32>
    %97 = arith.addf %92, %96 : vector<16x32xf32>
    %cst_76 = arith.constant 0.797884583 : f32
    %98 = vector.broadcast %cst_76 : f32 to vector<16x32xf32>
    %99 = arith.mulf %98, %97 : vector<16x32xf32>
    %100 = math.tanh %99 : vector<16x32xf32>
    %cst_77 = arith.constant 1.000000e+00 : f32
    %101 = vector.broadcast %cst_77 : f32 to vector<16x32xf32>
    %102 = arith.addf %101, %100 : vector<16x32xf32>
    %cst_78 = arith.constant 5.000000e-01 : f32
    %103 = vector.broadcast %cst_78 : f32 to vector<16x32xf32>
    %104 = arith.mulf %103, %102 : vector<16x32xf32>
    %105 = arith.mulf %92, %104 : vector<16x32xf32>
    %106 = arith.truncf %105 : vector<16x32xf32> to vector<16x32xbf16>
    %c1_79 = arith.constant 1 : index
    %c0_80 = arith.constant 0 : index
    %c0_81 = arith.constant 0 : index
    %107 = vector.load %arg10[%c1_79, %c0_80, %c0_81] : memref<2x32x32xbf16, #tpu.memory_space<vmem>>, vector<1x32x32xbf16>
    %108 = vector.shape_cast %107 : vector<1x32x32xbf16> to vector<32x32xbf16>
    %cst_82 = arith.constant dense<0.000000e+00> : vector<16x32xf32>
    %109 = tpu.matmul %106, %108, %cst_82 {dimension_numbers = #tpu.dot_dimension_numbers<[1], [0], [0], [1], [0, 0, 1, 1], [], []>} : vector<16x32xbf16>, vector<32x32xbf16>, vector<16x32xf32> -> vector<16x32xf32>
    %c1_83 = arith.constant 1 : index
    %c0_84 = arith.constant 0 : index
    %c0_85 = arith.constant 0 : index
    %110 = vector.load %arg12[%c1_83, %c0_84, %c0_85] : memref<2x1x32xf32, #tpu.memory_space<vmem>>, vector<1x1x32xf32>
    %111 = vector.shape_cast %110 : vector<1x1x32xf32> to vector<1x32xf32>
    %112 = vector.broadcast %111 : vector<1x32xf32> to vector<16x32xf32>
    %113 = arith.addf %109, %112 : vector<16x32xf32>
    %c1_86 = arith.constant 1 : index
    %c0_87 = arith.constant 0 : index
    %c0_88 = arith.constant 0 : index
    %114 = vector.load %arg11[%c1_86, %c0_87, %c0_88] : memref<2x32x32xbf16, #tpu.memory_space<vmem>>, vector<1x32x32xbf16>
    %115 = vector.shape_cast %114 : vector<1x32x32xbf16> to vector<32x32xbf16>
    %cst_89 = arith.constant dense<0.000000e+00> : vector<16x32xf32>
    %116 = tpu.matmul %106, %115, %cst_89 {dimension_numbers = #tpu.dot_dimension_numbers<[1], [0], [0], [1], [0, 0, 1, 1], [], []>} : vector<16x32xbf16>, vector<32x32xbf16>, vector<16x32xf32> -> vector<16x32xf32>
    %c1_90 = arith.constant 1 : index
    %c0_91 = arith.constant 0 : index
    %c0_92 = arith.constant 0 : index
    %117 = vector.load %arg13[%c1_90, %c0_91, %c0_92] : memref<2x1x32xf32, #tpu.memory_space<vmem>>, vector<1x1x32xf32>
    %118 = vector.shape_cast %117 : vector<1x1x32xf32> to vector<1x32xf32>
    %119 = vector.broadcast %118 : vector<1x32xf32> to vector<16x32xf32>
    %120 = arith.addf %116, %119 : vector<16x32xf32>
    %121 = arith.negf %120 : vector<16x32xf32>
    %122 = math.exp %121 : vector<16x32xf32>
    %cst_93 = arith.constant 1.000000e+00 : f32
    %123 = vector.broadcast %cst_93 : f32 to vector<16x32xf32>
    %124 = arith.addf %123, %122 : vector<16x32xf32>
    %125 = arith.divf %123, %124 : vector<16x32xf32>
    %126 = arith.mulf %113, %125 : vector<16x32xf32>
    %127 = arith.addf %126, %91 : vector<16x32xf32>
    %cst_94 = arith.constant dense<0.000000e+00> : vector<16xf32>
    %128 = vector.multi_reduction <add>, %127, %cst_94 [1] : vector<16x32xf32> to vector<16xf32>
    %129 = vector.shape_cast %128 : vector<16xf32> to vector<16x1xf32>
    %cst_95 = arith.constant 3.200000e+01 : f32
    %130 = vector.broadcast %cst_95 : f32 to vector<16x1xf32>
    %131 = arith.divf %129, %130 : vector<16x1xf32>
    %132 = arith.mulf %127, %127 : vector<16x32xf32>
    %cst_96 = arith.constant dense<0.000000e+00> : vector<16xf32>
    %133 = vector.multi_reduction <add>, %132, %cst_96 [1] : vector<16x32xf32> to vector<16xf32>
    %134 = vector.shape_cast %133 : vector<16xf32> to vector<16x1xf32>
    %cst_97 = arith.constant 3.200000e+01 : f32
    %135 = vector.broadcast %cst_97 : f32 to vector<16x1xf32>
    %136 = arith.divf %134, %135 : vector<16x1xf32>
    %137 = vector.broadcast %131 : vector<16x1xf32> to vector<16x32xf32>
    %138 = arith.subf %127, %137 : vector<16x32xf32>
    %139 = arith.mulf %131, %131 : vector<16x1xf32>
    %140 = arith.subf %136, %139 : vector<16x1xf32>
    %cst_98 = arith.constant 9.99999974E-6 : f32
    %141 = vector.broadcast %cst_98 : f32 to vector<16x1xf32>
    %142 = arith.addf %140, %141 : vector<16x1xf32>
    %143 = math.rsqrt %142 : vector<16x1xf32>
    %144 = vector.broadcast %143 : vector<16x1xf32> to vector<16x32xf32>
    %145 = arith.mulf %138, %144 : vector<16x32xf32>
    %c1_99 = arith.constant 1 : index
    %c0_100 = arith.constant 0 : index
    %c0_101 = arith.constant 0 : index
    %146 = vector.load %arg14[%c1_99, %c0_100, %c0_101] : memref<2x1x32xf32, #tpu.memory_space<vmem>>, vector<1x1x32xf32>
    %147 = vector.shape_cast %146 : vector<1x1x32xf32> to vector<1x32xf32>
    %148 = vector.broadcast %147 : vector<1x32xf32> to vector<16x32xf32>
    %149 = arith.mulf %145, %148 : vector<16x32xf32>
    %c1_102 = arith.constant 1 : index
    %c0_103 = arith.constant 0 : index
    %c0_104 = arith.constant 0 : index
    %150 = vector.load %arg15[%c1_102, %c0_103, %c0_104] : memref<2x1x32xf32, #tpu.memory_space<vmem>>, vector<1x1x32xf32>
    %151 = vector.shape_cast %150 : vector<1x1x32xf32> to vector<1x32xf32>
    %152 = vector.broadcast %151 : vector<1x32xf32> to vector<16x32xf32>
    %153 = arith.addf %149, %152 : vector<16x32xf32>
    %c0_105 = arith.constant 0 : index
    %c0_106 = arith.constant 0 : index
    %154 = vector.load %arg17[%c0_105, %c0_106] : memref<16x32xf32, #tpu.memory_space<vmem>>, vector<16x32xf32>
    tpu.vector_store %arg17[%c0_105, %c0_106], %153 {strides = array<i32>} : memref<16x32xf32, #tpu.memory_space<vmem>>, vector<16x32xf32>,
    %c0_107 = arith.constant 0 : index
    %c0_108 = arith.constant 0 : index
    %155 = vector.load %arg17[%c0_107, %c0_108] : memref<16x32xf32, #tpu.memory_space<vmem>>, vector<16x32xf32>
    %cst_109 = arith.constant dense<0.000000e+00> : vector<32xf32>
    %156 = vector.multi_reduction <add>, %155, %cst_109 [0] : vector<16x32xf32> to vector<32xf32>
    %157 = vector.shape_cast %156 : vector<32xf32> to vector<1x32xf32>
    %cst_110 = arith.constant 1.600000e+01 : f32
    %158 = vector.broadcast %cst_110 : f32 to vector<1x32xf32>
    %159 = arith.divf %157, %158 : vector<1x32xf32>
    %c0_111 = arith.constant 0 : index
    %c0_112 = arith.constant 0 : index
    %c0_113 = arith.constant 0 : index
    %160 = vector.load %arg16[%c0_111, %c0_112, %c0_113] : memref<1x1x32xf32, #tpu.memory_space<vmem>>, vector<1x1x32xf32>
    %161 = vector.shape_cast %160 : vector<1x1x32xf32> to vector<1x32xf32>
    %162 = vector.shape_cast %159 : vector<1x32xf32> to vector<1x1x32xf32>
    tpu.vector_store %arg16[%c0_111, %c0_112, %c0_113], %162 {strides = array<i32>} : memref<1x1x32xf32, #tpu.memory_space<vmem>>, vector<1x1x32xf32>,
    return
  }
  func.func @transform_0(%arg0: i32) -> (i32, i32, i32) {
    %c0_i32 = arith.constant 0 : i32
    %c0_i32_0 = arith.constant 0 : i32
    %c0_i32_1 = arith.constant 0 : i32
    return %arg0, %c0_i32, %c0_i32_0 : i32, i32, i32
  }
  func.func @transform_1(%arg0: i32) -> (i32, i32, i32) {
    %c0_i32 = arith.constant 0 : i32
    %c0_i32_0 = arith.constant 0 : i32
    %c0_i32_1 = arith.constant 0 : i32
    %c0_i32_2 = arith.constant 0 : i32
    return %c0_i32, %c0_i32_0, %c0_i32_1 : i32, i32, i32
  }
  func.func @transform_2(%arg0: i32) -> (i32, i32, i32, i32) {
    %c0_i32 = arith.constant 0 : i32
    %c0_i32_0 = arith.constant 0 : i32
    %c0_i32_1 = arith.constant 0 : i32
    %c0_i32_2 = arith.constant 0 : i32
    %c0_i32_3 = arith.constant 0 : i32
    return %c0_i32, %c0_i32_0, %c0_i32_1, %c0_i32_2 : i32, i32, i32, i32
  }
  func.func @transform_3(%arg0: i32) -> (i32, i32, i32, i32) {
    %c0_i32 = arith.constant 0 : i32
    %c0_i32_0 = arith.constant 0 : i32
    %c0_i32_1 = arith.constant 0 : i32
    %c0_i32_2 = arith.constant 0 : i32
    %c0_i32_3 = arith.constant 0 : i32
    return %c0_i32, %c0_i32_0, %c0_i32_1, %c0_i32_2 : i32, i32, i32, i32
  }
  func.func @transform_4(%arg0: i32) -> (i32, i32, i32, i32) {
    %c0_i32 = arith.constant 0 : i32
    %c0_i32_0 = arith.constant 0 : i32
    %c0_i32_1 = arith.constant 0 : i32
    %c0_i32_2 = arith.constant 0 : i32
    %c0_i32_3 = arith.constant 0 : i32
    return %c0_i32, %c0_i32_0, %c0_i32_1, %c0_i32_2 : i32, i32, i32, i32
  }
  func.func @transform_5(%arg0: i32) -> (i32, i32, i32, i32) {
    %c0_i32 = arith.constant 0 : i32
    %c0_i32_0 = arith.constant 0 : i32
    %c0_i32_1 = arith.constant 0 : i32
    %c0_i32_2 = arith.constant 0 : i32
    %c0_i32_3 = arith.constant 0 : i32
    return %c0_i32, %c0_i32_0, %c0_i32_1, %c0_i32_2 : i32, i32, i32, i32
  }
  func.func @transform_6(%arg0: i32) -> (i32, i32, i32) {
    %c0_i32 = arith.constant 0 : i32
    %c0_i32_0 = arith.constant 0 : i32
    %c0_i32_1 = arith.constant 0 : i32
    %c0_i32_2 = arith.constant 0 : i32
    return %c0_i32, %c0_i32_0, %c0_i32_1 : i32, i32, i32
  }
  func.func @transform_7(%arg0: i32) -> (i32, i32, i32) {
    %c0_i32 = arith.constant 0 : i32
    %c0_i32_0 = arith.constant 0 : i32
    %c0_i32_1 = arith.constant 0 : i32
    %c0_i32_2 = arith.constant 0 : i32
    return %c0_i32, %c0_i32_0, %c0_i32_1 : i32, i32, i32
  }
  func.func @transform_8(%arg0: i32) -> (i32, i32, i32) {
    %c0_i32 = arith.constant 0 : i32
    %c0_i32_0 = arith.constant 0 : i32
    %c0_i32_1 = arith.constant 0 : i32
    %c0_i32_2 = arith.constant 0 : i32
    return %c0_i32, %c0_i32_0, %c0_i32_1 : i32, i32, i32
  }
  func.func @transform_9(%arg0: i32) -> (i32, i32, i32) {
    %c0_i32 = arith.constant 0 : i32
    %c0_i32_0 = arith.constant 0 : i32
    %c0_i32_1 = arith.constant 0 : i32
    %c0_i32_2 = arith.constant 0 : i32
    return %c0_i32, %c0_i32_0, %c0_i32_1 : i32, i32, i32
  }
  func.func @transform_10(%arg0: i32) -> (i32, i32, i32) {
    %c0_i32 = arith.constant 0 : i32
    %c0_i32_0 = arith.constant 0 : i32
    %c0_i32_1 = arith.constant 0 : i32
    %c0_i32_2 = arith.constant 0 : i32
    return %c0_i32, %c0_i32_0, %c0_i32_1 : i32, i32, i32
  }
  func.func @transform_11(%arg0: i32) -> (i32, i32, i32) {
    %c0_i32 = arith.constant 0 : i32
    %c0_i32_0 = arith.constant 0 : i32
    %c0_i32_1 = arith.constant 0 : i32
    %c0_i32_2 = arith.constant 0 : i32
    return %c0_i32, %c0_i32_0, %c0_i32_1 : i32, i32, i32
  }
  func.func @transform_12(%arg0: i32) -> (i32, i32, i32) {
    %c0_i32 = arith.constant 0 : i32
    %c0_i32_0 = arith.constant 0 : i32
    %c0_i32_1 = arith.constant 0 : i32
    %c0_i32_2 = arith.constant 0 : i32
    return %c0_i32, %c0_i32_0, %c0_i32_1 : i32, i32, i32
  }
  func.func @transform_13(%arg0: i32) -> (i32, i32, i32) {
    %c0_i32 = arith.constant 0 : i32
    %c0_i32_0 = arith.constant 0 : i32
    %c0_i32_1 = arith.constant 0 : i32
    %c0_i32_2 = arith.constant 0 : i32
    return %c0_i32, %c0_i32_0, %c0_i32_1 : i32, i32, i32
  }
  func.func @transform_14(%arg0: i32) -> (i32, i32, i32) {
    %c0_i32 = arith.constant 0 : i32
    %c0_i32_0 = arith.constant 0 : i32
    %c0_i32_1 = arith.constant 0 : i32
    %c0_i32_2 = arith.constant 0 : i32
    return %c0_i32, %c0_i32_0, %c0_i32_1 : i32, i32, i32
  }
  func.func @transform_15(%arg0: i32) -> (i32, i32, i32) {
    %c0_i32 = arith.constant 0 : i32
    %c0_i32_0 = arith.constant 0 : i32
    %c0_i32_1 = arith.constant 0 : i32
    return %arg0, %c0_i32, %c0_i32_0 : i32, i32, i32
  }
}

</mosaic_0001>

<llo_original>
// kernel: custom-call
$region0: #{custom-call}
  %s0 = inlined_call_operand.vmem [shape: f32[2,6], index: 0, kind: output, shape index: {}]

// kernel: _lambda_.1
$region0: #{_lambda_.1}
  #allocation0 [shape = 'u32[]', space=smem, size = 0x4, offset = 0x4, fixed_abs, tag = 'smem constant byte address 0x4 - core index']
  #allocation1 [shape = 'u32[144,128]{1,0:T(1,128)}', space=vmem, size = 0x12000, scoped, tag = 'internal scratch']
  #allocation2 [shape = 'f32[16,32]{1,0:T(8,128)}', space=vmem, size = 0x2000, scoped, tag = 'scratch operand']
  #allocation3 [shape = 'f32[16,32]{1,0:T(8,128)}', space=vmem, size = 0x2000, scoped, tag = 'scratch operand']
  %s0 = inlined_call_operand.vmem [shape: f32[2,16,32], index: 0, kind: input, shape index: {}]
  %s1 = inlined_call_operand.vmem [shape: f32[2,8,32], index: 1, kind: input, shape index: {}]
  %s2 = inlined_call_operand.vmem [shape: f32[2,8,8,32], index: 2, kind: input, shape index: {}]
  %s3 = inlined_call_operand.vmem [shape: f32[2,8,8,32], index: 3, kind: input, shape index: {}]
  %s4 = inlined_call_operand.vmem [shape: f32[2,8,8,32], index: 4, kind: input, shape index: {}]
  %s5 = inlined_call_operand.vmem [shape: f32[2,8,8,32], index: 5, kind: input, shape index: {}]
  %s6 = inlined_call_operand.vmem [shape: f32[2,8,32], index: 6, kind: input, shape index: {}]
  %s7 = inlined_call_operand.vmem [shape: f32[2,8,32], index: 7, kind: input, shape index: {}]
  %s8 = inlined_call_operand.vmem [shape: f32[2,1,32], index: 8, kind: input, shape index: {}]
  %s9 = inlined_call_operand.vmem [shape: bf16[2,32,32], index: 9, kind: input, shape index: {}]
  %s10 = inlined_call_operand.vmem [shape: bf16[2,32,32], index: 10, kind: input, shape index: {}]
  %s11 = inlined_call_operand.vmem [shape: f32[2,1,32], index: 11, kind: input, shape index: {}, may-alias: {11,12,14}]
  %s12 = inlined_call_operand.vmem [shape: f32[2,1,32], index: 12, kind: input, shape index: {}, may-alias: {11,12,14}]
  %s13 = inlined_call_operand.vmem [shape: f32[2,1,32], index: 13, kind: input, shape index: {}]
  %s14 = inlined_call_operand.vmem [shape: f32[2,1,32], index: 14, kind: input, shape index: {}, may-alias: {11,12,14}]
  %s15 = inlined_call_operand.vmem [shape: f32[2,1,32], index: 15, kind: output, shape index: {}]
  %s16 = sld [smem:[#allocation0]]
  $region107: #{_lambda_.1} parent=0
    _
  %s18 = ssub.s32 1, %s16
  %s19 = scalar_select 0, %s18, %s16
  loop: start=0, step=1, limit=4
  $region2: #{_lambda_.1} parent=0 // loop_pre_header
    _
  $region3: #{_lambda_.1} parent=0 // loop_header
    %s21 = sphi 0, %s25
    %p22 = scmp.ge.s32.totalorder %s21, 4
    %s31 = sphi 0, %s33
    %s34 = sphi 0, %s31
    %s35 = sphi 0, %s34
    %s51 = sphi 0, %s35
    %s55 = sphi 0, %s55
    %s57 = sphi 0, %s55
    %s58 = sphi 0, %s57
    %s72 = sphi 0, %s58
    %s76 = sphi 0, %s76
    %s78 = sphi 0, %s76
    %s79 = sphi 0, %s78
    %s93 = sphi 0, %s79
    %s97 = sphi 0, %s97
    %s99 = sphi 0, %s97
    %s100 = sphi 0, %s99
    %s114 = sphi 0, %s100
    %s118 = sphi 0, %s118
    %s120 = sphi 0, %s118
    %s121 = sphi 0, %s120
    %s135 = sphi 0, %s121
    %s139 = sphi 0, %s139
    %s141 = sphi 0, %s139
    %s142 = sphi 0, %s141
    %s156 = sphi 0, %s142
    %s160 = sphi 0, %s160
    %s162 = sphi 0, %s160
    %s163 = sphi 0, %s162
    %s177 = sphi 0, %s163
    %s181 = sphi 0, %s181
    %s183 = sphi 0, %s181
    %s184 = sphi 0, %s183
    %s198 = sphi 0, %s184
    %s202 = sphi 0, %s202
    %s204 = sphi 0, %s202
    %s205 = sphi 0, %s204
    %s219 = sphi 0, %s205
    %s223 = sphi 0, %s223
    %s225 = sphi 0, %s223
    %s226 = sphi 0, %s225
    %s240 = sphi 0, %s226
    %s244 = sphi 0, %s244
    %s246 = sphi 0, %s244
    %s247 = sphi 0, %s246
    %s261 = sphi 0, %s247
    %s265 = sphi 0, %s265
    %s267 = sphi 0, %s265
    %s268 = sphi 0, %s267
    %s282 = sphi 0, %s268
    %s286 = sphi 0, %s286
    %s288 = sphi 0, %s286
    %s289 = sphi 0, %s288
    %s303 = sphi 0, %s289
    %s307 = sphi 0, %s307
    %s309 = sphi 0, %s307
    %s310 = sphi 0, %s309
    %s324 = sphi 0, %s310
    %s328 = sphi 0, %s328
    %s330 = sphi 0, %s328
    %s331 = sphi 0, %s330
    %s345 = sphi 0, %s331
    %s351 = sphi 0, %s353
    %s354 = sphi 0, %s351
    %s355 = sphi 0, %s354
    %s371 = sphi 0, %s355
  $region4: #{_lambda_.1} parent=0 // loop_header_branch
    %24 = sbr.rel (%p22) target = $region8
  $region5: #{_lambda_.1} parent=0 // loop_body
    %s26 = ssub.s32 %s21, 1
    %s27 = ssub.s32 %s21, 2
    %s28 = sadd.s32 %s21, 1
    %s29 = ssub.s32 %s21, %s28
    %p30 = scmp.eq.s32.totalorder %s29, 0
    %s32 = sadd.s32 %s31, 1
    %s33 = scalar_select %p30, %s31, %s32
    %p36 = pneg %p30
    %p37 = scmp.eq.s32.totalorder %s21, 1
    %p38 = por %p36, %p37
    %p39 = scmp.ne.s32.totalorder %s31, %s34
    %p40 = scmp.eq.s32.totalorder %s21, 0
    %p41 = por %p39, %p40
    %p42 = scmp.ne.s32.totalorder %s31, %s34
    %p43 = scmp.eq.s32.totalorder %s26, 1
    %p44 = por %p42, %p43
    %p45 = scmp.ne.s32.totalorder %s34, %s35
    %p46 = scmp.eq.s32.totalorder %s26, 0
    %p47 = por %p45, %p46
    %p48 = scmp.ne.s32.totalorder %s34, %s35
    %p49 = scmp.eq.s32.totalorder %s27, 1
    %p50 = por %p48, %p49
    %p52 = scmp.ne.s32.totalorder %s35, %s51
    %p53 = scmp.eq.s32.totalorder %s27, 0
    %p54 = por %p52, %p53
    %s56 = sadd.s32 %s55, 1
    %p59 = scmp.eq.s32.totalorder %s21, 1
    %p60 = scmp.ne.s32.totalorder %s55, %s57
    %p61 = scmp.eq.s32.totalorder %s21, 0
    %p62 = por %p60, %p61
    %p63 = scmp.ne.s32.totalorder %s55, %s57
    %p64 = scmp.eq.s32.totalorder %s26, 1
    %p65 = por %p63, %p64
    %p66 = scmp.ne.s32.totalorder %s57, %s58
    %p67 = scmp.eq.s32.totalorder %s26, 0
    %p68 = por %p66, %p67
    %p69 = scmp.ne.s32.totalorder %s57, %s58
    %p70 = scmp.eq.s32.totalorder %s27, 1
    %p71 = por %p69, %p70
    %p73 = scmp.ne.s32.totalorder %s58, %s72
    %p74 = scmp.eq.s32.totalorder %s27, 0
    %p75 = por %p73, %p74
    %s77 = sadd.s32 %s76, 1
    %p80 = scmp.eq.s32.totalorder %s21, 1
    %p81 = scmp.ne.s32.totalorder %s76, %s78
    %p82 = scmp.eq.s32.totalorder %s21, 0
    %p83 = por %p81, %p82
    %p84 = scmp.ne.s32.totalorder %s76, %s78
    %p85 = scmp.eq.s32.totalorder %s26, 1
    %p86 = por %p84, %p85
    %p87 = scmp.ne.s32.totalorder %s78, %s79
    %p88 = scmp.eq.s32.totalorder %s26, 0
    %p89 = por %p87, %p88
    %p90 = scmp.ne.s32.totalorder %s78, %s79
    %p91 = scmp.eq.s32.totalorder %s27, 1
    %p92 = por %p90, %p91
    %p94 = scmp.ne.s32.totalorder %s79, %s93
    %p95 = scmp.eq.s32.totalorder %s27, 0
    %p96 = por %p94, %p95
    %s98 = sadd.s32 %s97, 1
    %p101 = scmp.eq.s32.totalorder %s21, 1
    %p102 = scmp.ne.s32.totalorder %s97, %s99
    %p103 = scmp.eq.s32.totalorder %s21, 0
    %p104 = por %p102, %p103
    %p105 = scmp.ne.s32.totalorder %s97, %s99
    %p106 = scmp.eq.s32.totalorder %s26, 1
    %p107 = por %p105, %p106
    %p108 = scmp.ne.s32.totalorder %s99, %s100
    %p109 = scmp.eq.s32.totalorder %s26, 0
    %p110 = por %p108, %p109
    %p111 = scmp.ne.s32.totalorder %s99, %s100
    %p112 = scmp.eq.s32.totalorder %s27, 1
    %p113 = por %p111, %p112
    %p115 = scmp.ne.s32.totalorder %s100, %s114
    %p116 = scmp.eq.s32.totalorder %s27, 0
    %p117 = por %p115, %p116
    %s119 = sadd.s32 %s118, 1
    %p122 = scmp.eq.s32.totalorder %s21, 1
    %p123 = scmp.ne.s32.totalorder %s118, %s120
    %p124 = scmp.eq.s32.totalorder %s21, 0
    %p125 = por %p123, %p124
    %p126 = scmp.ne.s32.totalorder %s118, %s120
    %p127 = scmp.eq.s32.totalorder %s26, 1
    %p128 = por %p126, %p127
    %p129 = scmp.ne.s32.totalorder %s120, %s121
    %p130 = scmp.eq.s32.totalorder %s26, 0
    %p131 = por %p129, %p130
    %p132 = scmp.ne.s32.totalorder %s120, %s121
    %p133 = scmp.eq.s32.totalorder %s27, 1
    %p134 = por %p132, %p133
    %p136 = scmp.ne.s32.totalorder %s121, %s135
    %p137 = scmp.eq.s32.totalorder %s27, 0
    %p138 = por %p136, %p137
    %s140 = sadd.s32 %s139, 1
    %p143 = scmp.eq.s32.totalorder %s21, 1
    %p144 = scmp.ne.s32.totalorder %s139, %s141
    %p145 = scmp.eq.s32.totalorder %s21, 0
    %p146 = por %p144, %p145
    %p147 = scmp.ne.s32.totalorder %s139, %s141
    %p148 = scmp.eq.s32.totalorder %s26, 1
    %p149 = por %p147, %p148
    %p150 = scmp.ne.s32.totalorder %s141, %s142
    %p151 = scmp.eq.s32.totalorder %s26, 0
    %p152 = por %p150, %p151
    %p153 = scmp.ne.s32.totalorder %s141, %s142
    %p154 = scmp.eq.s32.totalorder %s27, 1
    %p155 = por %p153, %p154
    %p157 = scmp.ne.s32.totalorder %s142, %s156
    %p158 = scmp.eq.s32.totalorder %s27, 0
    %p159 = por %p157, %p158
    %s161 = sadd.s32 %s160, 1
    %p164 = scmp.eq.s32.totalorder %s21, 1
    %p165 = scmp.ne.s32.totalorder %s160, %s162
    %p166 = scmp.eq.s32.totalorder %s21, 0
    %p167 = por %p165, %p166
    %p168 = scmp.ne.s32.totalorder %s160, %s162
    %p169 = scmp.eq.s32.totalorder %s26, 1
    %p170 = por %p168, %p169
    %p171 = scmp.ne.s32.totalorder %s162, %s163
    %p172 = scmp.eq.s32.totalorder %s26, 0
    %p173 = por %p171, %p172
    %p174 = scmp.ne.s32.totalorder %s162, %s163
    %p175 = scmp.eq.s32.totalorder %s27, 1
    %p176 = por %p174, %p175
    %p178 = scmp.ne.s32.totalorder %s163, %s177
    %p179 = scmp.eq.s32.totalorder %s27, 0
    %p180 = por %p178, %p179
    %s182 = sadd.s32 %s181, 1
    %p185 = scmp.eq.s32.totalorder %s21, 1
    %p186 = scmp.ne.s32.totalorder %s181, %s183
    %p187 = scmp.eq.s32.totalorder %s21, 0
    %p188 = por %p186, %p187
    %p189 = scmp.ne.s32.totalorder %s181, %s183
    %p190 = scmp.eq.s32.totalorder %s26, 1
    %p191 = por %p189, %p190
    %p192 = scmp.ne.s32.totalorder %s183, %s184
    %p193 = scmp.eq.s32.totalorder %s26, 0
    %p194 = por %p192, %p193
    %p195 = scmp.ne.s32.totalorder %s183, %s184
    %p196 = scmp.eq.s32.totalorder %s27, 1
    %p197 = por %p195, %p196
    %p199 = scmp.ne.s32.totalorder %s184, %s198
    %p200 = scmp.eq.s32.totalorder %s27, 0
    %p201 = por %p199, %p200
    %s203 = sadd.s32 %s202, 1
    %p206 = scmp.eq.s32.totalorder %s21, 1
    %p207 = scmp.ne.s32.totalorder %s202, %s204
    %p208 = scmp.eq.s32.totalorder %s21, 0
    %p209 = por %p207, %p208
    %p210 = scmp.ne.s32.totalorder %s202, %s204
    %p211 = scmp.eq.s32.totalorder %s26, 1
    %p212 = por %p210, %p211
    %p213 = scmp.ne.s32.totalorder %s204, %s205
    %p214 = scmp.eq.s32.totalorder %s26, 0
    %p215 = por %p213, %p214
    %p216 = scmp.ne.s32.totalorder %s204, %s205
    %p217 = scmp.eq.s32.totalorder %s27, 1
    %p218 = por %p216, %p217
    %p220 = scmp.ne.s32.totalorder %s205, %s219
    %p221 = scmp.eq.s32.totalorder %s27, 0
    %p222 = por %p220, %p221
    %s224 = sadd.s32 %s223, 1
    %p227 = scmp.eq.s32.totalorder %s21, 1
    %p228 = scmp.ne.s32.totalorder %s223, %s225
    %p229 = scmp.eq.s32.totalorder %s21, 0
    %p230 = por %p228, %p229
    %p231 = scmp.ne.s32.totalorder %s223, %s225
    %p232 = scmp.eq.s32.totalorder %s26, 1
    %p233 = por %p231, %p232
    %p234 = scmp.ne.s32.totalorder %s225, %s226
    %p235 = scmp.eq.s32.totalorder %s26, 0
    %p236 = por %p234, %p235
    %p237 = scmp.ne.s32.totalorder %s225, %s226
    %p238 = scmp.eq.s32.totalorder %s27, 1
    %p239 = por %p237, %p238
    %p241 = scmp.ne.s32.totalorder %s226, %s240
    %p242 = scmp.eq.s32.totalorder %s27, 0
    %p243 = por %p241, %p242
    %s245 = sadd.s32 %s244, 1
    %p248 = scmp.eq.s32.totalorder %s21, 1
    %p249 = scmp.ne.s32.totalorder %s244, %s246
    %p250 = scmp.eq.s32.totalorder %s21, 0
    %p251 = por %p249, %p250
    %p252 = scmp.ne.s32.totalorder %s244, %s246
    %p253 = scmp.eq.s32.totalorder %s26, 1
    %p254 = por %p252, %p253
    %p255 = scmp.ne.s32.totalorder %s246, %s247
    %p256 = scmp.eq.s32.totalorder %s26, 0
    %p257 = por %p255, %p256
    %p258 = scmp.ne.s32.totalorder %s246, %s247
    %p259 = scmp.eq.s32.totalorder %s27, 1
    %p260 = por %p258, %p259
    %p262 = scmp.ne.s32.totalorder %s247, %s261
    %p263 = scmp.eq.s32.totalorder %s27, 0
    %p264 = por %p262, %p263
    %s266 = sadd.s32 %s265, 1
    %p269 = scmp.eq.s32.totalorder %s21, 1
    %p270 = scmp.ne.s32.totalorder %s265, %s267
    %p271 = scmp.eq.s32.totalorder %s21, 0
    %p272 = por %p270, %p271
    %p273 = scmp.ne.s32.totalorder %s265, %s267
    %p274 = scmp.eq.s32.totalorder %s26, 1
    %p275 = por %p273, %p274
    %p276 = scmp.ne.s32.totalorder %s267, %s268
    %p277 = scmp.eq.s32.totalorder %s26, 0
    %p278 = por %p276, %p277
    %p279 = scmp.ne.s32.totalorder %s267, %s268
    %p280 = scmp.eq.s32.totalorder %s27, 1
    %p281 = por %p279, %p280
    %p283 = scmp.ne.s32.totalorder %s268, %s282
    %p284 = scmp.eq.s32.totalorder %s27, 0
    %p285 = por %p283, %p284
    %s287 = sadd.s32 %s286, 1
    %p290 = scmp.eq.s32.totalorder %s21, 1
    %p291 = scmp.ne.s32.totalorder %s286, %s288
    %p292 = scmp.eq.s32.totalorder %s21, 0
    %p293 = por %p291, %p292
    %p294 = scmp.ne.s32.totalorder %s286, %s288
    %p295 = scmp.eq.s32.totalorder %s26, 1
    %p296 = por %p294, %p295
    %p297 = scmp.ne.s32.totalorder %s288, %s289
    %p298 = scmp.eq.s32.totalorder %s26, 0
    %p299 = por %p297, %p298
    %p300 = scmp.ne.s32.totalorder %s288, %s289
    %p301 = scmp.eq.s32.totalorder %s27, 1
    %p302 = por %p300, %p301
    %p304 = scmp.ne.s32.totalorder %s289, %s303
    %p305 = scmp.eq.s32.totalorder %s27, 0
    %p306 = por %p304, %p305
    %s308 = sadd.s32 %s307, 1
    %p311 = scmp.eq.s32.totalorder %s21, 1
    %p312 = scmp.ne.s32.totalorder %s307, %s309
    %p313 = scmp.eq.s32.totalorder %s21, 0
    %p314 = por %p312, %p313
    %p315 = scmp.ne.s32.totalorder %s307, %s309
    %p316 = scmp.eq.s32.totalorder %s26, 1
    %p317 = por %p315, %p316
    %p318 = scmp.ne.s32.totalorder %s309, %s310
    %p319 = scmp.eq.s32.totalorder %s26, 0
    %p320 = por %p318, %p319
    %p321 = scmp.ne.s32.totalorder %s309, %s310
    %p322 = scmp.eq.s32.totalorder %s27, 1
    %p323 = por %p321, %p322
    %p325 = scmp.ne.s32.totalorder %s310, %s324
    %p326 = scmp.eq.s32.totalorder %s27, 0
    %p327 = por %p325, %p326
    %s329 = sadd.s32 %s328, 1
    %p332 = scmp.eq.s32.totalorder %s21, 1
    %p333 = scmp.ne.s32.totalorder %s328, %s330
    %p334 = scmp.eq.s32.totalorder %s21, 0
    %p335 = por %p333, %p334
    %p336 = scmp.ne.s32.totalorder %s328, %s330
    %p337 = scmp.eq.s32.totalorder %s26, 1
    %p338 = por %p336, %p337
    %p339 = scmp.ne.s32.totalorder %s330, %s331
    %p340 = scmp.eq.s32.totalorder %s26, 0
    %p341 = por %p339, %p340
    %p342 = scmp.ne.s32.totalorder %s330, %s331
    %p343 = scmp.eq.s32.totalorder %s27, 1
    %p344 = por %p342, %p343
    %p346 = scmp.ne.s32.totalorder %s331, %s345
    %p347 = scmp.eq.s32.totalorder %s27, 0
    %p348 = por %p346, %p347
    %s349 = ssub.s32 %s21, %s28
    %p350 = scmp.eq.s32.totalorder %s349, 0
    %s352 = sadd.s32 %s351, 1
    %s353 = scalar_select %p350, %s351, %s352
    %p356 = pneg %p350
    %p357 = scmp.eq.s32.totalorder %s21, 1
    %p358 = por %p356, %p357
    %p359 = scmp.ne.s32.totalorder %s351, %s354
    %p360 = scmp.eq.s32.totalorder %s21, 0
    %p361 = por %p359, %p360
    %p362 = scmp.ne.s32.totalorder %s351, %s354
    %p363 = scmp.eq.s32.totalorder %s26, 1
    %p364 = por %p362, %p363
    %p365 = scmp.ne.s32.totalorder %s354, %s355
    %p366 = scmp.eq.s32.totalorder %s26, 0
    %p367 = por %p365, %p366
    %p368 = scmp.ne.s32.totalorder %s354, %s355
    %p369 = scmp.eq.s32.totalorder %s27, 1
    %p370 = por %p368, %p369
    %p372 = scmp.ne.s32.totalorder %s355, %s371
    %p373 = scmp.eq.s32.totalorder %s27, 0
    %p374 = por %p372, %p373
    %p375 = scmp.le.s32.totalorder 1, %s21
    %p376 = scmp.lt.s32.totalorder %s21, 3
    %p377 = pnand %p375, %p376
    %p378 = pneg %p377
    // Predicated region
    $region9: #{_lambda_.1} parent=5 // pred_check
      _
    $region10: #{_lambda_.1} parent=5 // pred_check_branch
      %380 = sbr.rel (%p377) target = $region12
    $region11: #{_lambda_.1} parent=5 // pred_region
      %s381 = ssub.s32 %s21, 1
      // Predicated region
      $region13: #{_lambda_.1} parent=11 // pred_check
        %p382 = pneg %p68
      $region14: #{_lambda_.1} parent=11 // pred_check_branch
        %384 = sbr.rel (%p382) target = $region16
      $region15: #{_lambda_.1} parent=11 // pred_region
        _
      $region16: #{_lambda_.1} parent=11 // pred_fallthru
        _
      // Predicated region
      $region17: #{_lambda_.1} parent=11 // pred_check
        %p385 = pneg %p89
      $region18: #{_lambda_.1} parent=11 // pred_check_branch
        %387 = sbr.rel (%p385) target = $region20
      $region19: #{_lambda_.1} parent=11 // pred_region
        _
      $region20: #{_lambda_.1} parent=11 // pred_fallthru
        _
      // Predicated region
      $region21: #{_lambda_.1} parent=11 // pred_check
        %p388 = pneg %p110
      $region22: #{_lambda_.1} parent=11 // pred_check_branch
        %390 = sbr.rel (%p388) target = $region24
      $region23: #{_lambda_.1} parent=11 // pred_region
        _
      $region24: #{_lambda_.1} parent=11 // pred_fallthru
        _
      // Predicated region
      $region25: #{_lambda_.1} parent=11 // pred_check
        %p391 = pneg %p131
      $region26: #{_lambda_.1} parent=11 // pred_check_branch
        %393 = sbr.rel (%p391) target = $region28
      $region27: #{_lambda_.1} parent=11 // pred_region
        _
      $region28: #{_lambda_.1} parent=11 // pred_fallthru
        _
      // Predicated region
      $region29: #{_lambda_.1} parent=11 // pred_check
        %p394 = pneg %p152
      $region30: #{_lambda_.1} parent=11 // pred_check_branch
        %396 = sbr.rel (%p394) target = $region32
      $region31: #{_lambda_.1} parent=11 // pred_region
        _
      $region32: #{_lambda_.1} parent=11 // pred_fallthru
        _
      // Predicated region
      $region33: #{_lambda_.1} parent=11 // pred_check
        %p397 = pneg %p173
      $region34: #{_lambda_.1} parent=11 // pred_check_branch
        %399 = sbr.rel (%p397) target = $region36
      $region35: #{_lambda_.1} parent=11 // pred_region
        _
      $region36: #{_lambda_.1} parent=11 // pred_fallthru
        _
      // Predicated region
      $region37: #{_lambda_.1} parent=11 // pred_check
        %p400 = pneg %p194
      $region38: #{_lambda_.1} parent=11 // pred_check_branch
        %402 = sbr.rel (%p400) target = $region40
      $region39: #{_lambda_.1} parent=11 // pred_region
        _
      $region40: #{_lambda_.1} parent=11 // pred_fallthru
        _
      // Predicated region
      $region41: #{_lambda_.1} parent=11 // pred_check
        %p403 = pneg %p215
      $region42: #{_lambda_.1} parent=11 // pred_check_branch
        %405 = sbr.rel (%p403) target = $region44
      $region43: #{_lambda_.1} parent=11 // pred_region
        _
      $region44: #{_lambda_.1} parent=11 // pred_fallthru
        _
      // Predicated region
      $region45: #{_lambda_.1} parent=11 // pred_check
        %p406 = pneg %p236
      $region46: #{_lambda_.1} parent=11 // pred_check_branch
        %408 = sbr.rel (%p406) target = $region48
      $region47: #{_lambda_.1} parent=11 // pred_region
        _
      $region48: #{_lambda_.1} parent=11 // pred_fallthru
        _
      // Predicated region
      $region49: #{_lambda_.1} parent=11 // pred_check
        %p409 = pneg %p257
      $region50: #{_lambda_.1} parent=11 // pred_check_branch
        %411 = sbr.rel (%p409) target = $region52
      $region51: #{_lambda_.1} parent=11 // pred_region
        _
      $region52: #{_lambda_.1} parent=11 // pred_fallthru
        _
      // Predicated region
      $region53: #{_lambda_.1} parent=11 // pred_check
        %p412 = pneg %p278
      $region54: #{_lambda_.1} parent=11 // pred_check_branch
        %414 = sbr.rel (%p412) target = $region56
      $region55: #{_lambda_.1} parent=11 // pred_region
        _
      $region56: #{_lambda_.1} parent=11 // pred_fallthru
        _
      // Predicated region
      $region57: #{_lambda_.1} parent=11 // pred_check
        %p415 = pneg %p299
      $region58: #{_lambda_.1} parent=11 // pred_check_branch
        %417 = sbr.rel (%p415) target = $region60
      $region59: #{_lambda_.1} parent=11 // pred_region
        _
      $region60: #{_lambda_.1} parent=11 // pred_fallthru
        _
      // Predicated region
      $region61: #{_lambda_.1} parent=11 // pred_check
        %p418 = pneg %p320
      $region62: #{_lambda_.1} parent=11 // pred_check_branch
        %420 = sbr.rel (%p418) target = $region64
      $region63: #{_lambda_.1} parent=11 // pred_region
        _
      $region64: #{_lambda_.1} parent=11 // pred_fallthru
        _
      // Predicated region
      $region65: #{_lambda_.1} parent=11 // pred_check
        %p421 = pneg %p341
      $region66: #{_lambda_.1} parent=11 // pred_check_branch
        %423 = sbr.rel (%p421) target = $region68
      $region67: #{_lambda_.1} parent=11 // pred_region
        _
      $region68: #{_lambda_.1} parent=11 // pred_fallthru
        _
    $region12: #{_lambda_.1} parent=5 // pred_fallthru
      _
    %p424 = scmp.lt.s32.totalorder %s21, 2
    // Predicated region
    $region69: #{_lambda_.1} parent=5 // pred_check
      %p425 = pneg %p424
    $region70: #{_lambda_.1} parent=5 // pred_check_branch
      %427 = sbr.rel (%p425) target = $region72
    $region71: #{_lambda_.1} parent=5 // pred_region
      // Predicated region
      $region73: #{_lambda_.1} parent=71 // pred_check
        %p428 = pneg %p41
      $region74: #{_lambda_.1} parent=71 // pred_check_branch
        %430 = sbr.rel (%p428) target = $region76
      $region75: #{_lambda_.1} parent=71 // pred_region
        %p431 = scmp.lt.s32.totalorder %s21, 1
        %s432 = scalar_select %p431, %s21, 1
        %s433 = smul.addr %s432, 2
        %s434 = smul.addr %s433, 8
        %s435 = scalar_lea.vmem %s0, %s434
      $region76: #{_lambda_.1} parent=71 // pred_fallthru
        _
    $region72: #{_lambda_.1} parent=5 // pred_fallthru
      _
    %p436 = scmp.le.s32.totalorder 1, %s21
    %p437 = scmp.lt.s32.totalorder %s21, 3
    %p438 = pnand %p436, %p437
    %p439 = pneg %p438
    // Predicated region
    $region77: #{_lambda_.1} parent=5 // pred_check
      _
    $region78: #{_lambda_.1} parent=5 // pred_check_branch
      %441 = sbr.rel (%p438) target = $region80
    $region79: #{_lambda_.1} parent=5 // pred_region
      %s442 = ssub.s32 %s21, 1
      %p443 = scmp.lt.s32.totalorder %s26, 1
      %s444 = scalar_select %p443, %s26, 1
      %s445 = smul.addr %s444, 2
      %s446 = smul.addr %s445, 8
      %s447 = scalar_lea.vmem %s0, %s446
      %p448 = pneg %p47
      %p449 = pneg %p44
      %p450 = pneg %p68
      %p451 = pneg %p65
      %p452 = pneg %p89
      %p453 = pneg %p86
      %p454 = pneg %p110
      %p455 = pneg %p107
      %p456 = pneg %p131
      %p457 = pneg %p128
      %p458 = pneg %p152
      %p459 = pneg %p149
      %p460 = pneg %p173
      %p461 = pneg %p170
      %p462 = pneg %p194
      %p463 = pneg %p191
      %p464 = pneg %p215
      %p465 = pneg %p212
      %p466 = pneg %p236
      %p467 = pneg %p233
      %p468 = pneg %p257
      %p469 = pneg %p254
      %p470 = pneg %p278
      %p471 = pneg %p275
      %p472 = pneg %p299
      %p473 = pneg %p296
      %p474 = pneg %p320
      %p475 = pneg %p317
      %p476 = pneg %p341
      %p477 = pneg %p338
      %p478 = pneg %p367
      %p479 = pneg %p364
      %p480 = scmp.lt.s32.totalorder %s26, 1
      %s481 = scalar_select %p480, %s26, 1
      %s482 = scalar_lea.vmem %s15, %s481
      %p483 = scmp.lt.s32.totalorder %s26, 1
      %s484 = scalar_select %p483, %s26, 1
      %s485 = smul.addr %s484, 2
      %s486 = smul.addr %s485, 8
      %s487 = scalar_lea.vmem %s0, %s486
      %p488 = scmp.lt.s32.totalorder %s26, 1
      %s489 = scalar_select %p488, %s26, 1
      %s490 = scalar_lea.vmem %s15, %s489
      %v492 = vld [vmem:[%s487] sm:$0xff]
      %v493 = vld [vmem:[%s487 + $0x8] sm:$0xff]
      %vm494 = vcmask 261120
      %495 = vst.msk [vmem:[#allocation2] sm:$0xff] %vm494, %v492
      %496 = vst.msk [vmem:[#allocation2 + $0x8] sm:$0xff] %vm494, %v493
      %v497 = vld [vmem:[%s1] sm:$0xff]
      %v498 = vld [vmem:[%s8] sm:$0x1]
      %v499 = vld [vmem:[%s6] sm:$0xff]
      %v500 = vld [vmem:[%s7] sm:$0xff]
      loop: start=0, step=1, limit=2
      $region81: #{_lambda_.1} parent=79 // loop_pre_header
        _
      $region82: #{_lambda_.1} parent=79 // loop_header
        %s502 = sphi 0, %s506
        %p503 = scmp.ge.s32.totalorder %s502, 2
        %v507 = vphi 0.0, %v849
        %v508 = vphi 0.0, %v853
      $region83: #{_lambda_.1} parent=79 // loop_header_branch
        %505 = sbr.rel (%p503) target = $region87
      $region84: #{_lambda_.1} parent=79 // loop_body
        %s509 = smul.u32 %s502, 8
        %s510 = scalar_lea.vmem [#allocation2], %s509
        %v511 = vld [vmem:[%s510] sm:$0xff]
        %v512 = vld [vmem:[%s2] sm:$0xff]
        %v513 = vlaneseq
        %v514 = vshrl.u32 %v513, 7
        %v515 = vsub.s32 0, %v514
        %v516 = vrot.slane %v507, %v515
        %v517 = vmul.f32 %v512, %v516
        %v518 = vadd.f32 %v517, 0.0
        %v519 = vld [vmem:[%s3] sm:$0xff]
        %v520 = vlaneseq
        %v521 = vshrl.u32 %v520, 7
        %v522 = vsub.s32 0, %v521
        %v523 = vrot.slane %v508, %v522
        %v524 = vmul.f32 %v519, %v523
        %v525 = vsub.f32 %v518, %v524
        %s526 = scalar_lea.vmem %s2, 8
        %v527 = vld [vmem:[%s526] sm:$0xff]
        %v528 = vlaneseq
        %v529 = vshrl.u32 %v528, 7
        %v530 = vsub.s32 1, %v529
        %v531 = vrot.slane %v507, %v530
        %v532 = vmul.f32 %v527, %v531
        %v533 = vadd.f32 %v525, %v532
        %s534 = scalar_lea.vmem %s3, 8
        %v535 = vld [vmem:[%s534] sm:$0xff]
        %v536 = vlaneseq
        %v537 = vshrl.u32 %v536, 7
        %v538 = vsub.s32 1, %v537
        %v539 = vrot.slane %v508, %v538
        %v540 = vmul.f32 %v535, %v539
        %v541 = vsub.f32 %v533, %v540
        %s542 = scalar_lea.vmem %s2, 16
        %v543 = vld [vmem:[%s542] sm:$0xff]
        %v544 = vlaneseq
        %v545 = vshrl.u32 %v544, 7
        %v546 = vsub.s32 2, %v545
        %v547 = vrot.slane %v507, %v546
        %v548 = vmul.f32 %v543, %v547
        %v549 = vadd.f32 %v541, %v548
        %s550 = scalar_lea.vmem %s3, 16
        %v551 = vld [vmem:[%s550] sm:$0xff]
        %v552 = vlaneseq
        %v553 = vshrl.u32 %v552, 7
        %v554 = vsub.s32 2, %v553
        %v555 = vrot.slane %v508, %v554
        %v556 = vmul.f32 %v551, %v555
        %v557 = vsub.f32 %v549, %v556
        %s558 = scalar_lea.vmem %s2, 24
        %v559 = vld [vmem:[%s558] sm:$0xff]
        %v560 = vlaneseq
        %v561 = vshrl.u32 %v560, 7
        %v562 = vsub.s32 3, %v561
        %v563 = vrot.slane %v507, %v562
        %v564 = vmul.f32 %v559, %v563
        %v565 = vadd.f32 %v557, %v564
        %s566 = scalar_lea.vmem %s3, 24
        %v567 = vld [vmem:[%s566] sm:$0xff]
        %v568 = vlaneseq
        %v569 = vshrl.u32 %v568, 7
        %v570 = vsub.s32 3, %v569
        %v571 = vrot.slane %v508, %v570
        %v572 = vmul.f32 %v567, %v571
        %v573 = vsub.f32 %v565, %v572
        %s574 = scalar_lea.vmem %s2, 32
        %v575 = vld [vmem:[%s574] sm:$0xff]
        %v576 = vlaneseq
        %v577 = vshrl.u32 %v576, 7
        %v578 = vsub.s32 4, %v577
        %v579 = vrot.slane %v507, %v578
        %v580 = vmul.f32 %v575, %v579
        %v581 = vadd.f32 %v573, %v580
        %s582 = scalar_lea.vmem %s3, 32
        %v583 = vld [vmem:[%s582] sm:$0xff]
        %v584 = vlaneseq
        %v585 = vshrl.u32 %v584, 7
        %v586 = vsub.s32 4, %v585
        %v587 = vrot.slane %v508, %v586
        %v588 = vmul.f32 %v583, %v587
        %v589 = vsub.f32 %v581, %v588
        %s590 = scalar_lea.vmem %s2, 40
        %v591 = vld [vmem:[%s590] sm:$0xff]
        %v592 = vlaneseq
        %v593 = vshrl.u32 %v592, 7
        %v594 = vsub.s32 5, %v593
        %v595 = vrot.slane %v507, %v594
        %v596 = vmul.f32 %v591, %v595
        %v597 = vadd.f32 %v589, %v596
        %s598 = scalar_lea.vmem %s3, 40
        %v599 = vld [vmem:[%s598] sm:$0xff]
        %v600 = vlaneseq
        %v601 = vshrl.u32 %v600, 7
        %v602 = vsub.s32 5, %v601
        %v603 = vrot.slane %v508, %v602
        %v604 = vmul.f32 %v599, %v603
        %v605 = vsub.f32 %v597, %v604
        %s606 = scalar_lea.vmem %s2, 48
        %v607 = vld [vmem:[%s606] sm:$0xff]
        %v608 = vlaneseq
        %v609 = vshrl.u32 %v608, 7
        %v610 = vsub.s32 6, %v609
        %v611 = vrot.slane %v507, %v610
        %v612 = vmul.f32 %v607, %v611
        %v613 = vadd.f32 %v605, %v612
        %s614 = scalar_lea.vmem %s3, 48
        %v615 = vld [vmem:[%s614] sm:$0xff]
        %v616 = vlaneseq
        %v617 = vshrl.u32 %v616, 7
        %v618 = vsub.s32 6, %v617
        %v619 = vrot.slane %v508, %v618
        %v620 = vmul.f32 %v615, %v619
        %v621 = vsub.f32 %v613, %v620
        %s622 = scalar_lea.vmem %s2, 56
        %v623 = vld [vmem:[%s622] sm:$0xff]
        %v624 = vlaneseq
        %v625 = vshrl.u32 %v624, 7
        %v626 = vsub.s32 7, %v625
        %v627 = vrot.slane %v507, %v626
        %v628 = vmul.f32 %v623, %v627
        %v629 = vadd.f32 %v621, %v628
        %s630 = scalar_lea.vmem %s3, 56
        %v631 = vld [vmem:[%s630] sm:$0xff]
        %v632 = vlaneseq
        %v633 = vshrl.u32 %v632, 7
        %v634 = vsub.s32 7, %v633
        %v635 = vrot.slane %v508, %v634
        %v636 = vmul.f32 %v631, %v635
        %v637 = vsub.f32 %v629, %v636
        %v639 = vlaneseq
        %v640 = vshrl.u32 %v639, 7
        %v641 = vsub.s32 0, %v640
        %v642 = vrot.slane %v498, %v641
        %v644 = vmul.f32 %v511, %v642
        %v645 = vadd.f32 %v637, %v644
        %v646 = vlaneseq
        %v647 = vshrl.u32 %v646, 7
        %v648 = vsub.s32 0, %v647
        %v649 = vrot.slane %v497, %v648
        %v650 = vmul.f32 %v649, %v511
        %v651 = vadd.f32 %v645, %v650
        %v652 = vlaneseq
        %v653 = vshrl.u32 %v652, 7
        %v654 = vsub.s32 1, %v653
        %v655 = vrot.slane %v497, %v654
        %v656 = vmul.f32 %v655, 0.0
        %v657 = vmul.f32 %v655, %v511
        %vm660 = vcmask 1040384
        %v661 = vrot.slane %v656, 7
        %v662 = vrot.slane %v657, 7
        %v663 = vsel %vm660, %v661, %v662
        %v665 = vadd.f32 %v651, %v663
        %v666 = vlaneseq
        %v667 = vshrl.u32 %v666, 7
        %v668 = vsub.s32 2, %v667
        %v669 = vrot.slane %v497, %v668
        %v670 = vmul.f32 %v669, 0.0
        %v671 = vmul.f32 %v669, %v511
        %vm674 = vcmask 1041408
        %v675 = vrot.slane %v670, 6
        %v676 = vrot.slane %v671, 6
        %v677 = vsel %vm674, %v675, %v676
        %v679 = vadd.f32 %v665, %v677
        %v680 = vlaneseq
        %v681 = vshrl.u32 %v680, 7
        %v682 = vsub.s32 3, %v681
        %v683 = vrot.slane %v497, %v682
        %v684 = vmul.f32 %v683, 0.0
        %v685 = vmul.f32 %v683, %v511
        %vm688 = vcmask 1042432
        %v689 = vrot.slane %v684, 5
        %v690 = vrot.slane %v685, 5
        %v691 = vsel %vm688, %v689, %v690
        %v693 = vadd.f32 %v679, %v691
        %v694 = vlaneseq
        %v695 = vshrl.u32 %v694, 7
        %v696 = vsub.s32 4, %v695
        %v697 = vrot.slane %v497, %v696
        %v698 = vmul.f32 %v697, 0.0
        %v699 = vmul.f32 %v697, %v511
        %vm702 = vcmask 1043456
        %v703 = vrot.slane %v698, 4
        %v704 = vrot.slane %v699, 4
        %v705 = vsel %vm702, %v703, %v704
        %v707 = vadd.f32 %v693, %v705
        %v708 = vlaneseq
        %v709 = vshrl.u32 %v708, 7
        %v710 = vsub.s32 5, %v709
        %v711 = vrot.slane %v497, %v710
        %v712 = vmul.f32 %v711, 0.0
        %v713 = vmul.f32 %v711, %v511
        %vm716 = vcmask 1044480
        %v717 = vrot.slane %v712, 3
        %v718 = vrot.slane %v713, 3
        %v719 = vsel %vm716, %v717, %v718
        %v721 = vadd.f32 %v707, %v719
        %v722 = vlaneseq
        %v723 = vshrl.u32 %v722, 7
        %v724 = vsub.s32 6, %v723
        %v725 = vrot.slane %v497, %v724
        %v726 = vmul.f32 %v725, 0.0
        %v727 = vmul.f32 %v725, %v511
        %vm730 = vcmask 1045504
        %v731 = vrot.slane %v726, 2
        %v732 = vrot.slane %v727, 2
        %v733 = vsel %vm730, %v731, %v732
        %v735 = vadd.f32 %v721, %v733
        %v736 = vlaneseq
        %v737 = vshrl.u32 %v736, 7
        %v738 = vsub.s32 7, %v737
        %v739 = vrot.slane %v497, %v738
        %v740 = vmul.f32 %v739, 0.0
        %v741 = vmul.f32 %v739, %v511
        %vm744 = vcmask 1046528
        %v745 = vrot.slane %v740, 1
        %v746 = vrot.slane %v741, 1
        %v747 = vsel %vm744, %v745, %v746
        %v749 = vadd.f32 %v735, %v747
        %s750 = scalar_lea.vmem [#allocation3], %s509
        %751 = vst.msk [vmem:[%s750] sm:$0xff] %vm494, %v749
        %v752 = vld [vmem:[%s4] sm:$0xff]
        %v753 = vlaneseq
        %v754 = vshrl.u32 %v753, 7
        %v755 = vsub.s32 0, %v754
        %v756 = vrot.slane %v511, %v755
        %v757 = vmul.f32 %v752, %v756
        %v758 = vadd.f32 %v757, 0.0
        %v759 = vld [vmem:[%s5] sm:$0xff]
        %v760 = vmul.f32 %v759, %v756
        %v761 = vadd.f32 %v760, 0.0
        %s762 = scalar_lea.vmem %s4, 8
        %v763 = vld [vmem:[%s762] sm:$0xff]
        %v764 = vlaneseq
        %v765 = vshrl.u32 %v764, 7
        %v766 = vsub.s32 1, %v765
        %v767 = vrot.slane %v511, %v766
        %v768 = vmul.f32 %v763, %v767
        %v769 = vadd.f32 %v758, %v768
        %s770 = scalar_lea.vmem %s5, 8
        %v771 = vld [vmem:[%s770] sm:$0xff]
        %v772 = vmul.f32 %v771, %v767
        %v773 = vadd.f32 %v761, %v772
        %s774 = scalar_lea.vmem %s4, 16
        %v775 = vld [vmem:[%s774] sm:$0xff]
        %v776 = vlaneseq
        %v777 = vshrl.u32 %v776, 7
        %v778 = vsub.s32 2, %v777
        %v779 = vrot.slane %v511, %v778
        %v780 = vmul.f32 %v775, %v779
        %v781 = vadd.f32 %v769, %v780
        %s782 = scalar_lea.vmem %s5, 16
        %v783 = vld [vmem:[%s782] sm:$0xff]
        %v784 = vmul.f32 %v783, %v779
        %v785 = vadd.f32 %v773, %v784
        %s786 = scalar_lea.vmem %s4, 24
        %v787 = vld [vmem:[%s786] sm:$0xff]
        %v788 = vlaneseq
        %v789 = vshrl.u32 %v788, 7
        %v790 = vsub.s32 3, %v789
        %v791 = vrot.slane %v511, %v790
        %v792 = vmul.f32 %v787, %v791
        %v793 = vadd.f32 %v781, %v792
        %s794 = scalar_lea.vmem %s5, 24
        %v795 = vld [vmem:[%s794] sm:$0xff]
        %v796 = vmul.f32 %v795, %v791
        %v797 = vadd.f32 %v785, %v796
        %s798 = scalar_lea.vmem %s4, 32
        %v799 = vld [vmem:[%s798] sm:$0xff]
        %v800 = vlaneseq
        %v801 = vshrl.u32 %v800, 7
        %v802 = vsub.s32 4, %v801
        %v803 = vrot.slane %v511, %v802
        %v804 = vmul.f32 %v799, %v803
        %v805 = vadd.f32 %v793, %v804
        %s806 = scalar_lea.vmem %s5, 32
        %v807 = vld [vmem:[%s806] sm:$0xff]
        %v808 = vmul.f32 %v807, %v803
        %v809 = vadd.f32 %v797, %v808
        %s810 = scalar_lea.vmem %s4, 40
        %v811 = vld [vmem:[%s810] sm:$0xff]
        %v812 = vlaneseq
        %v813 = vshrl.u32 %v812, 7
        %v814 = vsub.s32 5, %v813
        %v815 = vrot.slane %v511, %v814
        %v816 = vmul.f32 %v811, %v815
        %v817 = vadd.f32 %v805, %v816
        %s818 = scalar_lea.vmem %s5, 40
        %v819 = vld [vmem:[%s818] sm:$0xff]
        %v820 = vmul.f32 %v819, %v815
        %v821 = vadd.f32 %v809, %v820
        %s822 = scalar_lea.vmem %s4, 48
        %v823 = vld [vmem:[%s822] sm:$0xff]
        %v824 = vlaneseq
        %v825 = vshrl.u32 %v824, 7
        %v826 = vsub.s32 6, %v825
        %v827 = vrot.slane %v511, %v826
        %v828 = vmul.f32 %v823, %v827
        %v829 = vadd.f32 %v817, %v828
        %s830 = scalar_lea.vmem %s5, 48
        %v831 = vld [vmem:[%s830] sm:$0xff]
        %v832 = vmul.f32 %v831, %v827
        %v833 = vadd.f32 %v821, %v832
        %s834 = scalar_lea.vmem %s4, 56
        %v835 = vld [vmem:[%s834] sm:$0xff]
        %v836 = vlaneseq
        %v837 = vshrl.u32 %v836, 7
        %v838 = vsub.s32 7, %v837
        %v839 = vrot.slane %v511, %v838
        %v840 = vmul.f32 %v835, %v839
        %v841 = vadd.f32 %v829, %v840
        %s842 = scalar_lea.vmem %s5, 56
        %v843 = vld [vmem:[%s842] sm:$0xff]
        %v844 = vmul.f32 %v843, %v839
        %v845 = vadd.f32 %v833, %v844
        %v846 = vmul.f32 %v499, %v507
        %v847 = vmul.f32 %v500, %v508
        %v848 = vsub.f32 %v846, %v847
        %v849 = vadd.f32 %v848, %v841
        %v850 = vmul.f32 %v500, %v507
        %v851 = vmul.f32 %v499, %v508
        %v852 = vadd.f32 %v850, %v851
        %v853 = vadd.f32 %v852, %v845
      $region85: #{_lambda_.1} parent=79 // loop_footer
        %s506 = sadd.s32 1, %s502
      $region86: #{_lambda_.1} parent=79 // loop_footer_branch
        %501 = sbr.rel target = $region82
      $region87: #{_lambda_.1} parent=79 // loop_exit
        _
      %v854 = vld [vmem:[#allocation2] sm:$0xff]
      %v855 = vld [vmem:[#allocation2 + $0x8] sm:$0xff]
      %v856 = vld [vmem:[#allocation3] sm:$0xff]
      %v857 = vld [vmem:[#allocation3 + $0x8] sm:$0xff]
      %v858 = vmul.f32 %v856, %v856
      %v859 = vmul.f32 %v857, %v857
      %v860 = vmul.f32 %v856, %v858
      %v861 = vmul.f32 %v857, %v859
      %v862 = vmul.f32 %v860, 0.044715
      %v863 = vmul.f32 %v861, 0.044715
      %v864 = vadd.f32 %v856, %v862
      %v865 = vadd.f32 %v857, %v863
      %v866 = vmul.f32 %v864, 0.7978846
      %v867 = vmul.f32 %v865, 0.7978846
      %v868 = vtanh.pop %v866
      %v869 = vtanh.pop %v867
      %v870 = vadd.f32 %v868, 1.0
      %v871 = vadd.f32 %v869, 1.0
      %v872 = vmul.f32 %v870, 0.5
      %v873 = vmul.f32 %v871, 0.5
      %v874 = vmul.f32 %v856, %v872
      %v875 = vmul.f32 %v857, %v873
      %v876 = vpack.c.bf16 %v875, %v874
      %v877 = vld [vmem:[%s9] sm:$0xf]
      %v878 = vld [vmem:[%s9 + $0x4] sm:$0xf]
      %v879 = vld [vmem:[%s9 + $0x8] sm:$0xf]
      %v880 = vld [vmem:[%s9 + $0xc] sm:$0xf]
      %v881 = vld [vmem:[%s11] sm:$0x1]
      %v883 = vlaneseq
      %v884 = vshrl.u32 %v883, 7
      %v885 = vsub.s32 0, %v884
      %v886 = vrot.slane %v881, %v885
      %v892 = vunpack.c.l.b16 %v877
      %v893 = vunpack.c.l.b16 %v878
      %v894 = vunpack.c.l.b16 %v879
      %v895 = vunpack.c.l.b16 %v880
      %v896 = vpack.c.b16 %v893, %v892
      %v897 = vpack.c.b16 %v895, %v894
      %v901 = vsel %vm494, %v876, 0
      %903 = vmatprep.subr.bf16.mxu0 0
      %904 = vmatpush1.bf16.msra.mxu0 0
      %905 = vmatprep.subr.bf16.mxu0 0
      %906 = vmatpush1.bf16.msra.mxu0 0
      %907 = vmatprep.subr.bf16.mxu0 0
      %908 = vmatpush1.bf16.msra.mxu0 0
      %909 = vmatprep.subr.bf16.mxu0 0
      %910 = vmatpush1.bf16.msra.mxu0 0
      %911 = vmatprep.subr.bf16.mxu0 0
      %912 = vmatpush1.bf16.msra.mxu0 0
      %913 = vmatprep.subr.bf16.mxu0 0
      %914 = vmatpush1.bf16.msra.mxu0 0
      %915 = vmatprep.subr.bf16.mxu0 0
      %916 = vmatpush1.bf16.msra.mxu0 %v897
      %917 = vmatprep.subr.bf16.mxu0 0
      %918 = vmatpush1.bf16.msra.mxu0 %v896
      %919 = vmatprep.subr.bf16.mxu0 0
      %920 = vmatpush2.bf16.msra.mxu0 0
      %921 = vmatprep.subr.bf16.mxu0 0
      %922 = vmatpush2.bf16.msra.mxu0 0
      %923 = vmatprep.subr.bf16.mxu0 0
      %924 = vmatpush2.bf16.msra.mxu0 0
      %925 = vmatprep.subr.bf16.mxu0 0
      %926 = vmatpush2.bf16.msra.mxu0 0
      %927 = vmatprep.subr.bf16.mxu0 0
      %928 = vmatpush2.bf16.msra.mxu0 0
      %929 = vmatprep.subr.bf16.mxu0 0
      %930 = vmatpush2.bf16.msra.mxu0 0
      %931 = vmatprep.subr.bf16.mxu0 0
      %932 = vmatpush2.bf16.msra.mxu0 0
      %933 = vmatprep.subr.bf16.mxu0 0
      %934 = vmatpush2.bf16.msra.mxu0 0
      %935 = vmatprep.mubr.bf16.mxu0 0
      %936 = vmatmul.mubr.bf16.gmra.mxu0 %v901
      %v937 = vpop.f32.mrf.mxu0
      %v938 = vadd.f32 %v886, %v937
      %v939 = vpop.f32.mrf.mxu0
      %v940 = vpop.f32.mrf.mxu0
      %v941 = vadd.f32 %v886, %v940
      %v942 = vpop.f32.mrf.mxu0
      %943 = vdwg.mxu0
      %v944 = vld [vmem:[%s10] sm:$0xf]
      %v945 = vld [vmem:[%s10 + $0x4] sm:$0xf]
      %v946 = vld [vmem:[%s10 + $0x8] sm:$0xf]
      %v947 = vld [vmem:[%s10 + $0xc] sm:$0xf]
      %v948 = vld [vmem:[%s12] sm:$0x1]
      %v950 = vlaneseq
      %v951 = vshrl.u32 %v950, 7
      %v952 = vsub.s32 0, %v951
      %v953 = vrot.slane %v948, %v952
      %v959 = vunpack.c.l.b16 %v944
      %v960 = vunpack.c.l.b16 %v945
      %v961 = vunpack.c.l.b16 %v946
      %v962 = vunpack.c.l.b16 %v947
      %v963 = vpack.c.b16 %v960, %v959
      %v964 = vpack.c.b16 %v962, %v961
      %967 = vmatprep.subr.bf16.mxu0 0
      %968 = vmatpush1.bf16.msra.mxu0 0
      %969 = vmatprep.subr.bf16.mxu0 0
      %970 = vmatpush1.bf16.msra.mxu0 0
      %971 = vmatprep.subr.bf16.mxu0 0
      %972 = vmatpush1.bf16.msra.mxu0 0
      %973 = vmatprep.subr.bf16.mxu0 0
      %974 = vmatpush1.bf16.msra.mxu0 0
      %975 = vmatprep.subr.bf16.mxu0 0
      %976 = vmatpush1.bf16.msra.mxu0 0
      %977 = vmatprep.subr.bf16.mxu0 0
      %978 = vmatpush1.bf16.msra.mxu0 0
      %979 = vmatprep.subr.bf16.mxu0 0
      %980 = vmatpush1.bf16.msra.mxu0 %v964
      %981 = vmatprep.subr.bf16.mxu0 0
      %982 = vmatpush1.bf16.msra.mxu0 %v963
      %983 = vmatprep.subr.bf16.mxu0 0
      %984 = vmatpush2.bf16.msra.mxu0 0
      %985 = vmatprep.subr.bf16.mxu0 0
      %986 = vmatpush2.bf16.msra.mxu0 0
      %987 = vmatprep.subr.bf16.mxu0 0
      %988 = vmatpush2.bf16.msra.mxu0 0
      %989 = vmatprep.subr.bf16.mxu0 0
      %990 = vmatpush2.bf16.msra.mxu0 0
      %991 = vmatprep.subr.bf16.mxu0 0
      %992 = vmatpush2.bf16.msra.mxu0 0
      %993 = vmatprep.subr.bf16.mxu0 0
      %994 = vmatpush2.bf16.msra.mxu0 0
      %995 = vmatprep.subr.bf16.mxu0 0
      %996 = vmatpush2.bf16.msra.mxu0 0
      %997 = vmatprep.subr.bf16.mxu0 0
      %998 = vmatpush2.bf16.msra.mxu0 0
      %999 = vmatprep.mubr.bf16.mxu0 0
      %1000 = vmatmul.mubr.bf16.gmra.mxu0 %v901
      %v1001 = vpop.f32.mrf.mxu0
      %v1002 = vadd.f32 %v953, %v1001
      %v1003 = vpop.f32.mrf.mxu0
      %v1004 = vpop.f32.mrf.mxu0
      %v1005 = vadd.f32 %v953, %v1004
      %v1006 = vpop.f32.mrf.mxu0
      %1007 = vdwg.mxu0
      %v1008 = vxor.u32 %v1002, 2147483648
      %v1009 = vxor.u32 %v1005, 2147483648
      %v1010 = vmul.f32 %v1008, 1.442695
      %v1011 = vpow.pop %v1010
      %v1012 = vmul.f32 %v1009, 1.442695
      %v1013 = vpow.pop %v1012
      %v1014 = vadd.f32 %v1011, 1.0
      %v1015 = vadd.f32 %v1013, 1.0
      %v1016 = vrcp.pop %v1014
      %v1017 = vmul.f32 1.0, %v1016
      %v1018 = vrcp.pop %v1015
      %v1019 = vmul.f32 1.0, %v1018
      %v1020 = vmul.f32 %v938, %v1017
      %v1021 = vmul.f32 %v941, %v1019
      %v1022 = vadd.f32 %v1020, %v854
      %v1023 = vadd.f32 %v1021, %v855
      %v1024 = vsel %vm494, %v1022, 0.0
      %1025 = vadd.xlane.f32.xlu0 %v1024
      %v1026 = vpop.xlane.xlu0 %1025
      %v1027 = vsel %vm494, %v1023, 0.0
      %1028 = vadd.xlane.f32.xlu0 %v1027
      %v1029 = vpop.xlane.xlu0 %1028
      %v1030 = vrcp.pop 32.0
      %v1031 = vmul.f32 %v1026, %v1030
      %v1032 = vmul.f32 %v1029, %v1030
      %v1033 = vmul.f32 %v1022, %v1022
      %v1034 = vmul.f32 %v1023, %v1023
      %v1035 = vsel %vm494, %v1033, 0.0
      %1036 = vadd.xlane.f32.xlu0 %v1035
      %v1037 = vpop.xlane.xlu0 %1036
      %v1038 = vsel %vm494, %v1034, 0.0
      %1039 = vadd.xlane.f32.xlu0 %v1038
      %v1040 = vpop.xlane.xlu0 %1039
      %v1041 = vmul.f32 %v1037, %v1030
      %v1042 = vmul.f32 %v1040, %v1030
      %v1043 = vsub.f32 %v1022, %v1031
      %v1044 = vsub.f32 %v1023, %v1032
      %v1045 = vmul.f32 %v1031, %v1031
      %v1046 = vmul.f32 %v1032, %v1032
      %v1047 = vsub.f32 %v1041, %v1045
      %v1048 = vsub.f32 %v1042, %v1046
      %v1049 = vadd.f32 %v1047, 1e-05
      %v1050 = vadd.f32 %v1048, 1e-05
      %v1051 = vrsqrt.pop %v1049
      %v1052 = vrsqrt.pop %v1050
      %v1053 = vmul.f32 %v1043, %v1051
      %v1054 = vmul.f32 %v1044, %v1052
      %v1055 = vld [vmem:[%s13] sm:$0x1]
      %v1057 = vlaneseq
      %v1058 = vshrl.u32 %v1057, 7
      %v1059 = vsub.s32 0, %v1058
      %v1060 = vrot.slane %v1055, %v1059
      %v1062 = vmul.f32 %v1053, %v1060
      %v1063 = vmul.f32 %v1054, %v1060
      %v1064 = vld [vmem:[%s14] sm:$0x1]
      %v1066 = vlaneseq
      %v1067 = vshrl.u32 %v1066, 7
      %v1068 = vsub.s32 0, %v1067
      %v1069 = vrot.slane %v1064, %v1068
      %v1071 = vadd.f32 %v1062, %v1069
      %v1072 = vadd.f32 %v1063, %v1069
      %1073 = vst.msk [vmem:[#allocation2] sm:$0xff] %vm494, %v1071
      %1074 = vst.msk [vmem:[#allocation2 + $0x8] sm:$0xff] %vm494, %v1072
      %s1075 = scalar_lea.vmem %s1, 8
      %v1076 = vld [vmem:[%s1075] sm:$0xff]
      %s1077 = scalar_lea.vmem %s8, 1
      %v1078 = vld [vmem:[%s1077] sm:$0x1]
      %s1079 = scalar_lea.vmem %s6, 8
      %v1080 = vld [vmem:[%s1079] sm:$0xff]
      %s1081 = scalar_lea.vmem %s7, 8
      %v1082 = vld [vmem:[%s1081] sm:$0xff]
      loop: start=0, step=1, limit=2
      $region88: #{_lambda_.1} parent=79 // loop_pre_header
        _
      $region89: #{_lambda_.1} parent=79 // loop_header
        %s1084 = sphi 0, %s1088
        %p1085 = scmp.ge.s32.totalorder %s1084, 2
        %v1089 = vphi 0.0, %v1435
        %v1090 = vphi 0.0, %v1439
      $region90: #{_lambda_.1} parent=79 // loop_header_branch
        %1087 = sbr.rel (%p1085) target = $region94
      $region91: #{_lambda_.1} parent=79 // loop_body
        %s1091 = smul.u32 %s1084, 8
        %s1092 = scalar_lea.vmem [#allocation2], %s1091
        %v1093 = vld [vmem:[%s1092] sm:$0xff]
        %s1094 = scalar_lea.vmem %s2, 64
        %v1095 = vld [vmem:[%s1094] sm:$0xff]
        %v1096 = vlaneseq
        %v1097 = vshrl.u32 %v1096, 7
        %v1098 = vsub.s32 0, %v1097
        %v1099 = vrot.slane %v1089, %v1098
        %v1100 = vmul.f32 %v1095, %v1099
        %v1101 = vadd.f32 %v1100, 0.0
        %s1102 = scalar_lea.vmem %s3, 64
        %v1103 = vld [vmem:[%s1102] sm:$0xff]
        %v1104 = vlaneseq
        %v1105 = vshrl.u32 %v1104, 7
        %v1106 = vsub.s32 0, %v1105
        %v1107 = vrot.slane %v1090, %v1106
        %v1108 = vmul.f32 %v1103, %v1107
        %v1109 = vsub.f32 %v1101, %v1108
        %s1110 = scalar_lea.vmem %s2, 72
        %v1111 = vld [vmem:[%s1110] sm:$0xff]
        %v1112 = vlaneseq
        %v1113 = vshrl.u32 %v1112, 7
        %v1114 = vsub.s32 1, %v1113
        %v1115 = vrot.slane %v1089, %v1114
        %v1116 = vmul.f32 %v1111, %v1115
        %v1117 = vadd.f32 %v1109, %v1116
        %s1118 = scalar_lea.vmem %s3, 72
        %v1119 = vld [vmem:[%s1118] sm:$0xff]
        %v1120 = vlaneseq
        %v1121 = vshrl.u32 %v1120, 7
        %v1122 = vsub.s32 1, %v1121
        %v1123 = vrot.slane %v1090, %v1122
        %v1124 = vmul.f32 %v1119, %v1123
        %v1125 = vsub.f32 %v1117, %v1124
        %s1126 = scalar_lea.vmem %s2, 80
        %v1127 = vld [vmem:[%s1126] sm:$0xff]
        %v1128 = vlaneseq
        %v1129 = vshrl.u32 %v1128, 7
        %v1130 = vsub.s32 2, %v1129
        %v1131 = vrot.slane %v1089, %v1130
        %v1132 = vmul.f32 %v1127, %v1131
        %v1133 = vadd.f32 %v1125, %v1132
        %s1134 = scalar_lea.vmem %s3, 80
        %v1135 = vld [vmem:[%s1134] sm:$0xff]
        %v1136 = vlaneseq
        %v1137 = vshrl.u32 %v1136, 7
        %v1138 = vsub.s32 2, %v1137
        %v1139 = vrot.slane %v1090, %v1138
        %v1140 = vmul.f32 %v1135, %v1139
        %v1141 = vsub.f32 %v1133, %v1140
        %s1142 = scalar_lea.vmem %s2, 88
        %v1143 = vld [vmem:[%s1142] sm:$0xff]
        %v1144 = vlaneseq
        %v1145 = vshrl.u32 %v1144, 7
        %v1146 = vsub.s32 3, %v1145
        %v1147 = vrot.slane %v1089, %v1146
        %v1148 = vmul.f32 %v1143, %v1147
        %v1149 = vadd.f32 %v1141, %v1148
        %s1150 = scalar_lea.vmem %s3, 88
        %v1151 = vld [vmem:[%s1150] sm:$0xff]
        %v1152 = vlaneseq
        %v1153 = vshrl.u32 %v1152, 7
        %v1154 = vsub.s32 3, %v1153
        %v1155 = vrot.slane %v1090, %v1154
        %v1156 = vmul.f32 %v1151, %v1155
        %v1157 = vsub.f32 %v1149, %v1156
        %s1158 = scalar_lea.vmem %s2, 96
        %v1159 = vld [vmem:[%s1158] sm:$0xff]
        %v1160 = vlaneseq
        %v1161 = vshrl.u32 %v1160, 7
        %v1162 = vsub.s32 4, %v1161
        %v1163 = vrot.slane %v1089, %v1162
        %v1164 = vmul.f32 %v1159, %v1163
        %v1165 = vadd.f32 %v1157, %v1164
        %s1166 = scalar_lea.vmem %s3, 96
        %v1167 = vld [vmem:[%s1166] sm:$0xff]
        %v1168 = vlaneseq
        %v1169 = vshrl.u32 %v1168, 7
        %v1170 = vsub.s32 4, %v1169
        %v1171 = vrot.slane %v1090, %v1170
        %v1172 = vmul.f32 %v1167, %v1171
        %v1173 = vsub.f32 %v1165, %v1172
        %s1174 = scalar_lea.vmem %s2, 104
        %v1175 = vld [vmem:[%s1174] sm:$0xff]
        %v1176 = vlaneseq
        %v1177 = vshrl.u32 %v1176, 7
        %v1178 = vsub.s32 5, %v1177
        %v1179 = vrot.slane %v1089, %v1178
        %v1180 = vmul.f32 %v1175, %v1179
        %v1181 = vadd.f32 %v1173, %v1180
        %s1182 = scalar_lea.vmem %s3, 104
        %v1183 = vld [vmem:[%s1182] sm:$0xff]
        %v1184 = vlaneseq
        %v1185 = vshrl.u32 %v1184, 7
        %v1186 = vsub.s32 5, %v1185
        %v1187 = vrot.slane %v1090, %v1186
        %v1188 = vmul.f32 %v1183, %v1187
        %v1189 = vsub.f32 %v1181, %v1188
        %s1190 = scalar_lea.vmem %s2, 112
        %v1191 = vld [vmem:[%s1190] sm:$0xff]
        %v1192 = vlaneseq
        %v1193 = vshrl.u32 %v1192, 7
        %v1194 = vsub.s32 6, %v1193
        %v1195 = vrot.slane %v1089, %v1194
        %v1196 = vmul.f32 %v1191, %v1195
        %v1197 = vadd.f32 %v1189, %v1196
        %s1198 = scalar_lea.vmem %s3, 112
        %v1199 = vld [vmem:[%s1198] sm:$0xff]
        %v1200 = vlaneseq
        %v1201 = vshrl.u32 %v1200, 7
        %v1202 = vsub.s32 6, %v1201
        %v1203 = vrot.slane %v1090, %v1202
        %v1204 = vmul.f32 %v1199, %v1203
        %v1205 = vsub.f32 %v1197, %v1204
        %s1206 = scalar_lea.vmem %s2, 120
        %v1207 = vld [vmem:[%s1206] sm:$0xff]
        %v1208 = vlaneseq
        %v1209 = vshrl.u32 %v1208, 7
        %v1210 = vsub.s32 7, %v1209
        %v1211 = vrot.slane %v1089, %v1210
        %v1212 = vmul.f32 %v1207, %v1211
        %v1213 = vadd.f32 %v1205, %v1212
        %s1214 = scalar_lea.vmem %s3, 120
        %v1215 = vld [vmem:[%s1214] sm:$0xff]
        %v1216 = vlaneseq
        %v1217 = vshrl.u32 %v1216, 7
        %v1218 = vsub.s32 7, %v1217
        %v1219 = vrot.slane %v1090, %v1218
        %v1220 = vmul.f32 %v1215, %v1219
        %v1221 = vsub.f32 %v1213, %v1220
        %v1223 = vlaneseq
        %v1224 = vshrl.u32 %v1223, 7
        %v1225 = vsub.s32 0, %v1224
        %v1226 = vrot.slane %v1078, %v1225
        %v1228 = vmul.f32 %v1093, %v1226
        %v1229 = vadd.f32 %v1221, %v1228
        %v1230 = vlaneseq
        %v1231 = vshrl.u32 %v1230, 7
        %v1232 = vsub.s32 0, %v1231
        %v1233 = vrot.slane %v1076, %v1232
        %v1234 = vmul.f32 %v1233, %v1093
        %v1235 = vadd.f32 %v1229, %v1234
        %v1236 = vlaneseq
        %v1237 = vshrl.u32 %v1236, 7
        %v1238 = vsub.s32 1, %v1237
        %v1239 = vrot.slane %v1076, %v1238
        %v1240 = vmul.f32 %v1239, 0.0
        %v1241 = vmul.f32 %v1239, %v1093
        %vm1244 = vcmask 1040384
        %v1245 = vrot.slane %v1240, 7
        %v1246 = vrot.slane %v1241, 7
        %v1247 = vsel %vm1244, %v1245, %v1246
        %v1249 = vadd.f32 %v1235, %v1247
        %v1250 = vlaneseq
        %v1251 = vshrl.u32 %v1250, 7
        %v1252 = vsub.s32 2, %v1251
        %v1253 = vrot.slane %v1076, %v1252
        %v1254 = vmul.f32 %v1253, 0.0
        %v1255 = vmul.f32 %v1253, %v1093
        %vm1258 = vcmask 1041408
        %v1259 = vrot.slane %v1254, 6
        %v1260 = vrot.slane %v1255, 6
        %v1261 = vsel %vm1258, %v1259, %v1260
        %v1263 = vadd.f32 %v1249, %v1261
        %v1264 = vlaneseq
        %v1265 = vshrl.u32 %v1264, 7
        %v1266 = vsub.s32 3, %v1265
        %v1267 = vrot.slane %v1076, %v1266
        %v1268 = vmul.f32 %v1267, 0.0
        %v1269 = vmul.f32 %v1267, %v1093
        %vm1272 = vcmask 1042432
        %v1273 = vrot.slane %v1268, 5
        %v1274 = vrot.slane %v1269, 5
        %v1275 = vsel %vm1272, %v1273, %v1274
        %v1277 = vadd.f32 %v1263, %v1275
        %v1278 = vlaneseq
        %v1279 = vshrl.u32 %v1278, 7
        %v1280 = vsub.s32 4, %v1279
        %v1281 = vrot.slane %v1076, %v1280
        %v1282 = vmul.f32 %v1281, 0.0
        %v1283 = vmul.f32 %v1281, %v1093
        %vm1286 = vcmask 1043456
        %v1287 = vrot.slane %v1282, 4
        %v1288 = vrot.slane %v1283, 4
        %v1289 = vsel %vm1286, %v1287, %v1288
        %v1291 = vadd.f32 %v1277, %v1289
        %v1292 = vlaneseq
        %v1293 = vshrl.u32 %v1292, 7
        %v1294 = vsub.s32 5, %v1293
        %v1295 = vrot.slane %v1076, %v1294
        %v1296 = vmul.f32 %v1295, 0.0
        %v1297 = vmul.f32 %v1295, %v1093
        %vm1300 = vcmask 1044480
        %v1301 = vrot.slane %v1296, 3
        %v1302 = vrot.slane %v1297, 3
        %v1303 = vsel %vm1300, %v1301, %v1302
        %v1305 = vadd.f32 %v1291, %v1303
        %v1306 = vlaneseq
        %v1307 = vshrl.u32 %v1306, 7
        %v1308 = vsub.s32 6, %v1307
        %v1309 = vrot.slane %v1076, %v1308
        %v1310 = vmul.f32 %v1309, 0.0
        %v1311 = vmul.f32 %v1309, %v1093
        %vm1314 = vcmask 1045504
        %v1315 = vrot.slane %v1310, 2
        %v1316 = vrot.slane %v1311, 2
        %v1317 = vsel %vm1314, %v1315, %v1316
        %v1319 = vadd.f32 %v1305, %v1317
        %v1320 = vlaneseq
        %v1321 = vshrl.u32 %v1320, 7
        %v1322 = vsub.s32 7, %v1321
        %v1323 = vrot.slane %v1076, %v1322
        %v1324 = vmul.f32 %v1323, 0.0
        %v1325 = vmul.f32 %v1323, %v1093
        %vm1328 = vcmask 1046528
        %v1329 = vrot.slane %v1324, 1
        %v1330 = vrot.slane %v1325, 1
        %v1331 = vsel %vm1328, %v1329, %v1330
        %v1333 = vadd.f32 %v1319, %v1331
        %s1334 = scalar_lea.vmem [#allocation3], %s1091
        %1335 = vst.msk [vmem:[%s1334] sm:$0xff] %vm494, %v1333
        %s1336 = scalar_lea.vmem %s4, 64
        %v1337 = vld [vmem:[%s1336] sm:$0xff]
        %v1338 = vlaneseq
        %v1339 = vshrl.u32 %v1338, 7
        %v1340 = vsub.s32 0, %v1339
        %v1341 = vrot.slane %v1093, %v1340
        %v1342 = vmul.f32 %v1337, %v1341
        %v1343 = vadd.f32 %v1342, 0.0
        %s1344 = scalar_lea.vmem %s5, 64
        %v1345 = vld [vmem:[%s1344] sm:$0xff]
        %v1346 = vmul.f32 %v1345, %v1341
        %v1347 = vadd.f32 %v1346, 0.0
        %s1348 = scalar_lea.vmem %s4, 72
        %v1349 = vld [vmem:[%s1348] sm:$0xff]
        %v1350 = vlaneseq
        %v1351 = vshrl.u32 %v1350, 7
        %v1352 = vsub.s32 1, %v1351
        %v1353 = vrot.slane %v1093, %v1352
        %v1354 = vmul.f32 %v1349, %v1353
        %v1355 = vadd.f32 %v1343, %v1354
        %s1356 = scalar_lea.vmem %s5, 72
        %v1357 = vld [vmem:[%s1356] sm:$0xff]
        %v1358 = vmul.f32 %v1357, %v1353
        %v1359 = vadd.f32 %v1347, %v1358
        %s1360 = scalar_lea.vmem %s4, 80
        %v1361 = vld [vmem:[%s1360] sm:$0xff]
        %v1362 = vlaneseq
        %v1363 = vshrl.u32 %v1362, 7
        %v1364 = vsub.s32 2, %v1363
        %v1365 = vrot.slane %v1093, %v1364
        %v1366 = vmul.f32 %v1361, %v1365
        %v1367 = vadd.f32 %v1355, %v1366
        %s1368 = scalar_lea.vmem %s5, 80
        %v1369 = vld [vmem:[%s1368] sm:$0xff]
        %v1370 = vmul.f32 %v1369, %v1365
        %v1371 = vadd.f32 %v1359, %v1370
        %s1372 = scalar_lea.vmem %s4, 88
        %v1373 = vld [vmem:[%s1372] sm:$0xff]
        %v1374 = vlaneseq
        %v1375 = vshrl.u32 %v1374, 7
        %v1376 = vsub.s32 3, %v1375
        %v1377 = vrot.slane %v1093, %v1376
        %v1378 = vmul.f32 %v1373, %v1377
        %v1379 = vadd.f32 %v1367, %v1378
        %s1380 = scalar_lea.vmem %s5, 88
        %v1381 = vld [vmem:[%s1380] sm:$0xff]
        %v1382 = vmul.f32 %v1381, %v1377
        %v1383 = vadd.f32 %v1371, %v1382
        %s1384 = scalar_lea.vmem %s4, 96
        %v1385 = vld [vmem:[%s1384] sm:$0xff]
        %v1386 = vlaneseq
        %v1387 = vshrl.u32 %v1386, 7
        %v1388 = vsub.s32 4, %v1387
        %v1389 = vrot.slane %v1093, %v1388
        %v1390 = vmul.f32 %v1385, %v1389
        %v1391 = vadd.f32 %v1379, %v1390
        %s1392 = scalar_lea.vmem %s5, 96
        %v1393 = vld [vmem:[%s1392] sm:$0xff]
        %v1394 = vmul.f32 %v1393, %v1389
        %v1395 = vadd.f32 %v1383, %v1394
        %s1396 = scalar_lea.vmem %s4, 104
        %v1397 = vld [vmem:[%s1396] sm:$0xff]
        %v1398 = vlaneseq
        %v1399 = vshrl.u32 %v1398, 7
        %v1400 = vsub.s32 5, %v1399
        %v1401 = vrot.slane %v1093, %v1400
        %v1402 = vmul.f32 %v1397, %v1401
        %v1403 = vadd.f32 %v1391, %v1402
        %s1404 = scalar_lea.vmem %s5, 104
        %v1405 = vld [vmem:[%s1404] sm:$0xff]
        %v1406 = vmul.f32 %v1405, %v1401
        %v1407 = vadd.f32 %v1395, %v1406
        %s1408 = scalar_lea.vmem %s4, 112
        %v1409 = vld [vmem:[%s1408] sm:$0xff]
        %v1410 = vlaneseq
        %v1411 = vshrl.u32 %v1410, 7
        %v1412 = vsub.s32 6, %v1411
        %v1413 = vrot.slane %v1093, %v1412
        %v1414 = vmul.f32 %v1409, %v1413
        %v1415 = vadd.f32 %v1403, %v1414
        %s1416 = scalar_lea.vmem %s5, 112
        %v1417 = vld [vmem:[%s1416] sm:$0xff]
        %v1418 = vmul.f32 %v1417, %v1413
        %v1419 = vadd.f32 %v1407, %v1418
        %s1420 = scalar_lea.vmem %s4, 120
        %v1421 = vld [vmem:[%s1420] sm:$0xff]
        %v1422 = vlaneseq
        %v1423 = vshrl.u32 %v1422, 7
        %v1424 = vsub.s32 7, %v1423
        %v1425 = vrot.slane %v1093, %v1424
        %v1426 = vmul.f32 %v1421, %v1425
        %v1427 = vadd.f32 %v1415, %v1426
        %s1428 = scalar_lea.vmem %s5, 120
        %v1429 = vld [vmem:[%s1428] sm:$0xff]
        %v1430 = vmul.f32 %v1429, %v1425
        %v1431 = vadd.f32 %v1419, %v1430
        %v1432 = vmul.f32 %v1080, %v1089
        %v1433 = vmul.f32 %v1082, %v1090
        %v1434 = vsub.f32 %v1432, %v1433
        %v1435 = vadd.f32 %v1434, %v1427
        %v1436 = vmul.f32 %v1082, %v1089
        %v1437 = vmul.f32 %v1080, %v1090
        %v1438 = vadd.f32 %v1436, %v1437
        %v1439 = vadd.f32 %v1438, %v1431
      $region92: #{_lambda_.1} parent=79 // loop_footer
        %s1088 = sadd.s32 1, %s1084
      $region93: #{_lambda_.1} parent=79 // loop_footer_branch
        %1083 = sbr.rel target = $region89
      $region94: #{_lambda_.1} parent=79 // loop_exit
        _
      %v1440 = vld [vmem:[#allocation2] sm:$0xff]
      %v1441 = vld [vmem:[#allocation2 + $0x8] sm:$0xff]
      %v1442 = vld [vmem:[#allocation3] sm:$0xff]
      %v1443 = vld [vmem:[#allocation3 + $0x8] sm:$0xff]
      %v1444 = vmul.f32 %v1442, %v1442
      %v1445 = vmul.f32 %v1443, %v1443
      %v1446 = vmul.f32 %v1442, %v1444
      %v1447 = vmul.f32 %v1443, %v1445
      %v1448 = vmul.f32 %v1446, 0.044715
      %v1449 = vmul.f32 %v1447, 0.044715
      %v1450 = vadd.f32 %v1442, %v1448
      %v1451 = vadd.f32 %v1443, %v1449
      %v1452 = vmul.f32 %v1450, 0.7978846
      %v1453 = vmul.f32 %v1451, 0.7978846
      %v1454 = vtanh.pop %v1452
      %v1455 = vtanh.pop %v1453
      %v1456 = vadd.f32 %v1454, 1.0
      %v1457 = vadd.f32 %v1455, 1.0
      %v1458 = vmul.f32 %v1456, 0.5
      %v1459 = vmul.f32 %v1457, 0.5
      %v1460 = vmul.f32 %v1442, %v1458
      %v1461 = vmul.f32 %v1443, %v1459
      %v1462 = vpack.c.bf16 %v1461, %v1460
      %s1463 = scalar_lea.vmem %s9, 16
      %v1464 = vld [vmem:[%s1463] sm:$0xf]
      %v1465 = vld [vmem:[%s1463 + $0x4] sm:$0xf]
      %v1466 = vld [vmem:[%s1463 + $0x8] sm:$0xf]
      %v1467 = vld [vmem:[%s1463 + $0xc] sm:$0xf]
      %s1468 = scalar_lea.vmem %s11, 1
      %v1469 = vld [vmem:[%s1468] sm:$0x1]
      %v1471 = vlaneseq
      %v1472 = vshrl.u32 %v1471, 7
      %v1473 = vsub.s32 0, %v1472
      %v1474 = vrot.slane %v1469, %v1473
      %v1480 = vunpack.c.l.b16 %v1464
      %v1481 = vunpack.c.l.b16 %v1465
      %v1482 = vunpack.c.l.b16 %v1466
      %v1483 = vunpack.c.l.b16 %v1467
      %v1484 = vpack.c.b16 %v1481, %v1480
      %v1485 = vpack.c.b16 %v1483, %v1482
      %v1489 = vsel %vm494, %v1462, 0
      %1491 = vmatprep.subr.bf16.mxu0 0
      %1492 = vmatpush1.bf16.msra.mxu0 0
      %1493 = vmatprep.subr.bf16.mxu0 0
      %1494 = vmatpush1.bf16.msra.mxu0 0
      %1495 = vmatprep.subr.bf16.mxu0 0
      %1496 = vmatpush1.bf16.msra.mxu0 0
      %1497 = vmatprep.subr.bf16.mxu0 0
      %1498 = vmatpush1.bf16.msra.mxu0 0
      %1499 = vmatprep.subr.bf16.mxu0 0
      %1500 = vmatpush1.bf16.msra.mxu0 0
      %1501 = vmatprep.subr.bf16.mxu0 0
      %1502 = vmatpush1.bf16.msra.mxu0 0
      %1503 = vmatprep.subr.bf16.mxu0 0
      %1504 = vmatpush1.bf16.msra.mxu0 %v1485
      %1505 = vmatprep.subr.bf16.mxu0 0
      %1506 = vmatpush1.bf16.msra.mxu0 %v1484
      %1507 = vmatprep.subr.bf16.mxu0 0
      %1508 = vmatpush2.bf16.msra.mxu0 0
      %1509 = vmatprep.subr.bf16.mxu0 0
      %1510 = vmatpush2.bf16.msra.mxu0 0
      %1511 = vmatprep.subr.bf16.mxu0 0
      %1512 = vmatpush2.bf16.msra.mxu0 0
      %1513 = vmatprep.subr.bf16.mxu0 0
      %1514 = vmatpush2.bf16.msra.mxu0 0
      %1515 = vmatprep.subr.bf16.mxu0 0
      %1516 = vmatpush2.bf16.msra.mxu0 0
      %1517 = vmatprep.subr.bf16.mxu0 0
      %1518 = vmatpush2.bf16.msra.mxu0 0
      %1519 = vmatprep.subr.bf16.mxu0 0
      %1520 = vmatpush2.bf16.msra.mxu0 0
      %1521 = vmatprep.subr.bf16.mxu0 0
      %1522 = vmatpush2.bf16.msra.mxu0 0
      %1523 = vmatprep.mubr.bf16.mxu0 0
      %1524 = vmatmul.mubr.bf16.gmra.mxu0 %v1489
      %v1525 = vpop.f32.mrf.mxu0
      %v1526 = vadd.f32 %v1474, %v1525
      %v1527 = vpop.f32.mrf.mxu0
      %v1528 = vpop.f32.mrf.mxu0
      %v1529 = vadd.f32 %v1474, %v1528
      %v1530 = vpop.f32.mrf.mxu0
      %1531 = vdwg.mxu0
      %s1532 = scalar_lea.vmem %s10, 16
      %v1533 = vld [vmem:[%s1532] sm:$0xf]
      %v1534 = vld [vmem:[%s1532 + $0x4] sm:$0xf]
      %v1535 = vld [vmem:[%s1532 + $0x8] sm:$0xf]
      %v1536 = vld [vmem:[%s1532 + $0xc] sm:$0xf]
      %s1537 = scalar_lea.vmem %s12, 1
      %v1538 = vld [vmem:[%s1537] sm:$0x1]
      %v1540 = vlaneseq
      %v1541 = vshrl.u32 %v1540, 7
      %v1542 = vsub.s32 0, %v1541
      %v1543 = vrot.slane %v1538, %v1542
      %v1549 = vunpack.c.l.b16 %v1533
      %v1550 = vunpack.c.l.b16 %v1534
      %v1551 = vunpack.c.l.b16 %v1535
      %v1552 = vunpack.c.l.b16 %v1536
      %v1553 = vpack.c.b16 %v1550, %v1549
      %v1554 = vpack.c.b16 %v1552, %v1551
      %1557 = vmatprep.subr.bf16.mxu0 0
      %1558 = vmatpush1.bf16.msra.mxu0 0
      %1559 = vmatprep.subr.bf16.mxu0 0
      %1560 = vmatpush1.bf16.msra.mxu0 0
      %1561 = vmatprep.subr.bf16.mxu0 0
      %1562 = vmatpush1.bf16.msra.mxu0 0
      %1563 = vmatprep.subr.bf16.mxu0 0
      %1564 = vmatpush1.bf16.msra.mxu0 0
      %1565 = vmatprep.subr.bf16.mxu0 0
      %1566 = vmatpush1.bf16.msra.mxu0 0
      %1567 = vmatprep.subr.bf16.mxu0 0
      %1568 = vmatpush1.bf16.msra.mxu0 0
      %1569 = vmatprep.subr.bf16.mxu0 0
      %1570 = vmatpush1.bf16.msra.mxu0 %v1554
      %1571 = vmatprep.subr.bf16.mxu0 0
      %1572 = vmatpush1.bf16.msra.mxu0 %v1553
      %1573 = vmatprep.subr.bf16.mxu0 0
      %1574 = vmatpush2.bf16.msra.mxu0 0
      %1575 = vmatprep.subr.bf16.mxu0 0
      %1576 = vmatpush2.bf16.msra.mxu0 0
      %1577 = vmatprep.subr.bf16.mxu0 0
      %1578 = vmatpush2.bf16.msra.mxu0 0
      %1579 = vmatprep.subr.bf16.mxu0 0
      %1580 = vmatpush2.bf16.msra.mxu0 0
      %1581 = vmatprep.subr.bf16.mxu0 0
      %1582 = vmatpush2.bf16.msra.mxu0 0
      %1583 = vmatprep.subr.bf16.mxu0 0
      %1584 = vmatpush2.bf16.msra.mxu0 0
      %1585 = vmatprep.subr.bf16.mxu0 0
      %1586 = vmatpush2.bf16.msra.mxu0 0
      %1587 = vmatprep.subr.bf16.mxu0 0
      %1588 = vmatpush2.bf16.msra.mxu0 0
      %1589 = vmatprep.mubr.bf16.mxu0 0
      %1590 = vmatmul.mubr.bf16.gmra.mxu0 %v1489
      %v1591 = vpop.f32.mrf.mxu0
      %v1592 = vadd.f32 %v1543, %v1591
      %v1593 = vpop.f32.mrf.mxu0
      %v1594 = vpop.f32.mrf.mxu0
      %v1595 = vadd.f32 %v1543, %v1594
      %v1596 = vpop.f32.mrf.mxu0
      %1597 = vdwg.mxu0
      %v1598 = vxor.u32 %v1592, 2147483648
      %v1599 = vxor.u32 %v1595, 2147483648
      %v1600 = vmul.f32 %v1598, 1.442695
      %v1601 = vpow.pop %v1600
      %v1602 = vmul.f32 %v1599, 1.442695
      %v1603 = vpow.pop %v1602
      %v1604 = vadd.f32 %v1601, 1.0
      %v1605 = vadd.f32 %v1603, 1.0
      %v1606 = vrcp.pop %v1604
      %v1607 = vmul.f32 1.0, %v1606
      %v1608 = vrcp.pop %v1605
      %v1609 = vmul.f32 1.0, %v1608
      %v1610 = vmul.f32 %v1526, %v1607
      %v1611 = vmul.f32 %v1529, %v1609
      %v1612 = vadd.f32 %v1610, %v1440
      %v1613 = vadd.f32 %v1611, %v1441
      %v1614 = vsel %vm494, %v1612, 0.0
      %1615 = vadd.xlane.f32.xlu0 %v1614
      %v1616 = vpop.xlane.xlu0 %1615
      %v1617 = vsel %vm494, %v1613, 0.0
      %1618 = vadd.xlane.f32.xlu0 %v1617
      %v1619 = vpop.xlane.xlu0 %1618
      %v1620 = vmul.f32 %v1616, %v1030
      %v1621 = vmul.f32 %v1619, %v1030
      %v1622 = vmul.f32 %v1612, %v1612
      %v1623 = vmul.f32 %v1613, %v1613
      %v1624 = vsel %vm494, %v1622, 0.0
      %1625 = vadd.xlane.f32.xlu0 %v1624
      %v1626 = vpop.xlane.xlu0 %1625
      %v1627 = vsel %vm494, %v1623, 0.0
      %1628 = vadd.xlane.f32.xlu0 %v1627
      %v1629 = vpop.xlane.xlu0 %1628
      %v1630 = vmul.f32 %v1626, %v1030
      %v1631 = vmul.f32 %v1629, %v1030
      %v1632 = vsub.f32 %v1612, %v1620
      %v1633 = vsub.f32 %v1613, %v1621
      %v1634 = vmul.f32 %v1620, %v1620
      %v1635 = vmul.f32 %v1621, %v1621
      %v1636 = vsub.f32 %v1630, %v1634
      %v1637 = vsub.f32 %v1631, %v1635
      %v1638 = vadd.f32 %v1636, 1e-05
      %v1639 = vadd.f32 %v1637, 1e-05
      %v1640 = vrsqrt.pop %v1638
      %v1641 = vrsqrt.pop %v1639
      %v1642 = vmul.f32 %v1632, %v1640
      %v1643 = vmul.f32 %v1633, %v1641
      %s1644 = scalar_lea.vmem %s13, 1
      %v1645 = vld [vmem:[%s1644] sm:$0x1]
      %v1647 = vlaneseq
      %v1648 = vshrl.u32 %v1647, 7
      %v1649 = vsub.s32 0, %v1648
      %v1650 = vrot.slane %v1645, %v1649
      %v1652 = vmul.f32 %v1642, %v1650
      %v1653 = vmul.f32 %v1643, %v1650
      %s1654 = scalar_lea.vmem %s14, 1
      %v1655 = vld [vmem:[%s1654] sm:$0x1]
      %v1657 = vlaneseq
      %v1658 = vshrl.u32 %v1657, 7
      %v1659 = vsub.s32 0, %v1658
      %v1660 = vrot.slane %v1655, %v1659
      %v1662 = vadd.f32 %v1652, %v1660
      %v1663 = vadd.f32 %v1653, %v1660
      %1664 = vst.msk [vmem:[#allocation2] sm:$0xff] %vm494, %v1662
      %1665 = vst.msk [vmem:[#allocation2 + $0x8] sm:$0xff] %vm494, %v1663
      %v1666 = vld [vmem:[#allocation2] sm:$0xff]
      %v1667 = vld [vmem:[#allocation2 + $0x8] sm:$0xff]
      %v1668 = vsel %vm494, %v1666, 0.0
      %v1669 = vsel %vm494, %v1667, 0.0
      %v1670 = vadd.f32 %v1668, %v1669
      %v1671 = vrot.slane %v1670, 4
      %v1672 = vadd.f32 %v1670, %v1671
      %v1673 = vrot.slane %v1672, 2
      %v1674 = vadd.f32 %v1672, %v1673
      %v1675 = vrot.slane %v1674, 1
      %v1676 = vadd.f32 %v1674, %v1675
      %v1677 = vrcp.pop 16.0
      %v1678 = vmul.f32 %v1676, %v1677
      %vm1679 = vcmask 253952
      %1680 = vst.msk [vmem:[%s490] sm:$0x1] %vm1679, %v1678
      %p1681 = scmp.lt.s32.totalorder %s26, 1
      %s1682 = scalar_select %p1681, %s26, 1
      %s1683 = scalar_lea.vmem %s15, %s1682
      // Predicated region
      $region95: #{_lambda_.1} parent=79 // pred_check
        %p1684 = pneg %p364
      $region96: #{_lambda_.1} parent=79 // pred_check_branch
        %1686 = sbr.rel (%p1684) target = $region98
      $region97: #{_lambda_.1} parent=79 // pred_region
        _
      $region98: #{_lambda_.1} parent=79 // pred_fallthru
        _
    $region80: #{_lambda_.1} parent=5 // pred_fallthru
      _
    %p1687 = scmp.le.s32.totalorder 2, %s21
    // Predicated region
    $region99: #{_lambda_.1} parent=5 // pred_check
      %p1688 = pneg %p1687
    $region100: #{_lambda_.1} parent=5 // pred_check_branch
      %1690 = sbr.rel (%p1688) target = $region102
    $region101: #{_lambda_.1} parent=5 // pred_region
      %s1691 = ssub.s32 %s21, 2
      // Predicated region
      $region103: #{_lambda_.1} parent=101 // pred_check
        %p1692 = pneg %p370
      $region104: #{_lambda_.1} parent=101 // pred_check_branch
        %1694 = sbr.rel (%p1692) target = $region106
      $region105: #{_lambda_.1} parent=101 // pred_region
        %p1695 = scmp.lt.s32.totalorder %s27, 1
        %s1696 = scalar_select %p1695, %s27, 1
        %s1697 = scalar_lea.vmem %s15, %s1696
      $region106: #{_lambda_.1} parent=101 // pred_fallthru
        _
    $region102: #{_lambda_.1} parent=5 // pred_fallthru
      _
  $region6: #{_lambda_.1} parent=0 // loop_footer
    %s25 = sadd.s32 1, %s21
  $region7: #{_lambda_.1} parent=0 // loop_footer_branch
    %20 = sbr.rel target = $region3
  $region8: #{_lambda_.1} parent=0 // loop_exit
    _

</llo_original>
